<compile_context>
chip_gen: v6e
topology: v6e:2x2x1
jax: 0.10.0
libtpu: 0.0.40
codegen_flags: <defaults>
</compile_context>

<pallas_src>
import jax
import jax.numpy as jnp
from jax.experimental import pallas as pl
from jax.experimental.pallas import tpu as pltpu


# ---------------------------------------------------------------------------
# In-kernel helpers
# ---------------------------------------------------------------------------
def _layernorm(z, g, b, eps=1e-5):
    mu = jnp.mean(z, axis=-1, keepdims=True)
    var = jnp.mean((z - mu) ** 2, axis=-1, keepdims=True)
    return (z - mu) * jax.lax.rsqrt(var + eps) * g + b


def _head_softmax(logits, ones_bd):
    """Per-head softmax over lane blocks of width G (heads packed along lanes).

    Lane-layout preserving: a single global row max is a valid stabilizer for every head
    (softmax is shift-invariant), and the per-head denominators are broadcast back to all
    lanes with one MXU matmul against a block-diagonal ones matrix -- no sub-128-lane
    slices / concatenates (which caused masked VALU + XLU relayout work per tile).
    """
    m = jnp.max(logits, axis=-1, keepdims=True)                    # XLU lane reduce
    e = jnp.exp(logits - m)                                        # EUP
    s = jnp.dot(e, ones_bd, preferred_element_type=jnp.float32)    # per-head sums (MXU)
    s = jnp.maximum(s, 1e-30)                                      # guard degenerate underflow
    return e * pl.reciprocal(s, approx=True)                       # EUP recip, frees VALU


def _gelu_tanh(x):
    # tanh-approximate GELU (single EUP tanh); max deviation vs exact ~1e-3.
    c = 0.7978845608028654  # sqrt(2/pi)
    return 0.5 * x * (1.0 + jnp.tanh(c * (x + 0.044715 * x * x * x)))


# ---------------------------------------------------------------------------
# Wrapper: weight folding + two pallas_calls (N-tiled) + hoisted token attention
# ---------------------------------------------------------------------------
def transolver_block(fx, params, *, tn=512, n_split=2):
    """fx: (B, N, C) channels-last.  params: unfolded module parameters (see init_params)."""
    B, N, C = fx.shape
    (ln1g, ln1b, wfx, bfx, wx, bx, wsl, bsl, temp, wq, wk, wv, wo, bo,
     ln2g, ln2b, wpre, bpre, wpost, bpost) = params
    H = temp.shape[0]
    Dh = wq.shape[0]
    G = wsl.shape[1]
    HG, HDh = H * G, H * Dh
    assert N % tn == 0, "N must be a multiple of the N-tile size (pad wrapper-side)"
    nN = N // tn
    if nN % n_split != 0:
        n_split = 1
    n_inner = nN // n_split
    scale = Dh ** -0.5
    bf16 = jnp.bfloat16
    f32 = jnp.float32

    # ---- wrapper-side weight folding (valid for inference / frozen parameters) ----
    # logits = x1 @ Wl + bl   replaces   ((x1 @ Wx_h + bx_h) @ Wsl + bsl) / temp_h
    wl = (jnp.einsum('chd,dg->chg', wx.reshape(C, H, Dh), wsl)
          / temp.reshape(1, H, 1)).reshape(C, HG)
    bl = ((bx.reshape(H, Dh) @ wsl + bsl) / temp).reshape(1, HG)
    # fx projection and slice-logit projection share the same LHS -> one fused weight
    wfl_b = jnp.concatenate([wfx, wl], axis=1).astype(bf16)            # (C, HDh+HG)
    wl_b = wl.astype(bf16)                                             # phase-2 only needs logits
    wpre_b, wpost_b = wpre.astype(bf16), wpost.astype(bf16)
    # block-diagonal ones matrix: broadcasts per-head softmax denominators via the MXU
    head_id = jnp.arange(HG) // G
    ones_bd = (head_id[:, None] == head_id[None, :]).astype(f32)       # (HG, HG)

    # TODO(synk): per-generation tuning -- on v5e/v6e (128 MiB VMEM) raise vmem_limit and tn
    #             (e.g. 1024); on v7x (64 MiB physical per TC) keep <=48 MiB and tn<=512.
    vmem_limit = 48 * 1024 * 1024
    cp1 = pltpu.CompilerParams(
        dimension_semantics=("parallel", "parallel", "arbitrary"),
        vmem_limit_bytes=vmem_limit)
    cp2 = pltpu.CompilerParams(
        dimension_semantics=("parallel", "parallel"),   # N axis shards across v7x's 2 TCs
        vmem_limit_bytes=vmem_limit)

    # TODO(synk): replicated-weight specs could be single-buffered (pipeline_mode) to reclaim
    #             VMEM headroom at larger C; not needed at these sizes.
    def rep3(a):
        nd = a.ndim
        return pl.BlockSpec(a.shape, lambda b, s, n, nd=nd: (0,) * nd)

    def rep2(a):
        nd = a.ndim
        return pl.BlockSpec(a.shape, lambda b, n, nd=nd: (0,) * nd)

    # ------------------ phase 1: accumulate slice tokens over N tiles ------------------
    def phase1(x_ref, ln1g_ref, ln1b_ref, wfl_ref, bl_ref, ones_ref,
               stnum_ref, snorm_ref):
        @pl.when(pl.program_id(2) == 0)
        def _():
            stnum_ref[0] = jnp.zeros((HG, HDh), jnp.float32)
            snorm_ref[0] = jnp.zeros((1, HG), jnp.float32)

        x = x_ref[0].astype(jnp.float32)                               # (tn, C)
        x1 = _layernorm(x, ln1g_ref[...], ln1b_ref[...]).astype(bf16)
        # single fused projection: [fx_mid | slice-logits]
        y = jnp.dot(x1, wfl_ref[...], preferred_element_type=jnp.float32)   # (tn, HDh+HG)
        fxm = y[:, :HDh]                       # bfx bias deferred to the hoisted token step
        logits = y[:, HDh:] + bl_ref[...]
        sw = _head_softmax(logits, ones_ref[...])                      # (tn, HG)
        # one head-batched contraction over the N tile (cross-head blocks discarded later)
        stnum_ref[0] += jax.lax.dot_general(
            sw.astype(bf16), fxm.astype(bf16),
            (((0,), (0,)), ((), ())), preferred_element_type=jnp.float32)   # (HG, HDh)
        # slice_norm via XLU sublane reduce (overlaps with MXU), not an MXU pass
        snorm_ref[0] += jnp.sum(sw, axis=0, keepdims=True)

    st_num_p, snorm_p = pl.pallas_call(
        phase1,
        out_shape=(jax.ShapeDtypeStruct((B * n_split, HG, HDh), jnp.float32),
                   jax.ShapeDtypeStruct((B * n_split, 1, HG), jnp.float32)),
        grid_spec=pltpu.PrefetchScalarGridSpec(
            num_scalar_prefetch=0,
            grid=(B, n_split, n_inner),
            in_specs=[pl.BlockSpec((1, tn, C), lambda b, s, n: (b, s * n_inner + n, 0)),
                      rep3(ln1g), rep3(ln1b), rep3(wfl_b), rep3(bl), rep3(ones_bd)],
            out_specs=(pl.BlockSpec((1, HG, HDh), lambda b, s, n: (b * n_split + s, 0, 0)),
                       pl.BlockSpec((1, 1, HG), lambda b, s, n: (b * n_split + s, 0, 0))),
        ),
        compiler_params=cp1,
    )(fx, ln1g, ln1b, wfl_b, bl, ones_bd)

    # ---- hoisted once-per-batch G-space token attention (tiny; plain XLA) ----
    st_num = st_num_p.reshape(B, n_split, HG, HDh).sum(axis=1)         # (B, HG, HDh)
    snorm = snorm_p.reshape(B, n_split, HG).sum(axis=1)                # (B, HG)
    eye_h = jnp.eye(H, dtype=st_num.dtype)
    st = jnp.einsum('bigjd,ij->bigd', st_num.reshape(B, H, G, H, Dh), eye_h)   # diag blocks
    snorm_h = snorm.reshape(B, H, G)
    st = st + snorm_h[..., None] * bfx.reshape(H, Dh)[None, :, None, :]   # deferred bfx
    st = st / (snorm_h[..., None] + 1e-5)                              # (B, H, G, Dh)
    q = jnp.einsum('bhgd,de->bhge', st, wq)
    k = jnp.einsum('bhgd,de->bhge', st, wk)
    v = jnp.einsum('bhgd,de->bhge', st, wv)
    dots = jnp.einsum('bhge,bhke->bhgk', q, k) * scale
    attn = jax.nn.softmax(dots, axis=-1)
    out_tok = jnp.einsum('bhgk,bhkd->bhgd', attn, v)
    # fold the deslice with to_out: tok_c[b, h*G+g, :] = out_tok[b,h,g,:] @ Wo[h]
    tok_c = jnp.einsum('bhgd,hdc->bhgc', out_tok,
                       wo.reshape(H, Dh, C)).reshape(B, HG, C).astype(bf16)

    # ----- phase 2: per-tile deslice + to_out + residual + MLP (fully parallel) -----
    def phase2(x_ref, tokc_ref, ln1g_ref, ln1b_ref, wl_ref, bl_ref, ones_ref, bo_ref,
               ln2g_ref, ln2b_ref, wpre_ref, bpre_ref, wpost_ref, bpost_ref, o_ref):
        x = x_ref[0].astype(jnp.float32)                               # (tn, C)
        x1 = _layernorm(x, ln1g_ref[...], ln1b_ref[...])
        # recompute slice weights per tile (cheaper than an HBM round-trip of sw)
        logits = jnp.dot(x1.astype(bf16), wl_ref[...],
                         preferred_element_type=jnp.float32) + bl_ref[...]
        sw = _head_softmax(logits, ones_ref[...])
        # fused deslice + to_out: single lane-dense (tn, HG) @ (HG, C) matmul
        attn_out = jnp.dot(sw.astype(bf16), tokc_ref[0],
                           preferred_element_type=jnp.float32) + bo_ref[...]
        fx1 = attn_out + x                                             # residual 1
        x2 = _layernorm(fx1, ln2g_ref[...], ln2b_ref[...])
        hmid = _gelu_tanh(jnp.dot(x2.astype(bf16), wpre_ref[...],
                                  preferred_element_type=jnp.float32) + bpre_ref[...])
        mlp = jnp.dot(hmid.astype(bf16), wpost_ref[...],
                      preferred_element_type=jnp.float32) + bpost_ref[...]
        o_ref[0] = (mlp + fx1).astype(o_ref.dtype)                     # residual 2

    out = pl.pallas_call(
        phase2,
        out_shape=jax.ShapeDtypeStruct((B, N, C), fx.dtype),
        grid_spec=pltpu.PrefetchScalarGridSpec(
            num_scalar_prefetch=0,
            grid=(B, nN),
            in_specs=[pl.BlockSpec((1, tn, C), lambda b, n: (b, n, 0)),
                      pl.BlockSpec((1, HG, C), lambda b, n: (b, 0, 0)),
                      rep2(ln1g), rep2(ln1b), rep2(wl_b), rep2(bl), rep2(ones_bd),
                      rep2(bo), rep2(ln2g), rep2(ln2b),
                      rep2(wpre_b), rep2(bpre), rep2(wpost_b), rep2(bpost)],
            out_specs=pl.BlockSpec((1, tn, C), lambda b, n: (b, n, 0)),
        ),
        compiler_params=cp2,
    )(fx, tok_c, ln1g, ln1b, wl_b, bl, ones_bd, bo,
      ln2g, ln2b, wpre_b, bpre, wpost_b, bpost)
    # TODO(synk): if bundle analysis shows phase2 is compute-slot-bound, spill sw as bf16
    #             from phase1 and load it here instead of recomputing (roofline tradeoff).
    return out


# ---------------------------------------------------------------------------
# Deterministic parameter init (synthetic; shapes match the PyTorch module)
# ---------------------------------------------------------------------------
def init_params(key, C, H, Dh, G, Cm):
    inner = H * Dh
    keys = jax.random.split(key, 15)

    def w(k, shape, s=0.03):
        return jax.random.normal(k, shape, jnp.float32) * s

    ln1g = jnp.ones((1, C), jnp.float32)
    ln1b = jnp.zeros((1, C), jnp.float32)
    wfx = w(keys[0], (C, inner));   bfx = w(keys[1], (1, inner))
    wx = w(keys[2], (C, inner));    bx = w(keys[3], (1, inner))
    wsl = w(keys[4], (Dh, G));      bsl = w(keys[5], (1, G))
    temp = jnp.full((H, 1), 0.5, jnp.float32)          # nn.Parameter ones*0.5
    wq = w(keys[6], (Dh, Dh))
    wk = w(keys[7], (Dh, Dh))
    wv = w(keys[8], (Dh, Dh))
    wo = w(keys[9], (inner, C));    bo = w(keys[10], (1, C))
    ln2g = jnp.ones((1, C), jnp.float32)
    ln2b = jnp.zeros((1, C), jnp.float32)
    wpre = w(keys[11], (C, Cm));    bpre = w(keys[12], (1, Cm))
    wpost = w(keys[13], (Cm, C));   bpost = w(keys[14], (1, C))
    return [ln1g, ln1b, wfx, bfx, wx, bx, wsl, bsl, temp, wq, wk, wv, wo, bo,
            ln2g, ln2b, wpre, bpre, wpost, bpost]


# ---------------------------------------------------------------------------
# Pure-JAX reference (mirrors the PyTorch forward exactly, f32 / exact GELU)
# ---------------------------------------------------------------------------
def reference(fx, params):
    (ln1g, ln1b, wfx, bfx, wx, bx, wsl, bsl, temp, wq, wk, wv, wo, bo,
     ln2g, ln2b, wpre, bpre, wpost, bpost) = params
    B, N, C = fx.shape
    H = temp.shape[0]
    Dh = wq.shape[0]

    def ln(z, g, b, eps=1e-5):
        mu = z.mean(-1, keepdims=True)
        var = ((z - mu) ** 2).mean(-1, keepdims=True)
        return (z - mu) / jnp.sqrt(var + eps) * g + b

    x1 = ln(fx, ln1g[0], ln1b[0])
    fx_mid = (x1 @ wfx + bfx).reshape(B, N, H, Dh).transpose(0, 2, 1, 3)
    x_mid = (x1 @ wx + bx).reshape(B, N, H, Dh).transpose(0, 2, 1, 3)
    sw = jax.nn.softmax((x_mid @ wsl + bsl) / temp.reshape(1, H, 1, 1), axis=-1)
    snorm = sw.sum(2)
    st = jnp.einsum('bhnc,bhng->bhgc', fx_mid, sw)
    st = st / (snorm + 1e-5)[..., None]
    q, k, v = st @ wq, st @ wk, st @ wv
    dots = jnp.einsum('bhgc,bhkc->bhgk', q, k) * (Dh ** -0.5)
    attn = jax.nn.softmax(dots, axis=-1)
    out_token = attn @ v
    out_x = jnp.einsum('bhgc,bhng->bhnc', out_token, sw)
    out_x = out_x.transpose(0, 2, 1, 3).reshape(B, N, H * Dh)
    fx1 = (out_x @ wo + bo) + fx
    x2 = ln(fx1, ln2g[0], ln2b[0])
    hmid = jax.nn.gelu(x2 @ wpre + bpre, approximate=False)
    return (hmid @ wpost + bpost) + fx1


if __name__ == "__main__":
    # Small but lane-aligned config (C multiple of 128 keeps all stores unmasked).
    B, N, C = 2, 1024, 128         # batch, mesh points, hidden_dim
    H, G, mlp_ratio = 8, 32, 4     # num_heads, slice_num, mlp_ratio
    Dh = C // H                    # 16
    Cm = C * mlp_ratio             # 512

    key = jax.random.PRNGKey(0)
    kx, kp = jax.random.split(key)
    fx = jax.random.normal(kx, (B, N, C), jnp.float32)
    params = init_params(kp, C, H, Dh, G, Cm)

    out = jax.block_until_ready(transolver_block(fx, params, tn=256, n_split=2))
    ref = reference(fx, params)

    err = float(jnp.max(jnp.abs(out - ref)))
    # bf16 matmul operands + tanh-GELU + approx reciprocals vs the all-f32 exact
    # reference loosen the tolerance (structural bugs would be >1e-1).
    assert err < 5e-2, f"max abs err {err}"
    print("KERNEL_OK")
</pallas_src>

<mosaic_0001>
module attributes {stable_mosaic.version = 11 : i64} {
  func.func @phase1(%arg0: i32, %arg1: i32, %arg2: i32, %arg3: memref<1x256x128xf32, #tpu.memory_space<vmem>>, %arg4: memref<1x128xf32, #tpu.memory_space<vmem>>, %arg5: memref<1x128xf32, #tpu.memory_space<vmem>>, %arg6: memref<128x384xbf16, #tpu.memory_space<vmem>>, %arg7: memref<1x256xf32, #tpu.memory_space<vmem>>, %arg8: memref<256x256xf32, #tpu.memory_space<vmem>>, %arg9: memref<1x256x128xf32, #tpu.memory_space<vmem>>, %arg10: memref<1x1x256xf32, #tpu.memory_space<vmem>>) attributes {dimension_semantics = [#tpu.dimension_semantics<parallel>, #tpu.dimension_semantics<parallel>, #tpu.dimension_semantics<arbitrary>], iteration_bounds = array<i64: 2, 2, 2>, scalar_prefetch = 0 : i64, scratch_operands = 0 : i64, tpu.core_type = #tpu.core_type<tc>, window_params = [{transform_indices = @transform_0, window_bounds = array<i64: 1, 256, 128>}, {pipeline_mode = #tpu.pipeline_mode<synchronous>, transform_indices = @transform_1, window_bounds = array<i64: 1, 128>}, {pipeline_mode = #tpu.pipeline_mode<synchronous>, transform_indices = @transform_2, window_bounds = array<i64: 1, 128>}, {pipeline_mode = #tpu.pipeline_mode<synchronous>, transform_indices = @transform_3, window_bounds = array<i64: 128, 384>}, {pipeline_mode = #tpu.pipeline_mode<synchronous>, transform_indices = @transform_4, window_bounds = array<i64: 1, 256>}, {pipeline_mode = #tpu.pipeline_mode<synchronous>, transform_indices = @transform_5, window_bounds = array<i64: 256, 256>}, {transform_indices = @transform_6, window_bounds = array<i64: 1, 256, 128>}, {transform_indices = @transform_7, window_bounds = array<i64: 1, 1, 256>}]} {
    %c0_i32 = arith.constant 0 : i32
    %0 = arith.cmpi eq, %arg2, %c0_i32 : i32
    %1 = arith.extui %0 : i1 to i32
    %c0_i32_0 = arith.constant 0 : i32
    %2 = arith.cmpi ne, %1, %c0_i32_0 : i32
    scf.if %2 {
      %cst_35 = arith.constant 0.000000e+00 : f32
      %65 = vector.broadcast %cst_35 : f32 to vector<256x128xf32>
      %c0_36 = arith.constant 0 : index
      %c0_37 = arith.constant 0 : index
      %c0_38 = arith.constant 0 : index
      %66 = vector.load %arg9[%c0_36, %c0_37, %c0_38] : memref<1x256x128xf32, #tpu.memory_space<vmem>>, vector<1x256x128xf32>
      %67 = vector.shape_cast %66 : vector<1x256x128xf32> to vector<256x128xf32>
      %68 = vector.shape_cast %65 : vector<256x128xf32> to vector<1x256x128xf32>
      tpu.vector_store %arg9[%c0_36, %c0_37, %c0_38], %68 {strides = array<i32>} : memref<1x256x128xf32, #tpu.memory_space<vmem>>, vector<1x256x128xf32>,
      %cst_39 = arith.constant 0.000000e+00 : f32
      %69 = vector.broadcast %cst_39 : f32 to vector<1x256xf32>
      %c0_40 = arith.constant 0 : index
      %c0_41 = arith.constant 0 : index
      %c0_42 = arith.constant 0 : index
      %70 = vector.load %arg10[%c0_40, %c0_41, %c0_42] : memref<1x1x256xf32, #tpu.memory_space<vmem>>, vector<1x1x256xf32>
      %71 = vector.shape_cast %70 : vector<1x1x256xf32> to vector<1x256xf32>
      %72 = vector.shape_cast %69 : vector<1x256xf32> to vector<1x1x256xf32>
      tpu.vector_store %arg10[%c0_40, %c0_41, %c0_42], %72 {strides = array<i32>} : memref<1x1x256xf32, #tpu.memory_space<vmem>>, vector<1x1x256xf32>,
    } else {
    }
    %c0 = arith.constant 0 : index
    %c0_1 = arith.constant 0 : index
    %c0_2 = arith.constant 0 : index
    %3 = vector.load %arg3[%c0, %c0_1, %c0_2] : memref<1x256x128xf32, #tpu.memory_space<vmem>>, vector<1x256x128xf32>
    %4 = vector.shape_cast %3 : vector<1x256x128xf32> to vector<256x128xf32>
    %c0_3 = arith.constant 0 : index
    %c0_4 = arith.constant 0 : index
    %5 = vector.load %arg4[%c0_3, %c0_4] : memref<1x128xf32, #tpu.memory_space<vmem>>, vector<1x128xf32>
    %c0_5 = arith.constant 0 : index
    %c0_6 = arith.constant 0 : index
    %6 = vector.load %arg5[%c0_5, %c0_6] : memref<1x128xf32, #tpu.memory_space<vmem>>, vector<1x128xf32>
    %cst = arith.constant dense<0.000000e+00> : vector<256xf32>
    %7 = vector.multi_reduction <add>, %4, %cst [1] : vector<256x128xf32> to vector<256xf32>
    %8 = vector.shape_cast %7 : vector<256xf32> to vector<256x1xf32>
    %cst_7 = arith.constant 1.280000e+02 : f32
    %9 = vector.broadcast %cst_7 : f32 to vector<256x1xf32>
    %10 = arith.divf %8, %9 : vector<256x1xf32>
    %11 = vector.broadcast %10 : vector<256x1xf32> to vector<256x128xf32>
    %12 = arith.subf %4, %11 : vector<256x128xf32>
    %13 = arith.mulf %12, %12 : vector<256x128xf32>
    %cst_8 = arith.constant dense<0.000000e+00> : vector<256xf32>
    %14 = vector.multi_reduction <add>, %13, %cst_8 [1] : vector<256x128xf32> to vector<256xf32>
    %15 = vector.shape_cast %14 : vector<256xf32> to vector<256x1xf32>
    %cst_9 = arith.constant 1.280000e+02 : f32
    %16 = vector.broadcast %cst_9 : f32 to vector<256x1xf32>
    %17 = arith.divf %15, %16 : vector<256x1xf32>
    %18 = vector.broadcast %10 : vector<256x1xf32> to vector<256x128xf32>
    %19 = arith.subf %4, %18 : vector<256x128xf32>
    %cst_10 = arith.constant 9.99999974E-6 : f32
    %20 = vector.broadcast %cst_10 : f32 to vector<256x1xf32>
    %21 = arith.addf %17, %20 : vector<256x1xf32>
    %22 = math.rsqrt %21 : vector<256x1xf32>
    %23 = vector.broadcast %22 : vector<256x1xf32> to vector<256x128xf32>
    %24 = arith.mulf %19, %23 : vector<256x128xf32>
    %25 = vector.broadcast %5 : vector<1x128xf32> to vector<256x128xf32>
    %26 = arith.mulf %24, %25 : vector<256x128xf32>
    %27 = vector.broadcast %6 : vector<1x128xf32> to vector<256x128xf32>
    %28 = arith.addf %26, %27 : vector<256x128xf32>
    %29 = arith.truncf %28 : vector<256x128xf32> to vector<256x128xbf16>
    %c0_11 = arith.constant 0 : index
    %c0_12 = arith.constant 0 : index
    %30 = vector.load %arg6[%c0_11, %c0_12] : memref<128x384xbf16, #tpu.memory_space<vmem>>, vector<128x384xbf16>
    %cst_13 = arith.constant dense<0.000000e+00> : vector<256x384xf32>
    %31 = tpu.matmul %29, %30, %cst_13 {dimension_numbers = #tpu.dot_dimension_numbers<[1], [0], [0], [1], [0, 0, 1, 1], [], []>} : vector<256x128xbf16>, vector<128x384xbf16>, vector<256x384xf32> -> vector<256x384xf32>
    %32 = vector.extract_strided_slice %31 {offsets = [0, 0], sizes = [256, 128], strides = [1, 1]} : vector<256x384xf32> to vector<256x128xf32>
    %33 = vector.extract_strided_slice %31 {offsets = [0, 128], sizes = [256, 256], strides = [1, 1]} : vector<256x384xf32> to vector<256x256xf32>
    %c0_14 = arith.constant 0 : index
    %c0_15 = arith.constant 0 : index
    %34 = vector.load %arg7[%c0_14, %c0_15] : memref<1x256xf32, #tpu.memory_space<vmem>>, vector<1x256xf32>
    %35 = vector.broadcast %34 : vector<1x256xf32> to vector<256x256xf32>
    %36 = arith.addf %33, %35 : vector<256x256xf32>
    %c0_16 = arith.constant 0 : index
    %c0_17 = arith.constant 0 : index
    %37 = vector.load %arg8[%c0_16, %c0_17] : memref<256x256xf32, #tpu.memory_space<vmem>>, vector<256x256xf32>
    %cst_18 = arith.constant dense<0xFF800000> : vector<256xf32>
    %38 = vector.multi_reduction <maximumf>, %36, %cst_18 [1] : vector<256x256xf32> to vector<256xf32>
    %39 = vector.shape_cast %38 : vector<256xf32> to vector<256x1xf32>
    %40 = vector.broadcast %39 : vector<256x1xf32> to vector<256x256xf32>
    %41 = arith.subf %36, %40 : vector<256x256xf32>
    %42 = math.exp %41 : vector<256x256xf32>
    %cst_19 = arith.constant dense<0.000000e+00> : vector<256x256xf32>
    %43 = tpu.matmul %42, %37, %cst_19 {dimension_numbers = #tpu.dot_dimension_numbers<[1], [0], [0], [1], [0, 0, 1, 1], [], []>} : vector<256x256xf32>, vector<256x256xf32>, vector<256x256xf32> -> vector<256x256xf32>
    %cst_20 = arith.constant 1.000000e-30 : f32
    %44 = vector.broadcast %cst_20 : f32 to vector<256x256xf32>
    %45 = arith.maximumf %43, %44 : vector<256x256xf32>
    %46 = tpu.reciprocal %45 {approx = true} : vector<256x256xf32> -> vector<256x256xf32>
    %47 = arith.mulf %42, %46 : vector<256x256xf32>
    %c0_21 = arith.constant 0 : index
    %c0_22 = arith.constant 0 : index
    %c0_23 = arith.constant 0 : index
    %48 = vector.load %arg9[%c0_21, %c0_22, %c0_23] : memref<1x256x128xf32, #tpu.memory_space<vmem>>, vector<1x256x128xf32>
    %49 = vector.shape_cast %48 : vector<1x256x128xf32> to vector<256x128xf32>
    %50 = arith.truncf %47 : vector<256x256xf32> to vector<256x256xbf16>
    %51 = arith.truncf %32 : vector<256x128xf32> to vector<256x128xbf16>
    %cst_24 = arith.constant dense<0.000000e+00> : vector<256x128xf32>
    %52 = tpu.matmul %50, %51, %cst_24 {dimension_numbers = #tpu.dot_dimension_numbers<[0], [0], [1], [1], [0, 1, 1, 1], [], []>} : vector<256x256xbf16>, vector<256x128xbf16>, vector<256x128xf32> -> vector<256x128xf32>
    %53 = arith.addf %49, %52 : vector<256x128xf32>
    %c0_25 = arith.constant 0 : index
    %c0_26 = arith.constant 0 : index
    %c0_27 = arith.constant 0 : index
    %54 = vector.load %arg9[%c0_25, %c0_26, %c0_27] : memref<1x256x128xf32, #tpu.memory_space<vmem>>, vector<1x256x128xf32>
    %55 = vector.shape_cast %54 : vector<1x256x128xf32> to vector<256x128xf32>
    %56 = vector.shape_cast %53 : vector<256x128xf32> to vector<1x256x128xf32>
    tpu.vector_store %arg9[%c0_25, %c0_26, %c0_27], %56 {strides = array<i32>} : memref<1x256x128xf32, #tpu.memory_space<vmem>>, vector<1x256x128xf32>,
    %c0_28 = arith.constant 0 : index
    %c0_29 = arith.constant 0 : index
    %c0_30 = arith.constant 0 : index
    %57 = vector.load %arg10[%c0_28, %c0_29, %c0_30] : memref<1x1x256xf32, #tpu.memory_space<vmem>>, vector<1x1x256xf32>
    %58 = vector.shape_cast %57 : vector<1x1x256xf32> to vector<1x256xf32>
    %cst_31 = arith.constant dense<0.000000e+00> : vector<256xf32>
    %59 = vector.multi_reduction <add>, %47, %cst_31 [0] : vector<256x256xf32> to vector<256xf32>
    %60 = vector.shape_cast %59 : vector<256xf32> to vector<1x256xf32>
    %61 = arith.addf %58, %60 : vector<1x256xf32>
    %c0_32 = arith.constant 0 : index
    %c0_33 = arith.constant 0 : index
    %c0_34 = arith.constant 0 : index
    %62 = vector.load %arg10[%c0_32, %c0_33, %c0_34] : memref<1x1x256xf32, #tpu.memory_space<vmem>>, vector<1x1x256xf32>
    %63 = vector.shape_cast %62 : vector<1x1x256xf32> to vector<1x256xf32>
    %64 = vector.shape_cast %61 : vector<1x256xf32> to vector<1x1x256xf32>
    tpu.vector_store %arg10[%c0_32, %c0_33, %c0_34], %64 {strides = array<i32>} : memref<1x1x256xf32, #tpu.memory_space<vmem>>, vector<1x1x256xf32>,
    return
  }
  func.func @transform_0(%arg0: i32, %arg1: i32, %arg2: i32) -> (i32, i32, i32) {
    %c2_i32 = arith.constant 2 : i32
    %0 = arith.muli %arg1, %c2_i32 : i32
    %1 = arith.addi %0, %arg2 : i32
    %c0_i32 = arith.constant 0 : i32
    %c0_i32_0 = arith.constant 0 : i32
    return %arg0, %1, %c0_i32 : i32, i32, i32
  }
  func.func @transform_1(%arg0: i32, %arg1: i32, %arg2: i32) -> (i32, i32) {
    %c0_i32 = arith.constant 0 : i32
    %c0_i32_0 = arith.constant 0 : i32
    %c0_i32_1 = arith.constant 0 : i32
    return %c0_i32, %c0_i32_0 : i32, i32
  }
  func.func @transform_2(%arg0: i32, %arg1: i32, %arg2: i32) -> (i32, i32) {
    %c0_i32 = arith.constant 0 : i32
    %c0_i32_0 = arith.constant 0 : i32
    %c0_i32_1 = arith.constant 0 : i32
    return %c0_i32, %c0_i32_0 : i32, i32
  }
  func.func @transform_3(%arg0: i32, %arg1: i32, %arg2: i32) -> (i32, i32) {
    %c0_i32 = arith.constant 0 : i32
    %c0_i32_0 = arith.constant 0 : i32
    %c0_i32_1 = arith.constant 0 : i32
    return %c0_i32, %c0_i32_0 : i32, i32
  }
  func.func @transform_4(%arg0: i32, %arg1: i32, %arg2: i32) -> (i32, i32) {
    %c0_i32 = arith.constant 0 : i32
    %c0_i32_0 = arith.constant 0 : i32
    %c0_i32_1 = arith.constant 0 : i32
    return %c0_i32, %c0_i32_0 : i32, i32
  }
  func.func @transform_5(%arg0: i32, %arg1: i32, %arg2: i32) -> (i32, i32) {
    %c0_i32 = arith.constant 0 : i32
    %c0_i32_0 = arith.constant 0 : i32
    %c0_i32_1 = arith.constant 0 : i32
    return %c0_i32, %c0_i32_0 : i32, i32
  }
  func.func @transform_6(%arg0: i32, %arg1: i32, %arg2: i32) -> (i32, i32, i32) {
    %c2_i32 = arith.constant 2 : i32
    %0 = arith.muli %arg0, %c2_i32 : i32
    %1 = arith.addi %0, %arg1 : i32
    %c0_i32 = arith.constant 0 : i32
    %c0_i32_0 = arith.constant 0 : i32
    %c0_i32_1 = arith.constant 0 : i32
    return %1, %c0_i32, %c0_i32_0 : i32, i32, i32
  }
  func.func @transform_7(%arg0: i32, %arg1: i32, %arg2: i32) -> (i32, i32, i32) {
    %c2_i32 = arith.constant 2 : i32
    %0 = arith.muli %arg0, %c2_i32 : i32
    %1 = arith.addi %0, %arg1 : i32
    %c0_i32 = arith.constant 0 : i32
    %c0_i32_0 = arith.constant 0 : i32
    %c0_i32_1 = arith.constant 0 : i32
    return %1, %c0_i32, %c0_i32_0 : i32, i32, i32
  }
}

</mosaic_0001>

<llo_original>
// kernel: tpu_custom_call.1
$region0: #{tpu_custom_call.1}
  #allocation0 [shape = 'u32[]', space=smem, size = 0x4, offset = 0x4, fixed_abs, tag = 'smem constant byte address 0x4 - core index']
  #allocation1 [shape = 'u32[144,128]{1,0:T(1,128)}', space=vmem, size = 0x12000, scoped, tag = 'internal scratch']
  %s0 = inlined_call_operand.hbm [shape: f32[2,1024,128], index: 0, kind: input, shape index: {}]
  %s1 = inlined_call_operand.vmem [shape: f32[1,128], index: 1, kind: input, shape index: {}]
  %s2 = inlined_call_operand.hbm [shape: f32[1,128], index: 2, kind: input, shape index: {}]
  %s3 = inlined_call_operand.hbm [shape: bf16[128,384], index: 3, kind: input, shape index: {}]
  %s4 = inlined_call_operand.vmem [shape: f32[1,256], index: 4, kind: input, shape index: {}]
  %s5 = inlined_call_operand.hbm [shape: f32[256,256], index: 5, kind: input, shape index: {}]
  %s6 = inlined_call_operand.hbm [shape: f32[4,256,128], index: 6, kind: output, shape index: {0}]
  %s7 = inlined_call_operand.hbm [shape: f32[4,1,256], index: 7, kind: output, shape index: {1}]
  %8 = xla_tuple %s6, %s7
  %s9 = sld [smem:[#allocation0]]
  $region85: #{tpu_custom_call.1} parent=0
    _
  %s11 = ssub.s32 1, %s9
  %s12 = scalar_select 0, %s11, %s9
  $region1: #{tpu_custom_call.1} parent=0
    #allocation2 [shape = 'u8[262144]{0}', space=vmem, size = 0x40000, scoped, tag = 'input window, operand 0']
    #allocation3 [shape = 's32[2]{0}', space=sflag, size = 0x8, scoped, tag = 'scoped memory for tpu_custom_call.1']
    #allocation4 [shape = 's32[2]{0}', space=sflag, size = 0x8, scoped, tag = 'scoped memory for tpu_custom_call.1']
    #allocation5 [shape = 'u8[512]{0}', space=vmem, size = 0x400, scoped, tag = 'input window, operand 2, single buffered']
    #allocation6 [shape = 's32[1]{0}', space=sflag, size = 0x4, scoped, tag = 'scoped memory for tpu_custom_call.1']
    #allocation7 [shape = 'u8[98304]{0}', space=vmem, size = 0x18000, scoped, tag = 'input window, operand 3, single buffered']
    #allocation8 [shape = 'u8[262144]{0}', space=vmem, size = 0x40000, scoped, tag = 'input window, operand 5, single buffered']
    #allocation9 [shape = 's32[1]{0}', space=sflag, size = 0x4, scoped, tag = 'scoped memory for tpu_custom_call.1']
    #allocation10 [shape = 'u8[262144]{0}', space=vmem, size = 0x40000, scoped, tag = 'output window, operand 0']
    #allocation11 [shape = 'u8[2048]{0}', space=vmem, size = 0x800, scoped, tag = 'output window, operand 1']
    #allocation12 [shape = 's32[2]{0}', space=sflag, size = 0x8, scoped, tag = 'scoped memory for tpu_custom_call.1']
    %13 = vsyncpa [#allocation3], 0
    %s14 = scalar_lea.sflag [#allocation3], 1
    %15 = vsyncpa %s14, 0
    %16 = vsyncpa [#allocation6], 0
    %17 = vsyncpa [#allocation9], 0
    %18 = vsyncpa [#allocation4], 0
    %s19 = scalar_lea.sflag [#allocation4], 1
    %20 = vsyncpa %s19, 0
    %21 = vsyncpa [#allocation12], 0
    %s22 = scalar_lea.sflag [#allocation12], 1
    %23 = vsyncpa %s22, 0
    loop: start=0, step=1, limit=10
    $region2: #{tpu_custom_call.1} parent=1 // loop_pre_header
      _
    $region3: #{tpu_custom_call.1} parent=1 // loop_header
      %s25 = sphi 0, %s29
      %p26 = scmp.ge.s32.totalorder %s25, 10
      %s32 = sphi 0, %s51
      %s33 = sphi 0, %s47
      %s34 = sphi 0, %s43
      %s35 = sphi 0, %s32
      %s36 = sphi 0, %s33
      %s37 = sphi 0, %s34
      %s38 = sphi 0, %s35
      %s39 = sphi 0, %s36
      %s40 = sphi 0, %s37
      %s60 = sphi 0, %s62
      %s63 = sphi 0, %s60
      %s64 = sphi 0, %s63
      %s80 = sphi 0, %s64
      %s84 = sphi 0, %s84
      %s86 = sphi 0, %s84
      %s87 = sphi 0, %s86
      %s101 = sphi 0, %s87
      %s105 = sphi 0, %s105
      %s107 = sphi 0, %s105
      %s108 = sphi 0, %s107
      %s122 = sphi 0, %s108
      %s126 = sphi 0, %s126
      %s128 = sphi 0, %s126
      %s129 = sphi 0, %s128
      %s143 = sphi 0, %s129
      %s147 = sphi 0, %s147
      %s149 = sphi 0, %s147
      %s150 = sphi 0, %s149
      %s164 = sphi 0, %s150
      %s168 = sphi 0, %s168
      %s170 = sphi 0, %s168
      %s171 = sphi 0, %s170
      %s185 = sphi 0, %s171
      %s195 = sphi 0, %s197
      %s198 = sphi 0, %s195
      %s199 = sphi 0, %s198
      %s215 = sphi 0, %s199
      %s225 = sphi 0, %s227
      %s228 = sphi 0, %s225
      %s229 = sphi 0, %s228
      %s245 = sphi 0, %s229
    $region4: #{tpu_custom_call.1} parent=1 // loop_header_branch
      %28 = sbr.rel (%p26) target = $region8
    $region5: #{tpu_custom_call.1} parent=1 // loop_body
      %s30 = ssub.s32 %s25, 1
      %s31 = ssub.s32 %s25, 2
      %s41 = sadd.s32 1, %s34
      %p42 = scmp.ge.s32.totalorder %s41, 2
      %s43 = scalar_select %p42, 0, %s41
      %s44 = sadd.s32 1, %s33
      %s45 = scalar_select %p42, %s44, %s33
      %p46 = scmp.ge.s32.totalorder %s45, 2
      %s47 = scalar_select %p46, 0, %s45
      %s48 = sadd.s32 1, %s32
      %s49 = scalar_select %p46, %s48, %s32
      %p50 = scmp.ge.s32.totalorder %s49, 2
      %s51 = scalar_select %p50, 0, %s49
      %s52 = smul.u32 %s33, 2
      %s53 = sadd.s32 %s52, %s34
      %s54 = smul.u32 %s47, 2
      %s55 = sadd.s32 %s54, %s43
      %s56 = ssub.s32 %s32, %s51
      %s57 = ssub.s32 %s53, %s55
      %s58 = sor.u32 %s56, %s57
      %p59 = scmp.eq.s32.totalorder %s58, 0
      %s61 = sadd.s32 %s60, 1
      %s62 = scalar_select %p59, %s60, %s61
      %p65 = pneg %p59
      %p66 = scmp.eq.s32.totalorder %s25, 7
      %p67 = por %p65, %p66
      %p68 = scmp.ne.s32.totalorder %s60, %s63
      %p69 = scmp.eq.s32.totalorder %s25, 0
      %p70 = por %p68, %p69
      %p71 = scmp.ne.s32.totalorder %s60, %s63
      %p72 = scmp.eq.s32.totalorder %s30, 7
      %p73 = por %p71, %p72
      %p74 = scmp.ne.s32.totalorder %s63, %s64
      %p75 = scmp.eq.s32.totalorder %s30, 0
      %p76 = por %p74, %p75
      %p77 = scmp.ne.s32.totalorder %s63, %s64
      %p78 = scmp.eq.s32.totalorder %s31, 7
      %p79 = por %p77, %p78
      %p81 = scmp.ne.s32.totalorder %s64, %s80
      %p82 = scmp.eq.s32.totalorder %s31, 0
      %p83 = por %p81, %p82
      %s85 = sadd.s32 %s84, 1
      %p88 = scmp.eq.s32.totalorder %s25, 7
      %p89 = scmp.ne.s32.totalorder %s84, %s86
      %p90 = scmp.eq.s32.totalorder %s25, 0
      %p91 = por %p89, %p90
      %p92 = scmp.ne.s32.totalorder %s84, %s86
      %p93 = scmp.eq.s32.totalorder %s30, 7
      %p94 = por %p92, %p93
      %p95 = scmp.ne.s32.totalorder %s86, %s87
      %p96 = scmp.eq.s32.totalorder %s30, 0
      %p97 = por %p95, %p96
      %p98 = scmp.ne.s32.totalorder %s86, %s87
      %p99 = scmp.eq.s32.totalorder %s31, 7
      %p100 = por %p98, %p99
      %p102 = scmp.ne.s32.totalorder %s87, %s101
      %p103 = scmp.eq.s32.totalorder %s31, 0
      %p104 = por %p102, %p103
      %s106 = sadd.s32 %s105, 1
      %p109 = scmp.eq.s32.totalorder %s25, 7
      %p110 = scmp.ne.s32.totalorder %s105, %s107
      %p111 = scmp.eq.s32.totalorder %s25, 0
      %p112 = por %p110, %p111
      %p113 = scmp.ne.s32.totalorder %s105, %s107
      %p114 = scmp.eq.s32.totalorder %s30, 7
      %p115 = por %p113, %p114
      %p116 = scmp.ne.s32.totalorder %s107, %s108
      %p117 = scmp.eq.s32.totalorder %s30, 0
      %p118 = por %p116, %p117
      %p119 = scmp.ne.s32.totalorder %s107, %s108
      %p120 = scmp.eq.s32.totalorder %s31, 7
      %p121 = por %p119, %p120
      %p123 = scmp.ne.s32.totalorder %s108, %s122
      %p124 = scmp.eq.s32.totalorder %s31, 0
      %p125 = por %p123, %p124
      %s127 = sadd.s32 %s126, 1
      %p130 = scmp.eq.s32.totalorder %s25, 7
      %p131 = scmp.ne.s32.totalorder %s126, %s128
      %p132 = scmp.eq.s32.totalorder %s25, 0
      %p133 = por %p131, %p132
      %p134 = scmp.ne.s32.totalorder %s126, %s128
      %p135 = scmp.eq.s32.totalorder %s30, 7
      %p136 = por %p134, %p135
      %p137 = scmp.ne.s32.totalorder %s128, %s129
      %p138 = scmp.eq.s32.totalorder %s30, 0
      %p139 = por %p137, %p138
      %p140 = scmp.ne.s32.totalorder %s128, %s129
      %p141 = scmp.eq.s32.totalorder %s31, 7
      %p142 = por %p140, %p141
      %p144 = scmp.ne.s32.totalorder %s129, %s143
      %p145 = scmp.eq.s32.totalorder %s31, 0
      %p146 = por %p144, %p145
      %s148 = sadd.s32 %s147, 1
      %p151 = scmp.eq.s32.totalorder %s25, 7
      %p152 = scmp.ne.s32.totalorder %s147, %s149
      %p153 = scmp.eq.s32.totalorder %s25, 0
      %p154 = por %p152, %p153
      %p155 = scmp.ne.s32.totalorder %s147, %s149
      %p156 = scmp.eq.s32.totalorder %s30, 7
      %p157 = por %p155, %p156
      %p158 = scmp.ne.s32.totalorder %s149, %s150
      %p159 = scmp.eq.s32.totalorder %s30, 0
      %p160 = por %p158, %p159
      %p161 = scmp.ne.s32.totalorder %s149, %s150
      %p162 = scmp.eq.s32.totalorder %s31, 7
      %p163 = por %p161, %p162
      %p165 = scmp.ne.s32.totalorder %s150, %s164
      %p166 = scmp.eq.s32.totalorder %s31, 0
      %p167 = por %p165, %p166
      %s169 = sadd.s32 %s168, 1
      %p172 = scmp.eq.s32.totalorder %s25, 7
      %p173 = scmp.ne.s32.totalorder %s168, %s170
      %p174 = scmp.eq.s32.totalorder %s25, 0
      %p175 = por %p173, %p174
      %p176 = scmp.ne.s32.totalorder %s168, %s170
      %p177 = scmp.eq.s32.totalorder %s30, 7
      %p178 = por %p176, %p177
      %p179 = scmp.ne.s32.totalorder %s170, %s171
      %p180 = scmp.eq.s32.totalorder %s30, 0
      %p181 = por %p179, %p180
      %p182 = scmp.ne.s32.totalorder %s170, %s171
      %p183 = scmp.eq.s32.totalorder %s31, 7
      %p184 = por %p182, %p183
      %p186 = scmp.ne.s32.totalorder %s171, %s185
      %p187 = scmp.eq.s32.totalorder %s31, 0
      %p188 = por %p186, %p187
      %s189 = smul.u32 %s32, 2
      %s190 = sadd.s32 %s189, %s33
      %s191 = smul.u32 %s51, 2
      %s192 = sadd.s32 %s191, %s47
      %s193 = ssub.s32 %s190, %s192
      %p194 = scmp.eq.s32.totalorder %s193, 0
      %s196 = sadd.s32 %s195, 1
      %s197 = scalar_select %p194, %s195, %s196
      %p200 = pneg %p194
      %p201 = scmp.eq.s32.totalorder %s25, 7
      %p202 = por %p200, %p201
      %p203 = scmp.ne.s32.totalorder %s195, %s198
      %p204 = scmp.eq.s32.totalorder %s25, 0
      %p205 = por %p203, %p204
      %p206 = scmp.ne.s32.totalorder %s195, %s198
      %p207 = scmp.eq.s32.totalorder %s30, 7
      %p208 = por %p206, %p207
      %p209 = scmp.ne.s32.totalorder %s198, %s199
      %p210 = scmp.eq.s32.totalorder %s30, 0
      %p211 = por %p209, %p210
      %p212 = scmp.ne.s32.totalorder %s198, %s199
      %p213 = scmp.eq.s32.totalorder %s31, 7
      %p214 = por %p212, %p213
      %p216 = scmp.ne.s32.totalorder %s199, %s215
      %p217 = scmp.eq.s32.totalorder %s31, 0
      %p218 = por %p216, %p217
      %s219 = smul.u32 %s32, 2
      %s220 = sadd.s32 %s219, %s33
      %s221 = smul.u32 %s51, 2
      %s222 = sadd.s32 %s221, %s47
      %s223 = ssub.s32 %s220, %s222
      %p224 = scmp.eq.s32.totalorder %s223, 0
      %s226 = sadd.s32 %s225, 1
      %s227 = scalar_select %p224, %s225, %s226
      %p230 = pneg %p224
      %p231 = scmp.eq.s32.totalorder %s25, 7
      %p232 = por %p230, %p231
      %p233 = scmp.ne.s32.totalorder %s225, %s228
      %p234 = scmp.eq.s32.totalorder %s25, 0
      %p235 = por %p233, %p234
      %p236 = scmp.ne.s32.totalorder %s225, %s228
      %p237 = scmp.eq.s32.totalorder %s30, 7
      %p238 = por %p236, %p237
      %p239 = scmp.ne.s32.totalorder %s228, %s229
      %p240 = scmp.eq.s32.totalorder %s30, 0
      %p241 = por %p239, %p240
      %p242 = scmp.ne.s32.totalorder %s228, %s229
      %p243 = scmp.eq.s32.totalorder %s31, 7
      %p244 = por %p242, %p243
      %p246 = scmp.ne.s32.totalorder %s229, %s245
      %p247 = scmp.eq.s32.totalorder %s31, 0
      %p248 = por %p246, %p247
      %p249 = scmp.le.s32.totalorder 1, %s25
      %p250 = scmp.lt.s32.totalorder %s25, 9
      %p251 = pnand %p249, %p250
      %p252 = pneg %p251
      // Predicated region
      $region9: #{tpu_custom_call.1} parent=5 // pred_check
        _
      $region10: #{tpu_custom_call.1} parent=5 // pred_check_branch
        %254 = sbr.rel (%p251) target = $region12
      $region11: #{tpu_custom_call.1} parent=5 // pred_region
        %s255 = ssub.s32 %s25, 1
        // Predicated region
        $region13: #{tpu_custom_call.1} parent=11 // pred_check
          %p256 = pneg %p97
        $region14: #{tpu_custom_call.1} parent=11 // pred_check_branch
          %258 = sbr.rel (%p256) target = $region16
        $region15: #{tpu_custom_call.1} parent=11 // pred_region
          _
        $region16: #{tpu_custom_call.1} parent=11 // pred_fallthru
          _
        // Predicated region
        $region17: #{tpu_custom_call.1} parent=11 // pred_check
          %p259 = pneg %p118
        $region18: #{tpu_custom_call.1} parent=11 // pred_check_branch
          %261 = sbr.rel (%p259) target = $region20
        $region19: #{tpu_custom_call.1} parent=11 // pred_region
          %s263 = ssub.s32 16, 16
          %264 = vsyncadd [#allocation6], %s263
          %s266 = sshll.u32 [#allocation5], 4
          %s267 = int_to_ptr.vmem [resolvable:$true] %s266
          %269 = dma.hbm_to_vmem [thread:$0]  %s2, 16, %s267, [#allocation6]
        $region20: #{tpu_custom_call.1} parent=11 // pred_fallthru
          _
        // Predicated region
        $region21: #{tpu_custom_call.1} parent=11 // pred_check
          %p270 = pneg %p139
        $region22: #{tpu_custom_call.1} parent=11 // pred_check_branch
          %272 = sbr.rel (%p270) target = $region24
        $region23: #{tpu_custom_call.1} parent=11 // pred_region
          %s274 = ssub.s32 3072, 3072
          %275 = vsyncadd [#allocation6], %s274
          %s276 = sshll.u32 [#allocation7], 4
          %s277 = int_to_ptr.vmem [resolvable:$true] %s276
          %282 = dma.hbm_to_vmem [thread:$0]  %s3, 3072, %s277, [#allocation6], 192, 192, 12
        $region24: #{tpu_custom_call.1} parent=11 // pred_fallthru
          _
        // Predicated region
        $region25: #{tpu_custom_call.1} parent=11 // pred_check
          %p283 = pneg %p160
        $region26: #{tpu_custom_call.1} parent=11 // pred_check_branch
          %285 = sbr.rel (%p283) target = $region28
        $region27: #{tpu_custom_call.1} parent=11 // pred_region
          _
        $region28: #{tpu_custom_call.1} parent=11 // pred_fallthru
          _
        // Predicated region
        $region29: #{tpu_custom_call.1} parent=11 // pred_check
          %p286 = pneg %p181
        $region30: #{tpu_custom_call.1} parent=11 // pred_check_branch
          %288 = sbr.rel (%p286) target = $region32
        $region31: #{tpu_custom_call.1} parent=11 // pred_region
          %s290 = ssub.s32 8192, 8192
          %291 = vsyncadd [#allocation9], %s290
          %s292 = sshll.u32 [#allocation8], 4
          %s293 = int_to_ptr.vmem [resolvable:$true] %s292
          %298 = dma.hbm_to_vmem [thread:$0]  %s5, 8192, %s293, [#allocation9], 256, 256, 16
        $region32: #{tpu_custom_call.1} parent=11 // pred_fallthru
          _
      $region12: #{tpu_custom_call.1} parent=5 // pred_fallthru
        _
      %p299 = scmp.lt.s32.totalorder %s25, 8
      // Predicated region
      $region33: #{tpu_custom_call.1} parent=5 // pred_check
        %p300 = pneg %p299
      $region34: #{tpu_custom_call.1} parent=5 // pred_check_branch
        %302 = sbr.rel (%p300) target = $region36
      $region35: #{tpu_custom_call.1} parent=5 // pred_region
        // Predicated region
        $region37: #{tpu_custom_call.1} parent=35 // pred_check
          %p303 = pneg %p70
        $region38: #{tpu_custom_call.1} parent=35 // pred_check_branch
          %305 = sbr.rel (%p303) target = $region40
        $region39: #{tpu_custom_call.1} parent=35 // pred_region
          %s306 = sand.u32 %s60, 1
          %s307 = scalar_lea.sflag [#allocation3], %s306
          %s308 = sand.u32 %s60, 1
          %s309 = smul.addr %s308, 256
          %s310 = scalar_lea.vmem [#allocation2], %s309
          %s311 = smul.u32 %s33, 2
          %s312 = sadd.s32 %s311, %s34
          %s313 = smul.u32 32, %s312
          %s315 = ssub.s32 4096, 4096
          %316 = vsyncadd %s307, %s315
          %s317 = smul.addr %s32, 128
          %s318 = sadd.s32 %s313, %s317
          %s319 = smul.addr %s318, 128
          %s320 = scalar_lea.hbm %s0, %s319
          %s321 = sshll.u32 %s310, 4
          %s322 = int_to_ptr.vmem [resolvable:$true] %s321
          %327 = dma.hbm_to_vmem [thread:$0]  %s320, 4096, %s322, %s307, 128, 128, 8
        $region40: #{tpu_custom_call.1} parent=35 // pred_fallthru
          _
      $region36: #{tpu_custom_call.1} parent=5 // pred_fallthru
        _
      %p328 = scmp.le.s32.totalorder 1, %s25
      %p329 = scmp.lt.s32.totalorder %s25, 9
      %p330 = pnand %p328, %p329
      %p331 = pneg %p330
      // Predicated region
      $region41: #{tpu_custom_call.1} parent=5 // pred_check
        _
      $region42: #{tpu_custom_call.1} parent=5 // pred_check_branch
        %333 = sbr.rel (%p330) target = $region44
      $region43: #{tpu_custom_call.1} parent=5 // pred_region
        %s334 = ssub.s32 %s25, 1
        %s335 = sand.u32 %s63, 1
        %s336 = scalar_lea.sflag [#allocation3], %s335
        %s337 = sand.u32 %s63, 1
        %s338 = smul.addr %s337, 256
        %s339 = scalar_lea.vmem [#allocation2], %s338
        // Predicated region
        $region45: #{tpu_custom_call.1} parent=43 // pred_check
          %p340 = pneg %p76
        $region46: #{tpu_custom_call.1} parent=43 // pred_check_branch
          %342 = sbr.rel (%p340) target = $region48
        $region47: #{tpu_custom_call.1} parent=43 // pred_region
          %343 = dma.done %s336, 4096
        $region48: #{tpu_custom_call.1} parent=43 // pred_fallthru
          _
        // Predicated region
        $region49: #{tpu_custom_call.1} parent=43 // pred_check
          %p344 = pneg %p118
        $region50: #{tpu_custom_call.1} parent=43 // pred_check_branch
          %346 = sbr.rel (%p344) target = $region52
        $region51: #{tpu_custom_call.1} parent=43 // pred_region
          %347 = dma.done [#allocation6], 16
        $region52: #{tpu_custom_call.1} parent=43 // pred_fallthru
          _
        // Predicated region
        $region53: #{tpu_custom_call.1} parent=43 // pred_check
          %p348 = pneg %p139
        $region54: #{tpu_custom_call.1} parent=43 // pred_check_branch
          %350 = sbr.rel (%p348) target = $region56
        $region55: #{tpu_custom_call.1} parent=43 // pred_region
          %351 = dma.done [#allocation6], 3072
        $region56: #{tpu_custom_call.1} parent=43 // pred_fallthru
          _
        // Predicated region
        $region57: #{tpu_custom_call.1} parent=43 // pred_check
          %p352 = pneg %p181
        $region58: #{tpu_custom_call.1} parent=43 // pred_check_branch
          %354 = sbr.rel (%p352) target = $region60
        $region59: #{tpu_custom_call.1} parent=43 // pred_region
          %355 = dma.done [#allocation9], 8192
        $region60: #{tpu_custom_call.1} parent=43 // pred_fallthru
          _
        %s356 = sand.u32 %s63, 1
        %s357 = scalar_lea.sflag [#allocation3], %s356
        %s358 = sand.u32 %s63, 1
        %s359 = smul.addr %s358, 256
        %s360 = scalar_lea.vmem [#allocation2], %s359
        %p361 = pneg %p76
        %p362 = pneg %p73
        %p363 = pneg %p97
        %p364 = pneg %p94
        %p365 = pneg %p118
        %p366 = pneg %p115
        %p367 = pneg %p139
        %p368 = pneg %p136
        %p369 = pneg %p160
        %p370 = pneg %p157
        %p371 = pneg %p181
        %p372 = pneg %p178
        %p373 = pneg %p211
        %p374 = pneg %p208
        %s375 = sand.u32 %s198, 1
        %s376 = scalar_lea.sflag [#allocation4], %s375
        %s377 = sand.u32 %s198, 1
        %s378 = smul.addr %s377, 256
        %s379 = scalar_lea.vmem [#allocation10], %s378
        %p380 = pneg %p241
        %p381 = pneg %p238
        %s382 = sand.u32 %s228, 1
        %s383 = scalar_lea.sflag [#allocation12], %s382
        %s384 = sand.u32 %s228, 1
        %s385 = smul.addr %s384, 2
        %s386 = scalar_lea.vmem [#allocation11], %s385
        %s387 = smul.u32 %s36, 2
        %s388 = sadd.s32 %s387, %s37
        %s389 = smul.u32 32, %s388
        %s390 = smul.u32 %s35, 2
        %s391 = sadd.s32 %s390, %s36
        %s392 = smul.u32 %s35, 2
        %s393 = sadd.s32 %s392, %s36
        %p395 = scmp.eq.s32.totalorder %s37, 0
        // Predicated region
        $region61: #{tpu_custom_call.1} parent=43 // pred_check
          %p396 = pneg %p395
        $region62: #{tpu_custom_call.1} parent=43 // pred_check_branch
          %398 = sbr.rel (%p396) target = $region64
        $region63: #{tpu_custom_call.1} parent=43 // pred_region
          %399 = vst [vmem:[%s379] sm:$0xff] 0.0
          %400 = vst [vmem:[%s379 + $0x8] sm:$0xff] 0.0
          %401 = vst [vmem:[%s379 + $0x10] sm:$0xff] 0.0
          %402 = vst [vmem:[%s379 + $0x18] sm:$0xff] 0.0
          %403 = vst [vmem:[%s379 + $0x20] sm:$0xff] 0.0
          %404 = vst [vmem:[%s379 + $0x28] sm:$0xff] 0.0
          %405 = vst [vmem:[%s379 + $0x30] sm:$0xff] 0.0
          %406 = vst [vmem:[%s379 + $0x38] sm:$0xff] 0.0
          %407 = vst [vmem:[%s379 + $0x40] sm:$0xff] 0.0
          %408 = vst [vmem:[%s379 + $0x48] sm:$0xff] 0.0
          %409 = vst [vmem:[%s379 + $0x50] sm:$0xff] 0.0
          %410 = vst [vmem:[%s379 + $0x58] sm:$0xff] 0.0
          %411 = vst [vmem:[%s379 + $0x60] sm:$0xff] 0.0
          %412 = vst [vmem:[%s379 + $0x68] sm:$0xff] 0.0
          %413 = vst [vmem:[%s379 + $0x70] sm:$0xff] 0.0
          %414 = vst [vmem:[%s379 + $0x78] sm:$0xff] 0.0
          %415 = vst [vmem:[%s379 + $0x80] sm:$0xff] 0.0
          %416 = vst [vmem:[%s379 + $0x88] sm:$0xff] 0.0
          %417 = vst [vmem:[%s379 + $0x90] sm:$0xff] 0.0
          %418 = vst [vmem:[%s379 + $0x98] sm:$0xff] 0.0
          %419 = vst [vmem:[%s379 + $0xa0] sm:$0xff] 0.0
          %420 = vst [vmem:[%s379 + $0xa8] sm:$0xff] 0.0
          %421 = vst [vmem:[%s379 + $0xb0] sm:$0xff] 0.0
          %422 = vst [vmem:[%s379 + $0xb8] sm:$0xff] 0.0
          %423 = vst [vmem:[%s379 + $0xc0] sm:$0xff] 0.0
          %424 = vst [vmem:[%s379 + $0xc8] sm:$0xff] 0.0
          %425 = vst [vmem:[%s379 + $0xd0] sm:$0xff] 0.0
          %426 = vst [vmem:[%s379 + $0xd8] sm:$0xff] 0.0
          %427 = vst [vmem:[%s379 + $0xe0] sm:$0xff] 0.0
          %428 = vst [vmem:[%s379 + $0xe8] sm:$0xff] 0.0
          %429 = vst [vmem:[%s379 + $0xf0] sm:$0xff] 0.0
          %430 = vst [vmem:[%s379 + $0xf8] sm:$0xff] 0.0
          %v431 = vlaneseq
          %vm432 = vcmp.ge.s32.totalorder %v431, 0
          %vm433 = vcmp.lt.s32.totalorder %v431, 256
          %vm434 = vmand %vm432, %vm433
          %435 = vst.msk [vmem:[%s386] sm:$0x3] %vm434, 0.0
        $region64: #{tpu_custom_call.1} parent=43 // pred_fallthru
          _
        %v436 = vld [vmem:[%s339] sm:$0xff]
        %v437 = vld [vmem:[%s339 + $0x8] sm:$0xff]
        %v438 = vld [vmem:[%s339 + $0x10] sm:$0xff]
        %v439 = vld [vmem:[%s339 + $0x18] sm:$0xff]
        %v440 = vld [vmem:[%s339 + $0x20] sm:$0xff]
        %v441 = vld [vmem:[%s339 + $0x28] sm:$0xff]
        %v442 = vld [vmem:[%s339 + $0x30] sm:$0xff]
        %v443 = vld [vmem:[%s339 + $0x38] sm:$0xff]
        %v444 = vld [vmem:[%s339 + $0x40] sm:$0xff]
        %v445 = vld [vmem:[%s339 + $0x48] sm:$0xff]
        %v446 = vld [vmem:[%s339 + $0x50] sm:$0xff]
        %v447 = vld [vmem:[%s339 + $0x58] sm:$0xff]
        %v448 = vld [vmem:[%s339 + $0x60] sm:$0xff]
        %v449 = vld [vmem:[%s339 + $0x68] sm:$0xff]
        %v450 = vld [vmem:[%s339 + $0x70] sm:$0xff]
        %v451 = vld [vmem:[%s339 + $0x78] sm:$0xff]
        %v452 = vld [vmem:[%s339 + $0x80] sm:$0xff]
        %v453 = vld [vmem:[%s339 + $0x88] sm:$0xff]
        %v454 = vld [vmem:[%s339 + $0x90] sm:$0xff]
        %v455 = vld [vmem:[%s339 + $0x98] sm:$0xff]
        %v456 = vld [vmem:[%s339 + $0xa0] sm:$0xff]
        %v457 = vld [vmem:[%s339 + $0xa8] sm:$0xff]
        %v458 = vld [vmem:[%s339 + $0xb0] sm:$0xff]
        %v459 = vld [vmem:[%s339 + $0xb8] sm:$0xff]
        %v460 = vld [vmem:[%s339 + $0xc0] sm:$0xff]
        %v461 = vld [vmem:[%s339 + $0xc8] sm:$0xff]
        %v462 = vld [vmem:[%s339 + $0xd0] sm:$0xff]
        %v463 = vld [vmem:[%s339 + $0xd8] sm:$0xff]
        %v464 = vld [vmem:[%s339 + $0xe0] sm:$0xff]
        %v465 = vld [vmem:[%s339 + $0xe8] sm:$0xff]
        %v466 = vld [vmem:[%s339 + $0xf0] sm:$0xff]
        %v467 = vld [vmem:[%s339 + $0xf8] sm:$0xff]
        %v468 = vld [vmem:[%s1] sm:$0x1]
        %v469 = vld [vmem:[#allocation5] sm:$0x1]
        %470 = vadd.xlane.f32.xlu0 %v436
        %v471 = vpop.xlane.xlu0 %470
        %472 = vadd.xlane.f32.xlu0 %v437
        %v473 = vpop.xlane.xlu0 %472
        %474 = vadd.xlane.f32.xlu0 %v438
        %v475 = vpop.xlane.xlu0 %474
        %476 = vadd.xlane.f32.xlu0 %v439
        %v477 = vpop.xlane.xlu0 %476
        %478 = vadd.xlane.f32.xlu0 %v440
        %v479 = vpop.xlane.xlu0 %478
        %480 = vadd.xlane.f32.xlu0 %v441
        %v481 = vpop.xlane.xlu0 %480
        %482 = vadd.xlane.f32.xlu0 %v442
        %v483 = vpop.xlane.xlu0 %482
        %484 = vadd.xlane.f32.xlu0 %v443
        %v485 = vpop.xlane.xlu0 %484
        %486 = vadd.xlane.f32.xlu0 %v444
        %v487 = vpop.xlane.xlu0 %486
        %488 = vadd.xlane.f32.xlu0 %v445
        %v489 = vpop.xlane.xlu0 %488
        %490 = vadd.xlane.f32.xlu0 %v446
        %v491 = vpop.xlane.xlu0 %490
        %492 = vadd.xlane.f32.xlu0 %v447
        %v493 = vpop.xlane.xlu0 %492
        %494 = vadd.xlane.f32.xlu0 %v448
        %v495 = vpop.xlane.xlu0 %494
        %496 = vadd.xlane.f32.xlu0 %v449
        %v497 = vpop.xlane.xlu0 %496
        %498 = vadd.xlane.f32.xlu0 %v450
        %v499 = vpop.xlane.xlu0 %498
        %500 = vadd.xlane.f32.xlu0 %v451
        %v501 = vpop.xlane.xlu0 %500
        %502 = vadd.xlane.f32.xlu0 %v452
        %v503 = vpop.xlane.xlu0 %502
        %504 = vadd.xlane.f32.xlu0 %v453
        %v505 = vpop.xlane.xlu0 %504
        %506 = vadd.xlane.f32.xlu0 %v454
        %v507 = vpop.xlane.xlu0 %506
        %508 = vadd.xlane.f32.xlu0 %v455
        %v509 = vpop.xlane.xlu0 %508
        %510 = vadd.xlane.f32.xlu0 %v456
        %v511 = vpop.xlane.xlu0 %510
        %512 = vadd.xlane.f32.xlu0 %v457
        %v513 = vpop.xlane.xlu0 %512
        %514 = vadd.xlane.f32.xlu0 %v458
        %v515 = vpop.xlane.xlu0 %514
        %516 = vadd.xlane.f32.xlu0 %v459
        %v517 = vpop.xlane.xlu0 %516
        %518 = vadd.xlane.f32.xlu0 %v460
        %v519 = vpop.xlane.xlu0 %518
        %520 = vadd.xlane.f32.xlu0 %v461
        %v521 = vpop.xlane.xlu0 %520
        %522 = vadd.xlane.f32.xlu0 %v462
        %v523 = vpop.xlane.xlu0 %522
        %524 = vadd.xlane.f32.xlu0 %v463
        %v525 = vpop.xlane.xlu0 %524
        %526 = vadd.xlane.f32.xlu0 %v464
        %v527 = vpop.xlane.xlu0 %526
        %528 = vadd.xlane.f32.xlu0 %v465
        %v529 = vpop.xlane.xlu0 %528
        %530 = vadd.xlane.f32.xlu0 %v466
        %v531 = vpop.xlane.xlu0 %530
        %532 = vadd.xlane.f32.xlu0 %v467
        %v533 = vpop.xlane.xlu0 %532
        %v534 = vrcp.pop 128.0
        %v535 = vmul.f32 %v471, %v534
        %v536 = vmul.f32 %v473, %v534
        %v537 = vmul.f32 %v475, %v534
        %v538 = vmul.f32 %v477, %v534
        %v539 = vmul.f32 %v479, %v534
        %v540 = vmul.f32 %v481, %v534
        %v541 = vmul.f32 %v483, %v534
        %v542 = vmul.f32 %v485, %v534
        %v543 = vmul.f32 %v487, %v534
        %v544 = vmul.f32 %v489, %v534
        %v545 = vmul.f32 %v491, %v534
        %v546 = vmul.f32 %v493, %v534
        %v547 = vmul.f32 %v495, %v534
        %v548 = vmul.f32 %v497, %v534
        %v549 = vmul.f32 %v499, %v534
        %v550 = vmul.f32 %v501, %v534
        %v551 = vmul.f32 %v503, %v534
        %v552 = vmul.f32 %v505, %v534
        %v553 = vmul.f32 %v507, %v534
        %v554 = vmul.f32 %v509, %v534
        %v555 = vmul.f32 %v511, %v534
        %v556 = vmul.f32 %v513, %v534
        %v557 = vmul.f32 %v515, %v534
        %v558 = vmul.f32 %v517, %v534
        %v559 = vmul.f32 %v519, %v534
        %v560 = vmul.f32 %v521, %v534
        %v561 = vmul.f32 %v523, %v534
        %v562 = vmul.f32 %v525, %v534
        %v563 = vmul.f32 %v527, %v534
        %v564 = vmul.f32 %v529, %v534
        %v565 = vmul.f32 %v531, %v534
        %v566 = vmul.f32 %v533, %v534
        %v567 = vsub.f32 %v436, %v535
        %v568 = vsub.f32 %v437, %v536
        %v569 = vsub.f32 %v438, %v537
        %v570 = vsub.f32 %v439, %v538
        %v571 = vsub.f32 %v440, %v539
        %v572 = vsub.f32 %v441, %v540
        %v573 = vsub.f32 %v442, %v541
        %v574 = vsub.f32 %v443, %v542
        %v575 = vsub.f32 %v444, %v543
        %v576 = vsub.f32 %v445, %v544
        %v577 = vsub.f32 %v446, %v545
        %v578 = vsub.f32 %v447, %v546
        %v579 = vsub.f32 %v448, %v547
        %v580 = vsub.f32 %v449, %v548
        %v581 = vsub.f32 %v450, %v549
        %v582 = vsub.f32 %v451, %v550
        %v583 = vsub.f32 %v452, %v551
        %v584 = vsub.f32 %v453, %v552
        %v585 = vsub.f32 %v454, %v553
        %v586 = vsub.f32 %v455, %v554
        %v587 = vsub.f32 %v456, %v555
        %v588 = vsub.f32 %v457, %v556
        %v589 = vsub.f32 %v458, %v557
        %v590 = vsub.f32 %v459, %v558
        %v591 = vsub.f32 %v460, %v559
        %v592 = vsub.f32 %v461, %v560
        %v593 = vsub.f32 %v462, %v561
        %v594 = vsub.f32 %v463, %v562
        %v595 = vsub.f32 %v464, %v563
        %v596 = vsub.f32 %v465, %v564
        %v597 = vsub.f32 %v466, %v565
        %v598 = vsub.f32 %v467, %v566
        %v599 = vmul.f32 %v567, %v567
        %v600 = vmul.f32 %v568, %v568
        %v601 = vmul.f32 %v569, %v569
        %v602 = vmul.f32 %v570, %v570
        %v603 = vmul.f32 %v571, %v571
        %v604 = vmul.f32 %v572, %v572
        %v605 = vmul.f32 %v573, %v573
        %v606 = vmul.f32 %v574, %v574
        %v607 = vmul.f32 %v575, %v575
        %v608 = vmul.f32 %v576, %v576
        %v609 = vmul.f32 %v577, %v577
        %v610 = vmul.f32 %v578, %v578
        %v611 = vmul.f32 %v579, %v579
        %v612 = vmul.f32 %v580, %v580
        %v613 = vmul.f32 %v581, %v581
        %v614 = vmul.f32 %v582, %v582
        %v615 = vmul.f32 %v583, %v583
        %v616 = vmul.f32 %v584, %v584
        %v617 = vmul.f32 %v585, %v585
        %v618 = vmul.f32 %v586, %v586
        %v619 = vmul.f32 %v587, %v587
        %v620 = vmul.f32 %v588, %v588
        %v621 = vmul.f32 %v589, %v589
        %v622 = vmul.f32 %v590, %v590
        %v623 = vmul.f32 %v591, %v591
        %v624 = vmul.f32 %v592, %v592
        %v625 = vmul.f32 %v593, %v593
        %v626 = vmul.f32 %v594, %v594
        %v627 = vmul.f32 %v595, %v595
        %v628 = vmul.f32 %v596, %v596
        %v629 = vmul.f32 %v597, %v597
        %v630 = vmul.f32 %v598, %v598
        %631 = vadd.xlane.f32.xlu0 %v599
        %v632 = vpop.xlane.xlu0 %631
        %633 = vadd.xlane.f32.xlu0 %v600
        %v634 = vpop.xlane.xlu0 %633
        %635 = vadd.xlane.f32.xlu0 %v601
        %v636 = vpop.xlane.xlu0 %635
        %637 = vadd.xlane.f32.xlu0 %v602
        %v638 = vpop.xlane.xlu0 %637
        %639 = vadd.xlane.f32.xlu0 %v603
        %v640 = vpop.xlane.xlu0 %639
        %641 = vadd.xlane.f32.xlu0 %v604
        %v642 = vpop.xlane.xlu0 %641
        %643 = vadd.xlane.f32.xlu0 %v605
        %v644 = vpop.xlane.xlu0 %643
        %645 = vadd.xlane.f32.xlu0 %v606
        %v646 = vpop.xlane.xlu0 %645
        %647 = vadd.xlane.f32.xlu0 %v607
        %v648 = vpop.xlane.xlu0 %647
        %649 = vadd.xlane.f32.xlu0 %v608
        %v650 = vpop.xlane.xlu0 %649
        %651 = vadd.xlane.f32.xlu0 %v609
        %v652 = vpop.xlane.xlu0 %651
        %653 = vadd.xlane.f32.xlu0 %v610
        %v654 = vpop.xlane.xlu0 %653
        %655 = vadd.xlane.f32.xlu0 %v611
        %v656 = vpop.xlane.xlu0 %655
        %657 = vadd.xlane.f32.xlu0 %v612
        %v658 = vpop.xlane.xlu0 %657
        %659 = vadd.xlane.f32.xlu0 %v613
        %v660 = vpop.xlane.xlu0 %659
        %661 = vadd.xlane.f32.xlu0 %v614
        %v662 = vpop.xlane.xlu0 %661
        %663 = vadd.xlane.f32.xlu0 %v615
        %v664 = vpop.xlane.xlu0 %663
        %665 = vadd.xlane.f32.xlu0 %v616
        %v666 = vpop.xlane.xlu0 %665
        %667 = vadd.xlane.f32.xlu0 %v617
        %v668 = vpop.xlane.xlu0 %667
        %669 = vadd.xlane.f32.xlu0 %v618
        %v670 = vpop.xlane.xlu0 %669
        %671 = vadd.xlane.f32.xlu0 %v619
        %v672 = vpop.xlane.xlu0 %671
        %673 = vadd.xlane.f32.xlu0 %v620
        %v674 = vpop.xlane.xlu0 %673
        %675 = vadd.xlane.f32.xlu0 %v621
        %v676 = vpop.xlane.xlu0 %675
        %677 = vadd.xlane.f32.xlu0 %v622
        %v678 = vpop.xlane.xlu0 %677
        %679 = vadd.xlane.f32.xlu0 %v623
        %v680 = vpop.xlane.xlu0 %679
        %681 = vadd.xlane.f32.xlu0 %v624
        %v682 = vpop.xlane.xlu0 %681
        %683 = vadd.xlane.f32.xlu0 %v625
        %v684 = vpop.xlane.xlu0 %683
        %685 = vadd.xlane.f32.xlu0 %v626
        %v686 = vpop.xlane.xlu0 %685
        %687 = vadd.xlane.f32.xlu0 %v627
        %v688 = vpop.xlane.xlu0 %687
        %689 = vadd.xlane.f32.xlu0 %v628
        %v690 = vpop.xlane.xlu0 %689
        %691 = vadd.xlane.f32.xlu0 %v629
        %v692 = vpop.xlane.xlu0 %691
        %693 = vadd.xlane.f32.xlu0 %v630
        %v694 = vpop.xlane.xlu0 %693
        %v695 = vmul.f32 %v632, %v534
        %v696 = vmul.f32 %v634, %v534
        %v697 = vmul.f32 %v636, %v534
        %v698 = vmul.f32 %v638, %v534
        %v699 = vmul.f32 %v640, %v534
        %v700 = vmul.f32 %v642, %v534
        %v701 = vmul.f32 %v644, %v534
        %v702 = vmul.f32 %v646, %v534
        %v703 = vmul.f32 %v648, %v534
        %v704 = vmul.f32 %v650, %v534
        %v705 = vmul.f32 %v652, %v534
        %v706 = vmul.f32 %v654, %v534
        %v707 = vmul.f32 %v656, %v534
        %v708 = vmul.f32 %v658, %v534
        %v709 = vmul.f32 %v660, %v534
        %v710 = vmul.f32 %v662, %v534
        %v711 = vmul.f32 %v664, %v534
        %v712 = vmul.f32 %v666, %v534
        %v713 = vmul.f32 %v668, %v534
        %v714 = vmul.f32 %v670, %v534
        %v715 = vmul.f32 %v672, %v534
        %v716 = vmul.f32 %v674, %v534
        %v717 = vmul.f32 %v676, %v534
        %v718 = vmul.f32 %v678, %v534
        %v719 = vmul.f32 %v680, %v534
        %v720 = vmul.f32 %v682, %v534
        %v721 = vmul.f32 %v684, %v534
        %v722 = vmul.f32 %v686, %v534
        %v723 = vmul.f32 %v688, %v534
        %v724 = vmul.f32 %v690, %v534
        %v725 = vmul.f32 %v692, %v534
        %v726 = vmul.f32 %v694, %v534
        %v727 = vadd.f32 %v695, 1e-05
        %v728 = vadd.f32 %v696, 1e-05
        %v729 = vadd.f32 %v697, 1e-05
        %v730 = vadd.f32 %v698, 1e-05
        %v731 = vadd.f32 %v699, 1e-05
        %v732 = vadd.f32 %v700, 1e-05
        %v733 = vadd.f32 %v701, 1e-05
        %v734 = vadd.f32 %v702, 1e-05
        %v735 = vadd.f32 %v703, 1e-05
        %v736 = vadd.f32 %v704, 1e-05
        %v737 = vadd.f32 %v705, 1e-05
        %v738 = vadd.f32 %v706, 1e-05
        %v739 = vadd.f32 %v707, 1e-05
        %v740 = vadd.f32 %v708, 1e-05
        %v741 = vadd.f32 %v709, 1e-05
        %v742 = vadd.f32 %v710, 1e-05
        %v743 = vadd.f32 %v711, 1e-05
        %v744 = vadd.f32 %v712, 1e-05
        %v745 = vadd.f32 %v713, 1e-05
        %v746 = vadd.f32 %v714, 1e-05
        %v747 = vadd.f32 %v715, 1e-05
        %v748 = vadd.f32 %v716, 1e-05
        %v749 = vadd.f32 %v717, 1e-05
        %v750 = vadd.f32 %v718, 1e-05
        %v751 = vadd.f32 %v719, 1e-05
        %v752 = vadd.f32 %v720, 1e-05
        %v753 = vadd.f32 %v721, 1e-05
        %v754 = vadd.f32 %v722, 1e-05
        %v755 = vadd.f32 %v723, 1e-05
        %v756 = vadd.f32 %v724, 1e-05
        %v757 = vadd.f32 %v725, 1e-05
        %v758 = vadd.f32 %v726, 1e-05
        %v759 = vrsqrt.pop %v727
        %v760 = vrsqrt.pop %v728
        %v761 = vrsqrt.pop %v729
        %v762 = vrsqrt.pop %v730
        %v763 = vrsqrt.pop %v731
        %v764 = vrsqrt.pop %v732
        %v765 = vrsqrt.pop %v733
        %v766 = vrsqrt.pop %v734
        %v767 = vrsqrt.pop %v735
        %v768 = vrsqrt.pop %v736
        %v769 = vrsqrt.pop %v737
        %v770 = vrsqrt.pop %v738
        %v771 = vrsqrt.pop %v739
        %v772 = vrsqrt.pop %v740
        %v773 = vrsqrt.pop %v741
        %v774 = vrsqrt.pop %v742
        %v775 = vrsqrt.pop %v743
        %v776 = vrsqrt.pop %v744
        %v777 = vrsqrt.pop %v745
        %v778 = vrsqrt.pop %v746
        %v779 = vrsqrt.pop %v747
        %v780 = vrsqrt.pop %v748
        %v781 = vrsqrt.pop %v749
        %v782 = vrsqrt.pop %v750
        %v783 = vrsqrt.pop %v751
        %v784 = vrsqrt.pop %v752
        %v785 = vrsqrt.pop %v753
        %v786 = vrsqrt.pop %v754
        %v787 = vrsqrt.pop %v755
        %v788 = vrsqrt.pop %v756
        %v789 = vrsqrt.pop %v757
        %v790 = vrsqrt.pop %v758
        %v791 = vmul.f32 %v567, %v759
        %v792 = vmul.f32 %v568, %v760
        %v793 = vmul.f32 %v569, %v761
        %v794 = vmul.f32 %v570, %v762
        %v795 = vmul.f32 %v571, %v763
        %v796 = vmul.f32 %v572, %v764
        %v797 = vmul.f32 %v573, %v765
        %v798 = vmul.f32 %v574, %v766
        %v799 = vmul.f32 %v575, %v767
        %v800 = vmul.f32 %v576, %v768
        %v801 = vmul.f32 %v577, %v769
        %v802 = vmul.f32 %v578, %v770
        %v803 = vmul.f32 %v579, %v771
        %v804 = vmul.f32 %v580, %v772
        %v805 = vmul.f32 %v581, %v773
        %v806 = vmul.f32 %v582, %v774
        %v807 = vmul.f32 %v583, %v775
        %v808 = vmul.f32 %v584, %v776
        %v809 = vmul.f32 %v585, %v777
        %v810 = vmul.f32 %v586, %v778
        %v811 = vmul.f32 %v587, %v779
        %v812 = vmul.f32 %v588, %v780
        %v813 = vmul.f32 %v589, %v781
        %v814 = vmul.f32 %v590, %v782
        %v815 = vmul.f32 %v591, %v783
        %v816 = vmul.f32 %v592, %v784
        %v817 = vmul.f32 %v593, %v785
        %v818 = vmul.f32 %v594, %v786
        %v819 = vmul.f32 %v595, %v787
        %v820 = vmul.f32 %v596, %v788
        %v821 = vmul.f32 %v597, %v789
        %v822 = vmul.f32 %v598, %v790
        %v824 = vlaneseq
        %v825 = vshrl.u32 %v824, 7
        %v826 = vsub.s32 0, %v825
        %v827 = vrot.slane %v468, %v826
        %v829 = vmul.f32 %v791, %v827
        %v830 = vmul.f32 %v792, %v827
        %v831 = vmul.f32 %v793, %v827
        %v832 = vmul.f32 %v794, %v827
        %v833 = vmul.f32 %v795, %v827
        %v834 = vmul.f32 %v796, %v827
        %v835 = vmul.f32 %v797, %v827
        %v836 = vmul.f32 %v798, %v827
        %v837 = vmul.f32 %v799, %v827
        %v838 = vmul.f32 %v800, %v827
        %v839 = vmul.f32 %v801, %v827
        %v840 = vmul.f32 %v802, %v827
        %v841 = vmul.f32 %v803, %v827
        %v842 = vmul.f32 %v804, %v827
        %v843 = vmul.f32 %v805, %v827
        %v844 = vmul.f32 %v806, %v827
        %v845 = vmul.f32 %v807, %v827
        %v846 = vmul.f32 %v808, %v827
        %v847 = vmul.f32 %v809, %v827
        %v848 = vmul.f32 %v810, %v827
        %v849 = vmul.f32 %v811, %v827
        %v850 = vmul.f32 %v812, %v827
        %v851 = vmul.f32 %v813, %v827
        %v852 = vmul.f32 %v814, %v827
        %v853 = vmul.f32 %v815, %v827
        %v854 = vmul.f32 %v816, %v827
        %v855 = vmul.f32 %v817, %v827
        %v856 = vmul.f32 %v818, %v827
        %v857 = vmul.f32 %v819, %v827
        %v858 = vmul.f32 %v820, %v827
        %v859 = vmul.f32 %v821, %v827
        %v860 = vmul.f32 %v822, %v827
        %v862 = vlaneseq
        %v863 = vshrl.u32 %v862, 7
        %v864 = vsub.s32 0, %v863
        %v865 = vrot.slane %v469, %v864
        %v867 = vadd.f32 %v829, %v865
        %v868 = vadd.f32 %v830, %v865
        %v869 = vadd.f32 %v831, %v865
        %v870 = vadd.f32 %v832, %v865
        %v871 = vadd.f32 %v833, %v865
        %v872 = vadd.f32 %v834, %v865
        %v873 = vadd.f32 %v835, %v865
        %v874 = vadd.f32 %v836, %v865
        %v875 = vadd.f32 %v837, %v865
        %v876 = vadd.f32 %v838, %v865
        %v877 = vadd.f32 %v839, %v865
        %v878 = vadd.f32 %v840, %v865
        %v879 = vadd.f32 %v841, %v865
        %v880 = vadd.f32 %v842, %v865
        %v881 = vadd.f32 %v843, %v865
        %v882 = vadd.f32 %v844, %v865
        %v883 = vadd.f32 %v845, %v865
        %v884 = vadd.f32 %v846, %v865
        %v885 = vadd.f32 %v847, %v865
        %v886 = vadd.f32 %v848, %v865
        %v887 = vadd.f32 %v849, %v865
        %v888 = vadd.f32 %v850, %v865
        %v889 = vadd.f32 %v851, %v865
        %v890 = vadd.f32 %v852, %v865
        %v891 = vadd.f32 %v853, %v865
        %v892 = vadd.f32 %v854, %v865
        %v893 = vadd.f32 %v855, %v865
        %v894 = vadd.f32 %v856, %v865
        %v895 = vadd.f32 %v857, %v865
        %v896 = vadd.f32 %v858, %v865
        %v897 = vadd.f32 %v859, %v865
        %v898 = vadd.f32 %v860, %v865
        %v899 = vpack.c.bf16 %v868, %v867
        %v900 = vpack.c.bf16 %v870, %v869
        %v901 = vpack.c.bf16 %v872, %v871
        %v902 = vpack.c.bf16 %v874, %v873
        %v903 = vpack.c.bf16 %v876, %v875
        %v904 = vpack.c.bf16 %v878, %v877
        %v905 = vpack.c.bf16 %v880, %v879
        %v906 = vpack.c.bf16 %v882, %v881
        %v907 = vpack.c.bf16 %v884, %v883
        %v908 = vpack.c.bf16 %v886, %v885
        %v909 = vpack.c.bf16 %v888, %v887
        %v910 = vpack.c.bf16 %v890, %v889
        %v911 = vpack.c.bf16 %v892, %v891
        %v912 = vpack.c.bf16 %v894, %v893
        %v913 = vpack.c.bf16 %v896, %v895
        %v914 = vpack.c.bf16 %v898, %v897
        %v915 = vld [vmem:[#allocation7] sm:$0xff]
        %v916 = vld [vmem:[#allocation7 + $0x8] sm:$0xf]
        %v917 = vld [vmem:[#allocation7 + $0xc] sm:$0xff]
        %v918 = vld [vmem:[#allocation7 + $0x14] sm:$0xf]
        %v919 = vld [vmem:[#allocation7 + $0x18] sm:$0xff]
        %v920 = vld [vmem:[#allocation7 + $0x20] sm:$0xf]
        %v921 = vld [vmem:[#allocation7 + $0x24] sm:$0xff]
        %v922 = vld [vmem:[#allocation7 + $0x2c] sm:$0xf]
        %v923 = vld [vmem:[#allocation7 + $0x30] sm:$0xff]
        %v924 = vld [vmem:[#allocation7 + $0x38] sm:$0xf]
        %v925 = vld [vmem:[#allocation7 + $0x3c] sm:$0xff]
        %v926 = vld [vmem:[#allocation7 + $0x44] sm:$0xf]
        %v927 = vld [vmem:[#allocation7 + $0x48] sm:$0xff]
        %v928 = vld [vmem:[#allocation7 + $0x50] sm:$0xf]
        %v929 = vld [vmem:[#allocation7 + $0x54] sm:$0xff]
        %v930 = vld [vmem:[#allocation7 + $0x5c] sm:$0xf]
        %v931 = vld [vmem:[#allocation7 + $0x60] sm:$0xff]
        %v932 = vld [vmem:[#allocation7 + $0x68] sm:$0xf]
        %v933 = vld [vmem:[#allocation7 + $0x6c] sm:$0xff]
        %v934 = vld [vmem:[#allocation7 + $0x74] sm:$0xf]
        %v935 = vld [vmem:[#allocation7 + $0x78] sm:$0xff]
        %v936 = vld [vmem:[#allocation7 + $0x80] sm:$0xf]
        %v937 = vld [vmem:[#allocation7 + $0x84] sm:$0xff]
        %v938 = vld [vmem:[#allocation7 + $0x8c] sm:$0xf]
        %v939 = vld [vmem:[#allocation7 + $0x90] sm:$0xff]
        %v940 = vld [vmem:[#allocation7 + $0x98] sm:$0xf]
        %v941 = vld [vmem:[#allocation7 + $0x9c] sm:$0xff]
        %v942 = vld [vmem:[#allocation7 + $0xa4] sm:$0xf]
        %v943 = vld [vmem:[#allocation7 + $0xa8] sm:$0xff]
        %v944 = vld [vmem:[#allocation7 + $0xb0] sm:$0xf]
        %v945 = vld [vmem:[#allocation7 + $0xb4] sm:$0xff]
        %v946 = vld [vmem:[#allocation7 + $0xbc] sm:$0xf]
        %v979 = vunpack.c.l.b16 %v915
        %v980 = vunpack.c.h.b16 %v915
        %v981 = vunpack.c.l.b16 %v916
        %v982 = vunpack.c.l.b16 %v917
        %v983 = vunpack.c.h.b16 %v917
        %v984 = vunpack.c.l.b16 %v918
        %v985 = vunpack.c.l.b16 %v919
        %v986 = vunpack.c.h.b16 %v919
        %v987 = vunpack.c.l.b16 %v920
        %v988 = vunpack.c.l.b16 %v921
        %v989 = vunpack.c.h.b16 %v921
        %v990 = vunpack.c.l.b16 %v922
        %v991 = vunpack.c.l.b16 %v923
        %v992 = vunpack.c.h.b16 %v923
        %v993 = vunpack.c.l.b16 %v924
        %v994 = vunpack.c.l.b16 %v925
        %v995 = vunpack.c.h.b16 %v925
        %v996 = vunpack.c.l.b16 %v926
        %v997 = vunpack.c.l.b16 %v927
        %v998 = vunpack.c.h.b16 %v927
        %v999 = vunpack.c.l.b16 %v928
        %v1000 = vunpack.c.l.b16 %v929
        %v1001 = vunpack.c.h.b16 %v929
        %v1002 = vunpack.c.l.b16 %v930
        %v1003 = vunpack.c.l.b16 %v931
        %v1004 = vunpack.c.h.b16 %v931
        %v1005 = vunpack.c.l.b16 %v932
        %v1006 = vunpack.c.l.b16 %v933
        %v1007 = vunpack.c.h.b16 %v933
        %v1008 = vunpack.c.l.b16 %v934
        %v1009 = vunpack.c.l.b16 %v935
        %v1010 = vunpack.c.h.b16 %v935
        %v1011 = vunpack.c.l.b16 %v936
        %v1012 = vunpack.c.l.b16 %v937
        %v1013 = vunpack.c.h.b16 %v937
        %v1014 = vunpack.c.l.b16 %v938
        %v1015 = vunpack.c.l.b16 %v939
        %v1016 = vunpack.c.h.b16 %v939
        %v1017 = vunpack.c.l.b16 %v940
        %v1018 = vunpack.c.l.b16 %v941
        %v1019 = vunpack.c.h.b16 %v941
        %v1020 = vunpack.c.l.b16 %v942
        %v1021 = vunpack.c.l.b16 %v943
        %v1022 = vunpack.c.h.b16 %v943
        %v1023 = vunpack.c.l.b16 %v944
        %v1024 = vunpack.c.l.b16 %v945
        %v1025 = vunpack.c.h.b16 %v945
        %v1026 = vunpack.c.l.b16 %v946
        %v1027 = vpack.c.b16 %v982, %v979
        %v1028 = vpack.c.b16 %v983, %v980
        %v1029 = vpack.c.b16 %v984, %v981
        %v1030 = vpack.c.b16 %v988, %v985
        %v1031 = vpack.c.b16 %v989, %v986
        %v1032 = vpack.c.b16 %v990, %v987
        %v1033 = vpack.c.b16 %v994, %v991
        %v1034 = vpack.c.b16 %v995, %v992
        %v1035 = vpack.c.b16 %v996, %v993
        %v1036 = vpack.c.b16 %v1000, %v997
        %v1037 = vpack.c.b16 %v1001, %v998
        %v1038 = vpack.c.b16 %v1002, %v999
        %v1039 = vpack.c.b16 %v1006, %v1003
        %v1040 = vpack.c.b16 %v1007, %v1004
        %v1041 = vpack.c.b16 %v1008, %v1005
        %v1042 = vpack.c.b16 %v1012, %v1009
        %v1043 = vpack.c.b16 %v1013, %v1010
        %v1044 = vpack.c.b16 %v1014, %v1011
        %v1045 = vpack.c.b16 %v1018, %v1015
        %v1046 = vpack.c.b16 %v1019, %v1016
        %v1047 = vpack.c.b16 %v1020, %v1017
        %v1048 = vpack.c.b16 %v1024, %v1021
        %v1049 = vpack.c.b16 %v1025, %v1022
        %v1050 = vpack.c.b16 %v1026, %v1023
        %1075 = vmatprep.subr.bf16.mxu0 %v1049
        %1076 = vmatpush1.bf16.msra.mxu0 %v1048
        %1077 = vmatprep.subr.bf16.mxu0 %v1046
        %1078 = vmatpush1.bf16.msra.mxu0 %v1045
        %1079 = vmatprep.subr.bf16.mxu0 %v1043
        %1080 = vmatpush1.bf16.msra.mxu0 %v1042
        %1081 = vmatprep.subr.bf16.mxu0 %v1040
        %1082 = vmatpush1.bf16.msra.mxu0 %v1039
        %1083 = vmatprep.subr.bf16.mxu0 %v1037
        %1084 = vmatpush1.bf16.msra.mxu0 %v1036
        %1085 = vmatprep.subr.bf16.mxu0 %v1034
        %1086 = vmatpush1.bf16.msra.mxu0 %v1033
        %1087 = vmatprep.subr.bf16.mxu0 %v1031
        %1088 = vmatpush1.bf16.msra.mxu0 %v1030
        %1089 = vmatprep.subr.bf16.mxu0 %v1028
        %1090 = vmatpush1.bf16.msra.mxu0 %v1027
        %1091 = vmatprep.subr.bf16.mxu0 0
        %1092 = vmatpush2.bf16.msra.mxu0 0
        %1093 = vmatprep.subr.bf16.mxu0 0
        %1094 = vmatpush2.bf16.msra.mxu0 0
        %1095 = vmatprep.subr.bf16.mxu0 0
        %1096 = vmatpush2.bf16.msra.mxu0 0
        %1097 = vmatprep.subr.bf16.mxu0 0
        %1098 = vmatpush2.bf16.msra.mxu0 0
        %1099 = vmatprep.subr.bf16.mxu0 0
        %1100 = vmatpush2.bf16.msra.mxu0 0
        %1101 = vmatprep.subr.bf16.mxu0 0
        %1102 = vmatpush2.bf16.msra.mxu0 0
        %1103 = vmatprep.subr.bf16.mxu0 0
        %1104 = vmatpush2.bf16.msra.mxu0 0
        %1105 = vmatprep.subr.bf16.mxu0 0
        %1106 = vmatpush2.bf16.msra.mxu0 0
        %1107 = vmatprep.mubr.bf16.mxu0 0
        %1108 = vmatmul.mubr.bf16.gmra.mxu0 %v899
        %v1109 = vpop.f32.mrf.mxu0
        %v1110 = vadd.f32 0.0, %v1109
        %v1111 = vpop.f32.mrf.mxu0
        %v1112 = vadd.f32 0.0, %v1111
        %v1113 = vpop.f32.mrf.mxu0
        %v1114 = vadd.f32 0.0, %v1113
        %v1115 = vpop.f32.mrf.mxu0
        %v1116 = vadd.f32 0.0, %v1115
        %1117 = vmatprep.mubr.bf16.mxu0 0
        %1118 = vmatmul.mubr.bf16.gmra.mxu0 %v900
        %v1119 = vpop.f32.mrf.mxu0
        %v1120 = vadd.f32 0.0, %v1119
        %v1121 = vpop.f32.mrf.mxu0
        %v1122 = vadd.f32 0.0, %v1121
        %v1123 = vpop.f32.mrf.mxu0
        %v1124 = vadd.f32 0.0, %v1123
        %v1125 = vpop.f32.mrf.mxu0
        %v1126 = vadd.f32 0.0, %v1125
        %1127 = vmatprep.mubr.bf16.mxu0 0
        %1128 = vmatmul.mubr.bf16.gmra.mxu0 %v901
        %v1129 = vpop.f32.mrf.mxu0
        %v1130 = vadd.f32 0.0, %v1129
        %v1131 = vpop.f32.mrf.mxu0
        %v1132 = vadd.f32 0.0, %v1131
        %v1133 = vpop.f32.mrf.mxu0
        %v1134 = vadd.f32 0.0, %v1133
        %v1135 = vpop.f32.mrf.mxu0
        %v1136 = vadd.f32 0.0, %v1135
        %1137 = vmatprep.mubr.bf16.mxu0 0
        %1138 = vmatmul.mubr.bf16.gmra.mxu0 %v902
        %v1139 = vpop.f32.mrf.mxu0
        %v1140 = vadd.f32 0.0, %v1139
        %v1141 = vpop.f32.mrf.mxu0
        %v1142 = vadd.f32 0.0, %v1141
        %v1143 = vpop.f32.mrf.mxu0
        %v1144 = vadd.f32 0.0, %v1143
        %v1145 = vpop.f32.mrf.mxu0
        %v1146 = vadd.f32 0.0, %v1145
        %1147 = vmatprep.mubr.bf16.mxu0 0
        %1148 = vmatmul.mubr.bf16.gmra.mxu0 %v903
        %v1149 = vpop.f32.mrf.mxu0
        %v1150 = vadd.f32 0.0, %v1149
        %v1151 = vpop.f32.mrf.mxu0
        %v1152 = vadd.f32 0.0, %v1151
        %v1153 = vpop.f32.mrf.mxu0
        %v1154 = vadd.f32 0.0, %v1153
        %v1155 = vpop.f32.mrf.mxu0
        %v1156 = vadd.f32 0.0, %v1155
        %1157 = vmatprep.mubr.bf16.mxu0 0
        %1158 = vmatmul.mubr.bf16.gmra.mxu0 %v904
        %v1159 = vpop.f32.mrf.mxu0
        %v1160 = vadd.f32 0.0, %v1159
        %v1161 = vpop.f32.mrf.mxu0
        %v1162 = vadd.f32 0.0, %v1161
        %v1163 = vpop.f32.mrf.mxu0
        %v1164 = vadd.f32 0.0, %v1163
        %v1165 = vpop.f32.mrf.mxu0
        %v1166 = vadd.f32 0.0, %v1165
        %1167 = vmatprep.mubr.bf16.mxu0 0
        %1168 = vmatmul.mubr.bf16.gmra.mxu0 %v905
        %v1169 = vpop.f32.mrf.mxu0
        %v1170 = vadd.f32 0.0, %v1169
        %v1171 = vpop.f32.mrf.mxu0
        %v1172 = vadd.f32 0.0, %v1171
        %v1173 = vpop.f32.mrf.mxu0
        %v1174 = vadd.f32 0.0, %v1173
        %v1175 = vpop.f32.mrf.mxu0
        %v1176 = vadd.f32 0.0, %v1175
        %1177 = vmatprep.mubr.bf16.mxu0 0
        %1178 = vmatmul.mubr.bf16.gmra.mxu0 %v906
        %v1179 = vpop.f32.mrf.mxu0
        %v1180 = vadd.f32 0.0, %v1179
        %v1181 = vpop.f32.mrf.mxu0
        %v1182 = vadd.f32 0.0, %v1181
        %v1183 = vpop.f32.mrf.mxu0
        %v1184 = vadd.f32 0.0, %v1183
        %v1185 = vpop.f32.mrf.mxu0
        %v1186 = vadd.f32 0.0, %v1185
        %1187 = vmatprep.mubr.bf16.mxu0 0
        %1188 = vmatmul.mubr.bf16.gmra.mxu0 %v907
        %v1189 = vpop.f32.mrf.mxu0
        %v1190 = vadd.f32 0.0, %v1189
        %v1191 = vpop.f32.mrf.mxu0
        %v1192 = vadd.f32 0.0, %v1191
        %v1193 = vpop.f32.mrf.mxu0
        %v1194 = vadd.f32 0.0, %v1193
        %v1195 = vpop.f32.mrf.mxu0
        %v1196 = vadd.f32 0.0, %v1195
        %1197 = vmatprep.mubr.bf16.mxu0 0
        %1198 = vmatmul.mubr.bf16.gmra.mxu0 %v908
        %v1199 = vpop.f32.mrf.mxu0
        %v1200 = vadd.f32 0.0, %v1199
        %v1201 = vpop.f32.mrf.mxu0
        %v1202 = vadd.f32 0.0, %v1201
        %v1203 = vpop.f32.mrf.mxu0
        %v1204 = vadd.f32 0.0, %v1203
        %v1205 = vpop.f32.mrf.mxu0
        %v1206 = vadd.f32 0.0, %v1205
        %1207 = vmatprep.mubr.bf16.mxu0 0
        %1208 = vmatmul.mubr.bf16.gmra.mxu0 %v909
        %v1209 = vpop.f32.mrf.mxu0
        %v1210 = vadd.f32 0.0, %v1209
        %v1211 = vpop.f32.mrf.mxu0
        %v1212 = vadd.f32 0.0, %v1211
        %v1213 = vpop.f32.mrf.mxu0
        %v1214 = vadd.f32 0.0, %v1213
        %v1215 = vpop.f32.mrf.mxu0
        %v1216 = vadd.f32 0.0, %v1215
        %1217 = vmatprep.mubr.bf16.mxu0 0
        %1218 = vmatmul.mubr.bf16.gmra.mxu0 %v910
        %v1219 = vpop.f32.mrf.mxu0
        %v1220 = vadd.f32 0.0, %v1219
        %v1221 = vpop.f32.mrf.mxu0
        %v1222 = vadd.f32 0.0, %v1221
        %v1223 = vpop.f32.mrf.mxu0
        %v1224 = vadd.f32 0.0, %v1223
        %v1225 = vpop.f32.mrf.mxu0
        %v1226 = vadd.f32 0.0, %v1225
        %1227 = vmatprep.mubr.bf16.mxu0 0
        %1228 = vmatmul.mubr.bf16.gmra.mxu0 %v911
        %v1229 = vpop.f32.mrf.mxu0
        %v1230 = vadd.f32 0.0, %v1229
        %v1231 = vpop.f32.mrf.mxu0
        %v1232 = vadd.f32 0.0, %v1231
        %v1233 = vpop.f32.mrf.mxu0
        %v1234 = vadd.f32 0.0, %v1233
        %v1235 = vpop.f32.mrf.mxu0
        %v1236 = vadd.f32 0.0, %v1235
        %1237 = vmatprep.mubr.bf16.mxu0 0
        %1238 = vmatmul.mubr.bf16.gmra.mxu0 %v912
        %v1239 = vpop.f32.mrf.mxu0
        %v1240 = vadd.f32 0.0, %v1239
        %v1241 = vpop.f32.mrf.mxu0
        %v1242 = vadd.f32 0.0, %v1241
        %v1243 = vpop.f32.mrf.mxu0
        %v1244 = vadd.f32 0.0, %v1243
        %v1245 = vpop.f32.mrf.mxu0
        %v1246 = vadd.f32 0.0, %v1245
        %1247 = vmatprep.mubr.bf16.mxu0 0
        %1248 = vmatmul.mubr.bf16.gmra.mxu0 %v913
        %v1249 = vpop.f32.mrf.mxu0
        %v1250 = vadd.f32 0.0, %v1249
        %v1251 = vpop.f32.mrf.mxu0
        %v1252 = vadd.f32 0.0, %v1251
        %v1253 = vpop.f32.mrf.mxu0
        %v1254 = vadd.f32 0.0, %v1253
        %v1255 = vpop.f32.mrf.mxu0
        %v1256 = vadd.f32 0.0, %v1255
        %1257 = vmatprep.mubr.bf16.mxu0 0
        %1258 = vmatmul.mubr.bf16.gmra.mxu0 %v914
        %v1259 = vpop.f32.mrf.mxu0
        %v1260 = vadd.f32 0.0, %v1259
        %v1261 = vpop.f32.mrf.mxu0
        %v1262 = vadd.f32 0.0, %v1261
        %v1263 = vpop.f32.mrf.mxu0
        %v1264 = vadd.f32 0.0, %v1263
        %v1265 = vpop.f32.mrf.mxu0
        %v1266 = vadd.f32 0.0, %v1265
        %1267 = vdwg.mxu0
        %1268 = vmatprep.subr.bf16.mxu0 0
        %1269 = vmatpush1.bf16.msra.mxu0 %v1050
        %1270 = vmatprep.subr.bf16.mxu0 0
        %1271 = vmatpush1.bf16.msra.mxu0 %v1047
        %1272 = vmatprep.subr.bf16.mxu0 0
        %1273 = vmatpush1.bf16.msra.mxu0 %v1044
        %1274 = vmatprep.subr.bf16.mxu0 0
        %1275 = vmatpush1.bf16.msra.mxu0 %v1041
        %1276 = vmatprep.subr.bf16.mxu0 0
        %1277 = vmatpush1.bf16.msra.mxu0 %v1038
        %1278 = vmatprep.subr.bf16.mxu0 0
        %1279 = vmatpush1.bf16.msra.mxu0 %v1035
        %1280 = vmatprep.subr.bf16.mxu0 0
        %1281 = vmatpush1.bf16.msra.mxu0 %v1032
        %1282 = vmatprep.subr.bf16.mxu0 0
        %1283 = vmatpush1.bf16.msra.mxu0 %v1029
        %1284 = vmatprep.subr.bf16.mxu0 0
        %1285 = vmatpush2.bf16.msra.mxu0 0
        %1286 = vmatprep.subr.bf16.mxu0 0
        %1287 = vmatpush2.bf16.msra.mxu0 0
        %1288 = vmatprep.subr.bf16.mxu0 0
        %1289 = vmatpush2.bf16.msra.mxu0 0
        %1290 = vmatprep.subr.bf16.mxu0 0
        %1291 = vmatpush2.bf16.msra.mxu0 0
        %1292 = vmatprep.subr.bf16.mxu0 0
        %1293 = vmatpush2.bf16.msra.mxu0 0
        %1294 = vmatprep.subr.bf16.mxu0 0
        %1295 = vmatpush2.bf16.msra.mxu0 0
        %1296 = vmatprep.subr.bf16.mxu0 0
        %1297 = vmatpush2.bf16.msra.mxu0 0
        %1298 = vmatprep.subr.bf16.mxu0 0
        %1299 = vmatpush2.bf16.msra.mxu0 0
        %1300 = vmatprep.mubr.bf16.mxu0 0
        %1301 = vmatmul.mubr.bf16.gmra.mxu0 %v899
        %v1302 = vpop.f32.mrf.mxu0
        %v1303 = vadd.f32 0.0, %v1302
        %v1304 = vpop.f32.mrf.mxu0
        %v1305 = vpop.f32.mrf.mxu0
        %v1306 = vadd.f32 0.0, %v1305
        %v1307 = vpop.f32.mrf.mxu0
        %1308 = vmatprep.mubr.bf16.mxu0 0
        %1309 = vmatmul.mubr.bf16.gmra.mxu0 %v900
        %v1310 = vpop.f32.mrf.mxu0
        %v1311 = vadd.f32 0.0, %v1310
        %v1312 = vpop.f32.mrf.mxu0
        %v1313 = vpop.f32.mrf.mxu0
        %v1314 = vadd.f32 0.0, %v1313
        %v1315 = vpop.f32.mrf.mxu0
        %1316 = vmatprep.mubr.bf16.mxu0 0
        %1317 = vmatmul.mubr.bf16.gmra.mxu0 %v901
        %v1318 = vpop.f32.mrf.mxu0
        %v1319 = vadd.f32 0.0, %v1318
        %v1320 = vpop.f32.mrf.mxu0
        %v1321 = vpop.f32.mrf.mxu0
        %v1322 = vadd.f32 0.0, %v1321
        %v1323 = vpop.f32.mrf.mxu0
        %1324 = vmatprep.mubr.bf16.mxu0 0
        %1325 = vmatmul.mubr.bf16.gmra.mxu0 %v902
        %v1326 = vpop.f32.mrf.mxu0
        %v1327 = vadd.f32 0.0, %v1326
        %v1328 = vpop.f32.mrf.mxu0
        %v1329 = vpop.f32.mrf.mxu0
        %v1330 = vadd.f32 0.0, %v1329
        %v1331 = vpop.f32.mrf.mxu0
        %1332 = vmatprep.mubr.bf16.mxu0 0
        %1333 = vmatmul.mubr.bf16.gmra.mxu0 %v903
        %v1334 = vpop.f32.mrf.mxu0
        %v1335 = vadd.f32 0.0, %v1334
        %v1336 = vpop.f32.mrf.mxu0
        %v1337 = vpop.f32.mrf.mxu0
        %v1338 = vadd.f32 0.0, %v1337
        %v1339 = vpop.f32.mrf.mxu0
        %1340 = vmatprep.mubr.bf16.mxu0 0
        %1341 = vmatmul.mubr.bf16.gmra.mxu0 %v904
        %v1342 = vpop.f32.mrf.mxu0
        %v1343 = vadd.f32 0.0, %v1342
        %v1344 = vpop.f32.mrf.mxu0
        %v1345 = vpop.f32.mrf.mxu0
        %v1346 = vadd.f32 0.0, %v1345
        %v1347 = vpop.f32.mrf.mxu0
        %1348 = vmatprep.mubr.bf16.mxu0 0
        %1349 = vmatmul.mubr.bf16.gmra.mxu0 %v905
        %v1350 = vpop.f32.mrf.mxu0
        %v1351 = vadd.f32 0.0, %v1350
        %v1352 = vpop.f32.mrf.mxu0
        %v1353 = vpop.f32.mrf.mxu0
        %v1354 = vadd.f32 0.0, %v1353
        %v1355 = vpop.f32.mrf.mxu0
        %1356 = vmatprep.mubr.bf16.mxu0 0
        %1357 = vmatmul.mubr.bf16.gmra.mxu0 %v906
        %v1358 = vpop.f32.mrf.mxu0
        %v1359 = vadd.f32 0.0, %v1358
        %v1360 = vpop.f32.mrf.mxu0
        %v1361 = vpop.f32.mrf.mxu0
        %v1362 = vadd.f32 0.0, %v1361
        %v1363 = vpop.f32.mrf.mxu0
        %1364 = vmatprep.mubr.bf16.mxu0 0
        %1365 = vmatmul.mubr.bf16.gmra.mxu0 %v907
        %v1366 = vpop.f32.mrf.mxu0
        %v1367 = vadd.f32 0.0, %v1366
        %v1368 = vpop.f32.mrf.mxu0
        %v1369 = vpop.f32.mrf.mxu0
        %v1370 = vadd.f32 0.0, %v1369
        %v1371 = vpop.f32.mrf.mxu0
        %1372 = vmatprep.mubr.bf16.mxu0 0
        %1373 = vmatmul.mubr.bf16.gmra.mxu0 %v908
        %v1374 = vpop.f32.mrf.mxu0
        %v1375 = vadd.f32 0.0, %v1374
        %v1376 = vpop.f32.mrf.mxu0
        %v1377 = vpop.f32.mrf.mxu0
        %v1378 = vadd.f32 0.0, %v1377
        %v1379 = vpop.f32.mrf.mxu0
        %1380 = vmatprep.mubr.bf16.mxu0 0
        %1381 = vmatmul.mubr.bf16.gmra.mxu0 %v909
        %v1382 = vpop.f32.mrf.mxu0
        %v1383 = vadd.f32 0.0, %v1382
        %v1384 = vpop.f32.mrf.mxu0
        %v1385 = vpop.f32.mrf.mxu0
        %v1386 = vadd.f32 0.0, %v1385
        %v1387 = vpop.f32.mrf.mxu0
        %1388 = vmatprep.mubr.bf16.mxu0 0
        %1389 = vmatmul.mubr.bf16.gmra.mxu0 %v910
        %v1390 = vpop.f32.mrf.mxu0
        %v1391 = vadd.f32 0.0, %v1390
        %v1392 = vpop.f32.mrf.mxu0
        %v1393 = vpop.f32.mrf.mxu0
        %v1394 = vadd.f32 0.0, %v1393
        %v1395 = vpop.f32.mrf.mxu0
        %1396 = vmatprep.mubr.bf16.mxu0 0
        %1397 = vmatmul.mubr.bf16.gmra.mxu0 %v911
        %v1398 = vpop.f32.mrf.mxu0
        %v1399 = vadd.f32 0.0, %v1398
        %v1400 = vpop.f32.mrf.mxu0
        %v1401 = vpop.f32.mrf.mxu0
        %v1402 = vadd.f32 0.0, %v1401
        %v1403 = vpop.f32.mrf.mxu0
        %1404 = vmatprep.mubr.bf16.mxu0 0
        %1405 = vmatmul.mubr.bf16.gmra.mxu0 %v912
        %v1406 = vpop.f32.mrf.mxu0
        %v1407 = vadd.f32 0.0, %v1406
        %v1408 = vpop.f32.mrf.mxu0
        %v1409 = vpop.f32.mrf.mxu0
        %v1410 = vadd.f32 0.0, %v1409
        %v1411 = vpop.f32.mrf.mxu0
        %1412 = vmatprep.mubr.bf16.mxu0 0
        %1413 = vmatmul.mubr.bf16.gmra.mxu0 %v913
        %v1414 = vpop.f32.mrf.mxu0
        %v1415 = vadd.f32 0.0, %v1414
        %v1416 = vpop.f32.mrf.mxu0
        %v1417 = vpop.f32.mrf.mxu0
        %v1418 = vadd.f32 0.0, %v1417
        %v1419 = vpop.f32.mrf.mxu0
        %1420 = vmatprep.mubr.bf16.mxu0 0
        %1421 = vmatmul.mubr.bf16.gmra.mxu0 %v914
        %v1422 = vpop.f32.mrf.mxu0
        %v1423 = vadd.f32 0.0, %v1422
        %v1424 = vpop.f32.mrf.mxu0
        %v1425 = vpop.f32.mrf.mxu0
        %v1426 = vadd.f32 0.0, %v1425
        %v1427 = vpop.f32.mrf.mxu0
        %1428 = vdwg.mxu0
        %v1429 = vld [vmem:[%s4] sm:$0x3]
        %v1431 = vlaneseq
        %v1432 = vshrl.u32 %v1431, 7
        %v1433 = vsub.s32 0, %v1432
        %v1434 = vrot.slane %v1429, %v1433
        %v1435 = vlaneseq
        %v1436 = vshrl.u32 %v1435, 7
        %v1437 = vsub.s32 1, %v1436
        %v1438 = vrot.slane %v1429, %v1437
        %v1441 = vadd.f32 %v1112, %v1434
        %v1442 = vadd.f32 %v1303, %v1438
        %v1443 = vadd.f32 %v1116, %v1434
        %v1444 = vadd.f32 %v1306, %v1438
        %v1445 = vadd.f32 %v1122, %v1434
        %v1446 = vadd.f32 %v1311, %v1438
        %v1447 = vadd.f32 %v1126, %v1434
        %v1448 = vadd.f32 %v1314, %v1438
        %v1449 = vadd.f32 %v1132, %v1434
        %v1450 = vadd.f32 %v1319, %v1438
        %v1451 = vadd.f32 %v1136, %v1434
        %v1452 = vadd.f32 %v1322, %v1438
        %v1453 = vadd.f32 %v1142, %v1434
        %v1454 = vadd.f32 %v1327, %v1438
        %v1455 = vadd.f32 %v1146, %v1434
        %v1456 = vadd.f32 %v1330, %v1438
        %v1457 = vadd.f32 %v1152, %v1434
        %v1458 = vadd.f32 %v1335, %v1438
        %v1459 = vadd.f32 %v1156, %v1434
        %v1460 = vadd.f32 %v1338, %v1438
        %v1461 = vadd.f32 %v1162, %v1434
        %v1462 = vadd.f32 %v1343, %v1438
        %v1463 = vadd.f32 %v1166, %v1434
        %v1464 = vadd.f32 %v1346, %v1438
        %v1465 = vadd.f32 %v1172, %v1434
        %v1466 = vadd.f32 %v1351, %v1438
        %v1467 = vadd.f32 %v1176, %v1434
        %v1468 = vadd.f32 %v1354, %v1438
        %v1469 = vadd.f32 %v1182, %v1434
        %v1470 = vadd.f32 %v1359, %v1438
        %v1471 = vadd.f32 %v1186, %v1434
        %v1472 = vadd.f32 %v1362, %v1438
        %v1473 = vadd.f32 %v1192, %v1434
        %v1474 = vadd.f32 %v1367, %v1438
        %v1475 = vadd.f32 %v1196, %v1434
        %v1476 = vadd.f32 %v1370, %v1438
        %v1477 = vadd.f32 %v1202, %v1434
        %v1478 = vadd.f32 %v1375, %v1438
        %v1479 = vadd.f32 %v1206, %v1434
        %v1480 = vadd.f32 %v1378, %v1438
        %v1481 = vadd.f32 %v1212, %v1434
        %v1482 = vadd.f32 %v1383, %v1438
        %v1483 = vadd.f32 %v1216, %v1434
        %v1484 = vadd.f32 %v1386, %v1438
        %v1485 = vadd.f32 %v1222, %v1434
        %v1486 = vadd.f32 %v1391, %v1438
        %v1487 = vadd.f32 %v1226, %v1434
        %v1488 = vadd.f32 %v1394, %v1438
        %v1489 = vadd.f32 %v1232, %v1434
        %v1490 = vadd.f32 %v1399, %v1438
        %v1491 = vadd.f32 %v1236, %v1434
        %v1492 = vadd.f32 %v1402, %v1438
        %v1493 = vadd.f32 %v1242, %v1434
        %v1494 = vadd.f32 %v1407, %v1438
        %v1495 = vadd.f32 %v1246, %v1434
        %v1496 = vadd.f32 %v1410, %v1438
        %v1497 = vadd.f32 %v1252, %v1434
        %v1498 = vadd.f32 %v1415, %v1438
        %v1499 = vadd.f32 %v1256, %v1434
        %v1500 = vadd.f32 %v1418, %v1438
        %v1501 = vadd.f32 %v1262, %v1434
        %v1502 = vadd.f32 %v1423, %v1438
        %v1503 = vadd.f32 %v1266, %v1434
        %v1504 = vadd.f32 %v1426, %v1438
        %v1505 = vld [vmem:[#allocation8] sm:$0xff]
        %v1506 = vld [vmem:[#allocation8 + $0x8] sm:$0xff]
        %v1507 = vld [vmem:[#allocation8 + $0x10] sm:$0xff]
        %v1508 = vld [vmem:[#allocation8 + $0x18] sm:$0xff]
        %v1509 = vld [vmem:[#allocation8 + $0x20] sm:$0xff]
        %v1510 = vld [vmem:[#allocation8 + $0x28] sm:$0xff]
        %v1511 = vld [vmem:[#allocation8 + $0x30] sm:$0xff]
        %v1512 = vld [vmem:[#allocation8 + $0x38] sm:$0xff]
        %v1513 = vld [vmem:[#allocation8 + $0x40] sm:$0xff]
        %v1514 = vld [vmem:[#allocation8 + $0x48] sm:$0xff]
        %v1515 = vld [vmem:[#allocation8 + $0x50] sm:$0xff]
        %v1516 = vld [vmem:[#allocation8 + $0x58] sm:$0xff]
        %v1517 = vld [vmem:[#allocation8 + $0x60] sm:$0xff]
        %v1518 = vld [vmem:[#allocation8 + $0x68] sm:$0xff]
        %v1519 = vld [vmem:[#allocation8 + $0x70] sm:$0xff]
        %v1520 = vld [vmem:[#allocation8 + $0x78] sm:$0xff]
        %v1521 = vld [vmem:[#allocation8 + $0x80] sm:$0xff]
        %v1522 = vld [vmem:[#allocation8 + $0x88] sm:$0xff]
        %v1523 = vld [vmem:[#allocation8 + $0x90] sm:$0xff]
        %v1524 = vld [vmem:[#allocation8 + $0x98] sm:$0xff]
        %v1525 = vld [vmem:[#allocation8 + $0xa0] sm:$0xff]
        %v1526 = vld [vmem:[#allocation8 + $0xa8] sm:$0xff]
        %v1527 = vld [vmem:[#allocation8 + $0xb0] sm:$0xff]
        %v1528 = vld [vmem:[#allocation8 + $0xb8] sm:$0xff]
        %v1529 = vld [vmem:[#allocation8 + $0xc0] sm:$0xff]
        %v1530 = vld [vmem:[#allocation8 + $0xc8] sm:$0xff]
        %v1531 = vld [vmem:[#allocation8 + $0xd0] sm:$0xff]
        %v1532 = vld [vmem:[#allocation8 + $0xd8] sm:$0xff]
        %v1533 = vld [vmem:[#allocation8 + $0xe0] sm:$0xff]
        %v1534 = vld [vmem:[#allocation8 + $0xe8] sm:$0xff]
        %v1535 = vld [vmem:[#allocation8 + $0xf0] sm:$0xff]
        %v1536 = vld [vmem:[#allocation8 + $0xf8] sm:$0xff]
        %v1537 = vld [vmem:[#allocation8 + $0x100] sm:$0xff]
        %v1538 = vld [vmem:[#allocation8 + $0x108] sm:$0xff]
        %v1539 = vld [vmem:[#allocation8 + $0x110] sm:$0xff]
        %v1540 = vld [vmem:[#allocation8 + $0x118] sm:$0xff]
        %v1541 = vld [vmem:[#allocation8 + $0x120] sm:$0xff]
        %v1542 = vld [vmem:[#allocation8 + $0x128] sm:$0xff]
        %v1543 = vld [vmem:[#allocation8 + $0x130] sm:$0xff]
        %v1544 = vld [vmem:[#allocation8 + $0x138] sm:$0xff]
        %v1545 = vld [vmem:[#allocation8 + $0x140] sm:$0xff]
        %v1546 = vld [vmem:[#allocation8 + $0x148] sm:$0xff]
        %v1547 = vld [vmem:[#allocation8 + $0x150] sm:$0xff]
        %v1548 = vld [vmem:[#allocation8 + $0x158] sm:$0xff]
        %v1549 = vld [vmem:[#allocation8 + $0x160] sm:$0xff]
        %v1550 = vld [vmem:[#allocation8 + $0x168] sm:$0xff]
        %v1551 = vld [vmem:[#allocation8 + $0x170] sm:$0xff]
        %v1552 = vld [vmem:[#allocation8 + $0x178] sm:$0xff]
        %v1553 = vld [vmem:[#allocation8 + $0x180] sm:$0xff]
        %v1554 = vld [vmem:[#allocation8 + $0x188] sm:$0xff]
        %v1555 = vld [vmem:[#allocation8 + $0x190] sm:$0xff]
        %v1556 = vld [vmem:[#allocation8 + $0x198] sm:$0xff]
        %v1557 = vld [vmem:[#allocation8 + $0x1a0] sm:$0xff]
        %v1558 = vld [vmem:[#allocation8 + $0x1a8] sm:$0xff]
        %v1559 = vld [vmem:[#allocation8 + $0x1b0] sm:$0xff]
        %v1560 = vld [vmem:[#allocation8 + $0x1b8] sm:$0xff]
        %v1561 = vld [vmem:[#allocation8 + $0x1c0] sm:$0xff]
        %v1562 = vld [vmem:[#allocation8 + $0x1c8] sm:$0xff]
        %v1563 = vld [vmem:[#allocation8 + $0x1d0] sm:$0xff]
        %v1564 = vld [vmem:[#allocation8 + $0x1d8] sm:$0xff]
        %v1565 = vld [vmem:[#allocation8 + $0x1e0] sm:$0xff]
        %v1566 = vld [vmem:[#allocation8 + $0x1e8] sm:$0xff]
        %v1567 = vld [vmem:[#allocation8 + $0x1f0] sm:$0xff]
        %v1568 = vld [vmem:[#allocation8 + $0x1f8] sm:$0xff]
        %v1569 = vmax.f32 %v1441, %v1442
        %1570 = vmax.xlane.f32.xlu0 %v1569
        %v1571 = vpop.xlane.xlu0 %1570
        %v1572 = vmax.f32 %v1443, %v1444
        %1573 = vmax.xlane.f32.xlu0 %v1572
        %v1574 = vpop.xlane.xlu0 %1573
        %v1575 = vmax.f32 %v1445, %v1446
        %1576 = vmax.xlane.f32.xlu0 %v1575
        %v1577 = vpop.xlane.xlu0 %1576
        %v1578 = vmax.f32 %v1447, %v1448
        %1579 = vmax.xlane.f32.xlu0 %v1578
        %v1580 = vpop.xlane.xlu0 %1579
        %v1581 = vmax.f32 %v1449, %v1450
        %1582 = vmax.xlane.f32.xlu0 %v1581
        %v1583 = vpop.xlane.xlu0 %1582
        %v1584 = vmax.f32 %v1451, %v1452
        %1585 = vmax.xlane.f32.xlu0 %v1584
        %v1586 = vpop.xlane.xlu0 %1585
        %v1587 = vmax.f32 %v1453, %v1454
        %1588 = vmax.xlane.f32.xlu0 %v1587
        %v1589 = vpop.xlane.xlu0 %1588
        %v1590 = vmax.f32 %v1455, %v1456
        %1591 = vmax.xlane.f32.xlu0 %v1590
        %v1592 = vpop.xlane.xlu0 %1591
        %v1593 = vmax.f32 %v1457, %v1458
        %1594 = vmax.xlane.f32.xlu0 %v1593
        %v1595 = vpop.xlane.xlu0 %1594
        %v1596 = vmax.f32 %v1459, %v1460
        %1597 = vmax.xlane.f32.xlu0 %v1596
        %v1598 = vpop.xlane.xlu0 %1597
        %v1599 = vmax.f32 %v1461, %v1462
        %1600 = vmax.xlane.f32.xlu0 %v1599
        %v1601 = vpop.xlane.xlu0 %1600
        %v1602 = vmax.f32 %v1463, %v1464
        %1603 = vmax.xlane.f32.xlu0 %v1602
        %v1604 = vpop.xlane.xlu0 %1603
        %v1605 = vmax.f32 %v1465, %v1466
        %1606 = vmax.xlane.f32.xlu0 %v1605
        %v1607 = vpop.xlane.xlu0 %1606
        %v1608 = vmax.f32 %v1467, %v1468
        %1609 = vmax.xlane.f32.xlu0 %v1608
        %v1610 = vpop.xlane.xlu0 %1609
        %v1611 = vmax.f32 %v1469, %v1470
        %1612 = vmax.xlane.f32.xlu0 %v1611
        %v1613 = vpop.xlane.xlu0 %1612
        %v1614 = vmax.f32 %v1471, %v1472
        %1615 = vmax.xlane.f32.xlu0 %v1614
        %v1616 = vpop.xlane.xlu0 %1615
        %v1617 = vmax.f32 %v1473, %v1474
        %1618 = vmax.xlane.f32.xlu0 %v1617
        %v1619 = vpop.xlane.xlu0 %1618
        %v1620 = vmax.f32 %v1475, %v1476
        %1621 = vmax.xlane.f32.xlu0 %v1620
        %v1622 = vpop.xlane.xlu0 %1621
        %v1623 = vmax.f32 %v1477, %v1478
        %1624 = vmax.xlane.f32.xlu0 %v1623
        %v1625 = vpop.xlane.xlu0 %1624
        %v1626 = vmax.f32 %v1479, %v1480
        %1627 = vmax.xlane.f32.xlu0 %v1626
        %v1628 = vpop.xlane.xlu0 %1627
        %v1629 = vmax.f32 %v1481, %v1482
        %1630 = vmax.xlane.f32.xlu0 %v1629
        %v1631 = vpop.xlane.xlu0 %1630
        %v1632 = vmax.f32 %v1483, %v1484
        %1633 = vmax.xlane.f32.xlu0 %v1632
        %v1634 = vpop.xlane.xlu0 %1633
        %v1635 = vmax.f32 %v1485, %v1486
        %1636 = vmax.xlane.f32.xlu0 %v1635
        %v1637 = vpop.xlane.xlu0 %1636
        %v1638 = vmax.f32 %v1487, %v1488
        %1639 = vmax.xlane.f32.xlu0 %v1638
        %v1640 = vpop.xlane.xlu0 %1639
        %v1641 = vmax.f32 %v1489, %v1490
        %1642 = vmax.xlane.f32.xlu0 %v1641
        %v1643 = vpop.xlane.xlu0 %1642
        %v1644 = vmax.f32 %v1491, %v1492
        %1645 = vmax.xlane.f32.xlu0 %v1644
        %v1646 = vpop.xlane.xlu0 %1645
        %v1647 = vmax.f32 %v1493, %v1494
        %1648 = vmax.xlane.f32.xlu0 %v1647
        %v1649 = vpop.xlane.xlu0 %1648
        %v1650 = vmax.f32 %v1495, %v1496
        %1651 = vmax.xlane.f32.xlu0 %v1650
        %v1652 = vpop.xlane.xlu0 %1651
        %v1653 = vmax.f32 %v1497, %v1498
        %1654 = vmax.xlane.f32.xlu0 %v1653
        %v1655 = vpop.xlane.xlu0 %1654
        %v1656 = vmax.f32 %v1499, %v1500
        %1657 = vmax.xlane.f32.xlu0 %v1656
        %v1658 = vpop.xlane.xlu0 %1657
        %v1659 = vmax.f32 %v1501, %v1502
        %1660 = vmax.xlane.f32.xlu0 %v1659
        %v1661 = vpop.xlane.xlu0 %1660
        %v1662 = vmax.f32 %v1503, %v1504
        %1663 = vmax.xlane.f32.xlu0 %v1662
        %v1664 = vpop.xlane.xlu0 %1663
        %v1665 = vsub.f32 %v1441, %v1571
        %v1666 = vsub.f32 %v1442, %v1571
        %v1667 = vsub.f32 %v1443, %v1574
        %v1668 = vsub.f32 %v1444, %v1574
        %v1669 = vsub.f32 %v1445, %v1577
        %v1670 = vsub.f32 %v1446, %v1577
        %v1671 = vsub.f32 %v1447, %v1580
        %v1672 = vsub.f32 %v1448, %v1580
        %v1673 = vsub.f32 %v1449, %v1583
        %v1674 = vsub.f32 %v1450, %v1583
        %v1675 = vsub.f32 %v1451, %v1586
        %v1676 = vsub.f32 %v1452, %v1586
        %v1677 = vsub.f32 %v1453, %v1589
        %v1678 = vsub.f32 %v1454, %v1589
        %v1679 = vsub.f32 %v1455, %v1592
        %v1680 = vsub.f32 %v1456, %v1592
        %v1681 = vsub.f32 %v1457, %v1595
        %v1682 = vsub.f32 %v1458, %v1595
        %v1683 = vsub.f32 %v1459, %v1598
        %v1684 = vsub.f32 %v1460, %v1598
        %v1685 = vsub.f32 %v1461, %v1601
        %v1686 = vsub.f32 %v1462, %v1601
        %v1687 = vsub.f32 %v1463, %v1604
        %v1688 = vsub.f32 %v1464, %v1604
        %v1689 = vsub.f32 %v1465, %v1607
        %v1690 = vsub.f32 %v1466, %v1607
        %v1691 = vsub.f32 %v1467, %v1610
        %v1692 = vsub.f32 %v1468, %v1610
        %v1693 = vsub.f32 %v1469, %v1613
        %v1694 = vsub.f32 %v1470, %v1613
        %v1695 = vsub.f32 %v1471, %v1616
        %v1696 = vsub.f32 %v1472, %v1616
        %v1697 = vsub.f32 %v1473, %v1619
        %v1698 = vsub.f32 %v1474, %v1619
        %v1699 = vsub.f32 %v1475, %v1622
        %v1700 = vsub.f32 %v1476, %v1622
        %v1701 = vsub.f32 %v1477, %v1625
        %v1702 = vsub.f32 %v1478, %v1625
        %v1703 = vsub.f32 %v1479, %v1628
        %v1704 = vsub.f32 %v1480, %v1628
        %v1705 = vsub.f32 %v1481, %v1631
        %v1706 = vsub.f32 %v1482, %v1631
        %v1707 = vsub.f32 %v1483, %v1634
        %v1708 = vsub.f32 %v1484, %v1634
        %v1709 = vsub.f32 %v1485, %v1637
        %v1710 = vsub.f32 %v1486, %v1637
        %v1711 = vsub.f32 %v1487, %v1640
        %v1712 = vsub.f32 %v1488, %v1640
        %v1713 = vsub.f32 %v1489, %v1643
        %v1714 = vsub.f32 %v1490, %v1643
        %v1715 = vsub.f32 %v1491, %v1646
        %v1716 = vsub.f32 %v1492, %v1646
        %v1717 = vsub.f32 %v1493, %v1649
        %v1718 = vsub.f32 %v1494, %v1649
        %v1719 = vsub.f32 %v1495, %v1652
        %v1720 = vsub.f32 %v1496, %v1652
        %v1721 = vsub.f32 %v1497, %v1655
        %v1722 = vsub.f32 %v1498, %v1655
        %v1723 = vsub.f32 %v1499, %v1658
        %v1724 = vsub.f32 %v1500, %v1658
        %v1725 = vsub.f32 %v1501, %v1661
        %v1726 = vsub.f32 %v1502, %v1661
        %v1727 = vsub.f32 %v1503, %v1664
        %v1728 = vsub.f32 %v1504, %v1664
        %v1729 = vmul.f32 %v1665, 1.442695
        %v1730 = vpow.pop %v1729
        %v1731 = vmul.f32 %v1666, 1.442695
        %v1732 = vpow.pop %v1731
        %v1733 = vmul.f32 %v1667, 1.442695
        %v1734 = vpow.pop %v1733
        %v1735 = vmul.f32 %v1668, 1.442695
        %v1736 = vpow.pop %v1735
        %v1737 = vmul.f32 %v1669, 1.442695
        %v1738 = vpow.pop %v1737
        %v1739 = vmul.f32 %v1670, 1.442695
        %v1740 = vpow.pop %v1739
        %v1741 = vmul.f32 %v1671, 1.442695
        %v1742 = vpow.pop %v1741
        %v1743 = vmul.f32 %v1672, 1.442695
        %v1744 = vpow.pop %v1743
        %v1745 = vmul.f32 %v1673, 1.442695
        %v1746 = vpow.pop %v1745
        %v1747 = vmul.f32 %v1674, 1.442695
        %v1748 = vpow.pop %v1747
        %v1749 = vmul.f32 %v1675, 1.442695
        %v1750 = vpow.pop %v1749
        %v1751 = vmul.f32 %v1676, 1.442695
        %v1752 = vpow.pop %v1751
        %v1753 = vmul.f32 %v1677, 1.442695
        %v1754 = vpow.pop %v1753
        %v1755 = vmul.f32 %v1678, 1.442695
        %v1756 = vpow.pop %v1755
        %v1757 = vmul.f32 %v1679, 1.442695
        %v1758 = vpow.pop %v1757
        %v1759 = vmul.f32 %v1680, 1.442695
        %v1760 = vpow.pop %v1759
        %v1761 = vmul.f32 %v1681, 1.442695
        %v1762 = vpow.pop %v1761
        %v1763 = vmul.f32 %v1682, 1.442695
        %v1764 = vpow.pop %v1763
        %v1765 = vmul.f32 %v1683, 1.442695
        %v1766 = vpow.pop %v1765
        %v1767 = vmul.f32 %v1684, 1.442695
        %v1768 = vpow.pop %v1767
        %v1769 = vmul.f32 %v1685, 1.442695
        %v1770 = vpow.pop %v1769
        %v1771 = vmul.f32 %v1686, 1.442695
        %v1772 = vpow.pop %v1771
        %v1773 = vmul.f32 %v1687, 1.442695
        %v1774 = vpow.pop %v1773
        %v1775 = vmul.f32 %v1688, 1.442695
        %v1776 = vpow.pop %v1775
        %v1777 = vmul.f32 %v1689, 1.442695
        %v1778 = vpow.pop %v1777
        %v1779 = vmul.f32 %v1690, 1.442695
        %v1780 = vpow.pop %v1779
        %v1781 = vmul.f32 %v1691, 1.442695
        %v1782 = vpow.pop %v1781
        %v1783 = vmul.f32 %v1692, 1.442695
        %v1784 = vpow.pop %v1783
        %v1785 = vmul.f32 %v1693, 1.442695
        %v1786 = vpow.pop %v1785
        %v1787 = vmul.f32 %v1694, 1.442695
        %v1788 = vpow.pop %v1787
        %v1789 = vmul.f32 %v1695, 1.442695
        %v1790 = vpow.pop %v1789
        %v1791 = vmul.f32 %v1696, 1.442695
        %v1792 = vpow.pop %v1791
        %v1793 = vmul.f32 %v1697, 1.442695
        %v1794 = vpow.pop %v1793
        %v1795 = vmul.f32 %v1698, 1.442695
        %v1796 = vpow.pop %v1795
        %v1797 = vmul.f32 %v1699, 1.442695
        %v1798 = vpow.pop %v1797
        %v1799 = vmul.f32 %v1700, 1.442695
        %v1800 = vpow.pop %v1799
        %v1801 = vmul.f32 %v1701, 1.442695
        %v1802 = vpow.pop %v1801
        %v1803 = vmul.f32 %v1702, 1.442695
        %v1804 = vpow.pop %v1803
        %v1805 = vmul.f32 %v1703, 1.442695
        %v1806 = vpow.pop %v1805
        %v1807 = vmul.f32 %v1704, 1.442695
        %v1808 = vpow.pop %v1807
        %v1809 = vmul.f32 %v1705, 1.442695
        %v1810 = vpow.pop %v1809
        %v1811 = vmul.f32 %v1706, 1.442695
        %v1812 = vpow.pop %v1811
        %v1813 = vmul.f32 %v1707, 1.442695
        %v1814 = vpow.pop %v1813
        %v1815 = vmul.f32 %v1708, 1.442695
        %v1816 = vpow.pop %v1815
        %v1817 = vmul.f32 %v1709, 1.442695
        %v1818 = vpow.pop %v1817
        %v1819 = vmul.f32 %v1710, 1.442695
        %v1820 = vpow.pop %v1819
        %v1821 = vmul.f32 %v1711, 1.442695
        %v1822 = vpow.pop %v1821
        %v1823 = vmul.f32 %v1712, 1.442695
        %v1824 = vpow.pop %v1823
        %v1825 = vmul.f32 %v1713, 1.442695
        %v1826 = vpow.pop %v1825
        %v1827 = vmul.f32 %v1714, 1.442695
        %v1828 = vpow.pop %v1827
        %v1829 = vmul.f32 %v1715, 1.442695
        %v1830 = vpow.pop %v1829
        %v1831 = vmul.f32 %v1716, 1.442695
        %v1832 = vpow.pop %v1831
        %v1833 = vmul.f32 %v1717, 1.442695
        %v1834 = vpow.pop %v1833
        %v1835 = vmul.f32 %v1718, 1.442695
        %v1836 = vpow.pop %v1835
        %v1837 = vmul.f32 %v1719, 1.442695
        %v1838 = vpow.pop %v1837
        %v1839 = vmul.f32 %v1720, 1.442695
        %v1840 = vpow.pop %v1839
        %v1841 = vmul.f32 %v1721, 1.442695
        %v1842 = vpow.pop %v1841
        %v1843 = vmul.f32 %v1722, 1.442695
        %v1844 = vpow.pop %v1843
        %v1845 = vmul.f32 %v1723, 1.442695
        %v1846 = vpow.pop %v1845
        %v1847 = vmul.f32 %v1724, 1.442695
        %v1848 = vpow.pop %v1847
        %v1849 = vmul.f32 %v1725, 1.442695
        %v1850 = vpow.pop %v1849
        %v1851 = vmul.f32 %v1726, 1.442695
        %v1852 = vpow.pop %v1851
        %v1853 = vmul.f32 %v1727, 1.442695
        %v1854 = vpow.pop %v1853
        %v1855 = vmul.f32 %v1728, 1.442695
        %v1856 = vpow.pop %v1855
        %1857 = vmatprep.subr.mxu0 %v1536
        %1858 = vmatpush1.msra.mxu0 %v1535
        %1859 = vmatprep.subr.mxu0 %v1534
        %1860 = vmatpush1.msra.mxu0 %v1533
        %1861 = vmatprep.subr.mxu0 %v1532
        %1862 = vmatpush1.msra.mxu0 %v1531
        %1863 = vmatprep.subr.mxu0 %v1530
        %1864 = vmatpush1.msra.mxu0 %v1529
        %1865 = vmatprep.subr.mxu0 %v1528
        %1866 = vmatpush1.msra.mxu0 %v1527
        %1867 = vmatprep.subr.mxu0 %v1526
        %1868 = vmatpush1.msra.mxu0 %v1525
        %1869 = vmatprep.subr.mxu0 %v1524
        %1870 = vmatpush1.msra.mxu0 %v1523
        %1871 = vmatprep.subr.mxu0 %v1522
        %1872 = vmatpush1.msra.mxu0 %v1521
        %1873 = vmatprep.subr.mxu0 %v1520
        %1874 = vmatpush1.msra.mxu0 %v1519
        %1875 = vmatprep.subr.mxu0 %v1518
        %1876 = vmatpush1.msra.mxu0 %v1517
        %1877 = vmatprep.subr.mxu0 %v1516
        %1878 = vmatpush1.msra.mxu0 %v1515
        %1879 = vmatprep.subr.mxu0 %v1514
        %1880 = vmatpush1.msra.mxu0 %v1513
        %1881 = vmatprep.subr.mxu0 %v1512
        %1882 = vmatpush1.msra.mxu0 %v1511
        %1883 = vmatprep.subr.mxu0 %v1510
        %1884 = vmatpush1.msra.mxu0 %v1509
        %1885 = vmatprep.subr.mxu0 %v1508
        %1886 = vmatpush1.msra.mxu0 %v1507
        %1887 = vmatprep.subr.mxu0 %v1506
        %1888 = vmatpush1.msra.mxu0 %v1505
        %1889 = vmatprep.subr.mxu0 %v1568
        %1890 = vmatpush2.msra.mxu0 %v1567
        %1891 = vmatprep.subr.mxu0 %v1566
        %1892 = vmatpush2.msra.mxu0 %v1565
        %1893 = vmatprep.subr.mxu0 %v1564
        %1894 = vmatpush2.msra.mxu0 %v1563
        %1895 = vmatprep.subr.mxu0 %v1562
        %1896 = vmatpush2.msra.mxu0 %v1561
        %1897 = vmatprep.subr.mxu0 %v1560
        %1898 = vmatpush2.msra.mxu0 %v1559
        %1899 = vmatprep.subr.mxu0 %v1558
        %1900 = vmatpush2.msra.mxu0 %v1557
        %1901 = vmatprep.subr.mxu0 %v1556
        %1902 = vmatpush2.msra.mxu0 %v1555
        %1903 = vmatprep.subr.mxu0 %v1554
        %1904 = vmatpush2.msra.mxu0 %v1553
        %1905 = vmatprep.subr.mxu0 %v1552
        %1906 = vmatpush2.msra.mxu0 %v1551
        %1907 = vmatprep.subr.mxu0 %v1550
        %1908 = vmatpush2.msra.mxu0 %v1549
        %1909 = vmatprep.subr.mxu0 %v1548
        %1910 = vmatpush2.msra.mxu0 %v1547
        %1911 = vmatprep.subr.mxu0 %v1546
        %1912 = vmatpush2.msra.mxu0 %v1545
        %1913 = vmatprep.subr.mxu0 %v1544
        %1914 = vmatpush2.msra.mxu0 %v1543
        %1915 = vmatprep.subr.mxu0 %v1542
        %1916 = vmatpush2.msra.mxu0 %v1541
        %1917 = vmatprep.subr.mxu0 %v1540
        %1918 = vmatpush2.msra.mxu0 %v1539
        %1919 = vmatprep.subr.mxu0 %v1538
        %1920 = vmatpush2.msra.mxu0 %v1537
        %1921 = vmatprep.mubr.f32.mxu0 %v1732
        %1922 = vmatmul.mubr.f32.gmra.mxu0 %v1730
        %v1923 = vpop.f32.mrf.mxu0
        %v1924 = vadd.f32 0.0, %v1923
        %v1925 = vpop.f32.mrf.mxu0
        %v1926 = vadd.f32 0.0, %v1925
        %1927 = vmatprep.mubr.f32.mxu0 %v1736
        %1928 = vmatmul.mubr.f32.gmra.mxu0 %v1734
        %v1929 = vpop.f32.mrf.mxu0
        %v1930 = vadd.f32 0.0, %v1929
        %v1931 = vpop.f32.mrf.mxu0
        %v1932 = vadd.f32 0.0, %v1931
        %1933 = vmatprep.mubr.f32.mxu0 %v1740
        %1934 = vmatmul.mubr.f32.gmra.mxu0 %v1738
        %v1935 = vpop.f32.mrf.mxu0
        %v1936 = vadd.f32 0.0, %v1935
        %v1937 = vpop.f32.mrf.mxu0
        %v1938 = vadd.f32 0.0, %v1937
        %1939 = vmatprep.mubr.f32.mxu0 %v1744
        %1940 = vmatmul.mubr.f32.gmra.mxu0 %v1742
        %v1941 = vpop.f32.mrf.mxu0
        %v1942 = vadd.f32 0.0, %v1941
        %v1943 = vpop.f32.mrf.mxu0
        %v1944 = vadd.f32 0.0, %v1943
        %1945 = vmatprep.mubr.f32.mxu0 %v1748
        %1946 = vmatmul.mubr.f32.gmra.mxu0 %v1746
        %v1947 = vpop.f32.mrf.mxu0
        %v1948 = vadd.f32 0.0, %v1947
        %v1949 = vpop.f32.mrf.mxu0
        %v1950 = vadd.f32 0.0, %v1949
        %1951 = vmatprep.mubr.f32.mxu0 %v1752
        %1952 = vmatmul.mubr.f32.gmra.mxu0 %v1750
        %v1953 = vpop.f32.mrf.mxu0
        %v1954 = vadd.f32 0.0, %v1953
        %v1955 = vpop.f32.mrf.mxu0
        %v1956 = vadd.f32 0.0, %v1955
        %1957 = vmatprep.mubr.f32.mxu0 %v1756
        %1958 = vmatmul.mubr.f32.gmra.mxu0 %v1754
        %v1959 = vpop.f32.mrf.mxu0
        %v1960 = vadd.f32 0.0, %v1959
        %v1961 = vpop.f32.mrf.mxu0
        %v1962 = vadd.f32 0.0, %v1961
        %1963 = vmatprep.mubr.f32.mxu0 %v1760
        %1964 = vmatmul.mubr.f32.gmra.mxu0 %v1758
        %v1965 = vpop.f32.mrf.mxu0
        %v1966 = vadd.f32 0.0, %v1965
        %v1967 = vpop.f32.mrf.mxu0
        %v1968 = vadd.f32 0.0, %v1967
        %1969 = vmatprep.mubr.f32.mxu0 %v1764
        %1970 = vmatmul.mubr.f32.gmra.mxu0 %v1762
        %v1971 = vpop.f32.mrf.mxu0
        %v1972 = vadd.f32 0.0, %v1971
        %v1973 = vpop.f32.mrf.mxu0
        %v1974 = vadd.f32 0.0, %v1973
        %1975 = vmatprep.mubr.f32.mxu0 %v1768
        %1976 = vmatmul.mubr.f32.gmra.mxu0 %v1766
        %v1977 = vpop.f32.mrf.mxu0
        %v1978 = vadd.f32 0.0, %v1977
        %v1979 = vpop.f32.mrf.mxu0
        %v1980 = vadd.f32 0.0, %v1979
        %1981 = vmatprep.mubr.f32.mxu0 %v1772
        %1982 = vmatmul.mubr.f32.gmra.mxu0 %v1770
        %v1983 = vpop.f32.mrf.mxu0
        %v1984 = vadd.f32 0.0, %v1983
        %v1985 = vpop.f32.mrf.mxu0
        %v1986 = vadd.f32 0.0, %v1985
        %1987 = vmatprep.mubr.f32.mxu0 %v1776
        %1988 = vmatmul.mubr.f32.gmra.mxu0 %v1774
        %v1989 = vpop.f32.mrf.mxu0
        %v1990 = vadd.f32 0.0, %v1989
        %v1991 = vpop.f32.mrf.mxu0
        %v1992 = vadd.f32 0.0, %v1991
        %1993 = vmatprep.mubr.f32.mxu0 %v1780
        %1994 = vmatmul.mubr.f32.gmra.mxu0 %v1778
        %v1995 = vpop.f32.mrf.mxu0
        %v1996 = vadd.f32 0.0, %v1995
        %v1997 = vpop.f32.mrf.mxu0
        %v1998 = vadd.f32 0.0, %v1997
        %1999 = vmatprep.mubr.f32.mxu0 %v1784
        %2000 = vmatmul.mubr.f32.gmra.mxu0 %v1782
        %v2001 = vpop.f32.mrf.mxu0
        %v2002 = vadd.f32 0.0, %v2001
        %v2003 = vpop.f32.mrf.mxu0
        %v2004 = vadd.f32 0.0, %v2003
        %2005 = vmatprep.mubr.f32.mxu0 %v1788
        %2006 = vmatmul.mubr.f32.gmra.mxu0 %v1786
        %v2007 = vpop.f32.mrf.mxu0
        %v2008 = vadd.f32 0.0, %v2007
        %v2009 = vpop.f32.mrf.mxu0
        %v2010 = vadd.f32 0.0, %v2009
        %2011 = vmatprep.mubr.f32.mxu0 %v1792
        %2012 = vmatmul.mubr.f32.gmra.mxu0 %v1790
        %v2013 = vpop.f32.mrf.mxu0
        %v2014 = vadd.f32 0.0, %v2013
        %v2015 = vpop.f32.mrf.mxu0
        %v2016 = vadd.f32 0.0, %v2015
        %2017 = vmatprep.mubr.f32.mxu0 %v1796
        %2018 = vmatmul.mubr.f32.gmra.mxu0 %v1794
        %v2019 = vpop.f32.mrf.mxu0
        %v2020 = vadd.f32 0.0, %v2019
        %v2021 = vpop.f32.mrf.mxu0
        %v2022 = vadd.f32 0.0, %v2021
        %2023 = vmatprep.mubr.f32.mxu0 %v1800
        %2024 = vmatmul.mubr.f32.gmra.mxu0 %v1798
        %v2025 = vpop.f32.mrf.mxu0
        %v2026 = vadd.f32 0.0, %v2025
        %v2027 = vpop.f32.mrf.mxu0
        %v2028 = vadd.f32 0.0, %v2027
        %2029 = vmatprep.mubr.f32.mxu0 %v1804
        %2030 = vmatmul.mubr.f32.gmra.mxu0 %v1802
        %v2031 = vpop.f32.mrf.mxu0
        %v2032 = vadd.f32 0.0, %v2031
        %v2033 = vpop.f32.mrf.mxu0
        %v2034 = vadd.f32 0.0, %v2033
        %2035 = vmatprep.mubr.f32.mxu0 %v1808
        %2036 = vmatmul.mubr.f32.gmra.mxu0 %v1806
        %v2037 = vpop.f32.mrf.mxu0
        %v2038 = vadd.f32 0.0, %v2037
        %v2039 = vpop.f32.mrf.mxu0
        %v2040 = vadd.f32 0.0, %v2039
        %2041 = vmatprep.mubr.f32.mxu0 %v1812
        %2042 = vmatmul.mubr.f32.gmra.mxu0 %v1810
        %v2043 = vpop.f32.mrf.mxu0
        %v2044 = vadd.f32 0.0, %v2043
        %v2045 = vpop.f32.mrf.mxu0
        %v2046 = vadd.f32 0.0, %v2045
        %2047 = vmatprep.mubr.f32.mxu0 %v1816
        %2048 = vmatmul.mubr.f32.gmra.mxu0 %v1814
        %v2049 = vpop.f32.mrf.mxu0
        %v2050 = vadd.f32 0.0, %v2049
        %v2051 = vpop.f32.mrf.mxu0
        %v2052 = vadd.f32 0.0, %v2051
        %2053 = vmatprep.mubr.f32.mxu0 %v1820
        %2054 = vmatmul.mubr.f32.gmra.mxu0 %v1818
        %v2055 = vpop.f32.mrf.mxu0
        %v2056 = vadd.f32 0.0, %v2055
        %v2057 = vpop.f32.mrf.mxu0
        %v2058 = vadd.f32 0.0, %v2057
        %2059 = vmatprep.mubr.f32.mxu0 %v1824
        %2060 = vmatmul.mubr.f32.gmra.mxu0 %v1822
        %v2061 = vpop.f32.mrf.mxu0
        %v2062 = vadd.f32 0.0, %v2061
        %v2063 = vpop.f32.mrf.mxu0
        %v2064 = vadd.f32 0.0, %v2063
        %2065 = vmatprep.mubr.f32.mxu0 %v1828
        %2066 = vmatmul.mubr.f32.gmra.mxu0 %v1826
        %v2067 = vpop.f32.mrf.mxu0
        %v2068 = vadd.f32 0.0, %v2067
        %v2069 = vpop.f32.mrf.mxu0
        %v2070 = vadd.f32 0.0, %v2069
        %2071 = vmatprep.mubr.f32.mxu0 %v1832
        %2072 = vmatmul.mubr.f32.gmra.mxu0 %v1830
        %v2073 = vpop.f32.mrf.mxu0
        %v2074 = vadd.f32 0.0, %v2073
        %v2075 = vpop.f32.mrf.mxu0
        %v2076 = vadd.f32 0.0, %v2075
        %2077 = vmatprep.mubr.f32.mxu0 %v1836
        %2078 = vmatmul.mubr.f32.gmra.mxu0 %v1834
        %v2079 = vpop.f32.mrf.mxu0
        %v2080 = vadd.f32 0.0, %v2079
        %v2081 = vpop.f32.mrf.mxu0
        %v2082 = vadd.f32 0.0, %v2081
        %2083 = vmatprep.mubr.f32.mxu0 %v1840
        %2084 = vmatmul.mubr.f32.gmra.mxu0 %v1838
        %v2085 = vpop.f32.mrf.mxu0
        %v2086 = vadd.f32 0.0, %v2085
        %v2087 = vpop.f32.mrf.mxu0
        %v2088 = vadd.f32 0.0, %v2087
        %2089 = vmatprep.mubr.f32.mxu0 %v1844
        %2090 = vmatmul.mubr.f32.gmra.mxu0 %v1842
        %v2091 = vpop.f32.mrf.mxu0
        %v2092 = vadd.f32 0.0, %v2091
        %v2093 = vpop.f32.mrf.mxu0
        %v2094 = vadd.f32 0.0, %v2093
        %2095 = vmatprep.mubr.f32.mxu0 %v1848
        %2096 = vmatmul.mubr.f32.gmra.mxu0 %v1846
        %v2097 = vpop.f32.mrf.mxu0
        %v2098 = vadd.f32 0.0, %v2097
        %v2099 = vpop.f32.mrf.mxu0
        %v2100 = vadd.f32 0.0, %v2099
        %2101 = vmatprep.mubr.f32.mxu0 %v1852
        %2102 = vmatmul.mubr.f32.gmra.mxu0 %v1850
        %v2103 = vpop.f32.mrf.mxu0
        %v2104 = vadd.f32 0.0, %v2103
        %v2105 = vpop.f32.mrf.mxu0
        %v2106 = vadd.f32 0.0, %v2105
        %2107 = vmatprep.mubr.f32.mxu0 %v1856
        %2108 = vmatmul.mubr.f32.gmra.mxu0 %v1854
        %v2109 = vpop.f32.mrf.mxu0
        %v2110 = vadd.f32 0.0, %v2109
        %v2111 = vpop.f32.mrf.mxu0
        %v2112 = vadd.f32 0.0, %v2111
        %2113 = vdwg.mxu0
        %v2114 = vmax.f32 %v1924, 1e-30
        %v2115 = vmax.f32 %v1926, 1e-30
        %v2116 = vmax.f32 %v1930, 1e-30
        %v2117 = vmax.f32 %v1932, 1e-30
        %v2118 = vmax.f32 %v1936, 1e-30
        %v2119 = vmax.f32 %v1938, 1e-30
        %v2120 = vmax.f32 %v1942, 1e-30
        %v2121 = vmax.f32 %v1944, 1e-30
        %v2122 = vmax.f32 %v1948, 1e-30
        %v2123 = vmax.f32 %v1950, 1e-30
        %v2124 = vmax.f32 %v1954, 1e-30
        %v2125 = vmax.f32 %v1956, 1e-30
        %v2126 = vmax.f32 %v1960, 1e-30
        %v2127 = vmax.f32 %v1962, 1e-30
        %v2128 = vmax.f32 %v1966, 1e-30
        %v2129 = vmax.f32 %v1968, 1e-30
        %v2130 = vmax.f32 %v1972, 1e-30
        %v2131 = vmax.f32 %v1974, 1e-30
        %v2132 = vmax.f32 %v1978, 1e-30
        %v2133 = vmax.f32 %v1980, 1e-30
        %v2134 = vmax.f32 %v1984, 1e-30
        %v2135 = vmax.f32 %v1986, 1e-30
        %v2136 = vmax.f32 %v1990, 1e-30
        %v2137 = vmax.f32 %v1992, 1e-30
        %v2138 = vmax.f32 %v1996, 1e-30
        %v2139 = vmax.f32 %v1998, 1e-30
        %v2140 = vmax.f32 %v2002, 1e-30
        %v2141 = vmax.f32 %v2004, 1e-30
        %v2142 = vmax.f32 %v2008, 1e-30
        %v2143 = vmax.f32 %v2010, 1e-30
        %v2144 = vmax.f32 %v2014, 1e-30
        %v2145 = vmax.f32 %v2016, 1e-30
        %v2146 = vmax.f32 %v2020, 1e-30
        %v2147 = vmax.f32 %v2022, 1e-30
        %v2148 = vmax.f32 %v2026, 1e-30
        %v2149 = vmax.f32 %v2028, 1e-30
        %v2150 = vmax.f32 %v2032, 1e-30
        %v2151 = vmax.f32 %v2034, 1e-30
        %v2152 = vmax.f32 %v2038, 1e-30
        %v2153 = vmax.f32 %v2040, 1e-30
        %v2154 = vmax.f32 %v2044, 1e-30
        %v2155 = vmax.f32 %v2046, 1e-30
        %v2156 = vmax.f32 %v2050, 1e-30
        %v2157 = vmax.f32 %v2052, 1e-30
        %v2158 = vmax.f32 %v2056, 1e-30
        %v2159 = vmax.f32 %v2058, 1e-30
        %v2160 = vmax.f32 %v2062, 1e-30
        %v2161 = vmax.f32 %v2064, 1e-30
        %v2162 = vmax.f32 %v2068, 1e-30
        %v2163 = vmax.f32 %v2070, 1e-30
        %v2164 = vmax.f32 %v2074, 1e-30
        %v2165 = vmax.f32 %v2076, 1e-30
        %v2166 = vmax.f32 %v2080, 1e-30
        %v2167 = vmax.f32 %v2082, 1e-30
        %v2168 = vmax.f32 %v2086, 1e-30
        %v2169 = vmax.f32 %v2088, 1e-30
        %v2170 = vmax.f32 %v2092, 1e-30
        %v2171 = vmax.f32 %v2094, 1e-30
        %v2172 = vmax.f32 %v2098, 1e-30
        %v2173 = vmax.f32 %v2100, 1e-30
        %v2174 = vmax.f32 %v2104, 1e-30
        %v2175 = vmax.f32 %v2106, 1e-30
        %v2176 = vmax.f32 %v2110, 1e-30
        %v2177 = vmax.f32 %v2112, 1e-30
        %v2178 = vrcp.pop %v2114
        %v2179 = vrcp.pop %v2115
        %v2180 = vrcp.pop %v2116
        %v2181 = vrcp.pop %v2117
        %v2182 = vrcp.pop %v2118
        %v2183 = vrcp.pop %v2119
        %v2184 = vrcp.pop %v2120
        %v2185 = vrcp.pop %v2121
        %v2186 = vrcp.pop %v2122
        %v2187 = vrcp.pop %v2123
        %v2188 = vrcp.pop %v2124
        %v2189 = vrcp.pop %v2125
        %v2190 = vrcp.pop %v2126
        %v2191 = vrcp.pop %v2127
        %v2192 = vrcp.pop %v2128
        %v2193 = vrcp.pop %v2129
        %v2194 = vrcp.pop %v2130
        %v2195 = vrcp.pop %v2131
        %v2196 = vrcp.pop %v2132
        %v2197 = vrcp.pop %v2133
        %v2198 = vrcp.pop %v2134
        %v2199 = vrcp.pop %v2135
        %v2200 = vrcp.pop %v2136
        %v2201 = vrcp.pop %v2137
        %v2202 = vrcp.pop %v2138
        %v2203 = vrcp.pop %v2139
        %v2204 = vrcp.pop %v2140
        %v2205 = vrcp.pop %v2141
        %v2206 = vrcp.pop %v2142
        %v2207 = vrcp.pop %v2143
        %v2208 = vrcp.pop %v2144
        %v2209 = vrcp.pop %v2145
        %v2210 = vrcp.pop %v2146
        %v2211 = vrcp.pop %v2147
        %v2212 = vrcp.pop %v2148
        %v2213 = vrcp.pop %v2149
        %v2214 = vrcp.pop %v2150
        %v2215 = vrcp.pop %v2151
        %v2216 = vrcp.pop %v2152
        %v2217 = vrcp.pop %v2153
        %v2218 = vrcp.pop %v2154
        %v2219 = vrcp.pop %v2155
        %v2220 = vrcp.pop %v2156
        %v2221 = vrcp.pop %v2157
        %v2222 = vrcp.pop %v2158
        %v2223 = vrcp.pop %v2159
        %v2224 = vrcp.pop %v2160
        %v2225 = vrcp.pop %v2161
        %v2226 = vrcp.pop %v2162
        %v2227 = vrcp.pop %v2163
        %v2228 = vrcp.pop %v2164
        %v2229 = vrcp.pop %v2165
        %v2230 = vrcp.pop %v2166
        %v2231 = vrcp.pop %v2167
        %v2232 = vrcp.pop %v2168
        %v2233 = vrcp.pop %v2169
        %v2234 = vrcp.pop %v2170
        %v2235 = vrcp.pop %v2171
        %v2236 = vrcp.pop %v2172
        %v2237 = vrcp.pop %v2173
        %v2238 = vrcp.pop %v2174
        %v2239 = vrcp.pop %v2175
        %v2240 = vrcp.pop %v2176
        %v2241 = vrcp.pop %v2177
        %v2242 = vmul.f32 %v1730, %v2178
        %v2243 = vmul.f32 %v1732, %v2179
        %v2244 = vmul.f32 %v1734, %v2180
        %v2245 = vmul.f32 %v1736, %v2181
        %v2246 = vmul.f32 %v1738, %v2182
        %v2247 = vmul.f32 %v1740, %v2183
        %v2248 = vmul.f32 %v1742, %v2184
        %v2249 = vmul.f32 %v1744, %v2185
        %v2250 = vmul.f32 %v1746, %v2186
        %v2251 = vmul.f32 %v1748, %v2187
        %v2252 = vmul.f32 %v1750, %v2188
        %v2253 = vmul.f32 %v1752, %v2189
        %v2254 = vmul.f32 %v1754, %v2190
        %v2255 = vmul.f32 %v1756, %v2191
        %v2256 = vmul.f32 %v1758, %v2192
        %v2257 = vmul.f32 %v1760, %v2193
        %v2258 = vmul.f32 %v1762, %v2194
        %v2259 = vmul.f32 %v1764, %v2195
        %v2260 = vmul.f32 %v1766, %v2196
        %v2261 = vmul.f32 %v1768, %v2197
        %v2262 = vmul.f32 %v1770, %v2198
        %v2263 = vmul.f32 %v1772, %v2199
        %v2264 = vmul.f32 %v1774, %v2200
        %v2265 = vmul.f32 %v1776, %v2201
        %v2266 = vmul.f32 %v1778, %v2202
        %v2267 = vmul.f32 %v1780, %v2203
        %v2268 = vmul.f32 %v1782, %v2204
        %v2269 = vmul.f32 %v1784, %v2205
        %v2270 = vmul.f32 %v1786, %v2206
        %v2271 = vmul.f32 %v1788, %v2207
        %v2272 = vmul.f32 %v1790, %v2208
        %v2273 = vmul.f32 %v1792, %v2209
        %v2274 = vmul.f32 %v1794, %v2210
        %v2275 = vmul.f32 %v1796, %v2211
        %v2276 = vmul.f32 %v1798, %v2212
        %v2277 = vmul.f32 %v1800, %v2213
        %v2278 = vmul.f32 %v1802, %v2214
        %v2279 = vmul.f32 %v1804, %v2215
        %v2280 = vmul.f32 %v1806, %v2216
        %v2281 = vmul.f32 %v1808, %v2217
        %v2282 = vmul.f32 %v1810, %v2218
        %v2283 = vmul.f32 %v1812, %v2219
        %v2284 = vmul.f32 %v1814, %v2220
        %v2285 = vmul.f32 %v1816, %v2221
        %v2286 = vmul.f32 %v1818, %v2222
        %v2287 = vmul.f32 %v1820, %v2223
        %v2288 = vmul.f32 %v1822, %v2224
        %v2289 = vmul.f32 %v1824, %v2225
        %v2290 = vmul.f32 %v1826, %v2226
        %v2291 = vmul.f32 %v1828, %v2227
        %v2292 = vmul.f32 %v1830, %v2228
        %v2293 = vmul.f32 %v1832, %v2229
        %v2294 = vmul.f32 %v1834, %v2230
        %v2295 = vmul.f32 %v1836, %v2231
        %v2296 = vmul.f32 %v1838, %v2232
        %v2297 = vmul.f32 %v1840, %v2233
        %v2298 = vmul.f32 %v1842, %v2234
        %v2299 = vmul.f32 %v1844, %v2235
        %v2300 = vmul.f32 %v1846, %v2236
        %v2301 = vmul.f32 %v1848, %v2237
        %v2302 = vmul.f32 %v1850, %v2238
        %v2303 = vmul.f32 %v1852, %v2239
        %v2304 = vmul.f32 %v1854, %v2240
        %v2305 = vmul.f32 %v1856, %v2241
        %v2306 = vld [vmem:[%s379] sm:$0xff]
        %v2307 = vld [vmem:[%s379 + $0x8] sm:$0xff]
        %v2308 = vld [vmem:[%s379 + $0x10] sm:$0xff]
        %v2309 = vld [vmem:[%s379 + $0x18] sm:$0xff]
        %v2310 = vld [vmem:[%s379 + $0x20] sm:$0xff]
        %v2311 = vld [vmem:[%s379 + $0x28] sm:$0xff]
        %v2312 = vld [vmem:[%s379 + $0x30] sm:$0xff]
        %v2313 = vld [vmem:[%s379 + $0x38] sm:$0xff]
        %v2314 = vld [vmem:[%s379 + $0x40] sm:$0xff]
        %v2315 = vld [vmem:[%s379 + $0x48] sm:$0xff]
        %v2316 = vld [vmem:[%s379 + $0x50] sm:$0xff]
        %v2317 = vld [vmem:[%s379 + $0x58] sm:$0xff]
        %v2318 = vld [vmem:[%s379 + $0x60] sm:$0xff]
        %v2319 = vld [vmem:[%s379 + $0x68] sm:$0xff]
        %v2320 = vld [vmem:[%s379 + $0x70] sm:$0xff]
        %v2321 = vld [vmem:[%s379 + $0x78] sm:$0xff]
        %v2322 = vld [vmem:[%s379 + $0x80] sm:$0xff]
        %v2323 = vld [vmem:[%s379 + $0x88] sm:$0xff]
        %v2324 = vld [vmem:[%s379 + $0x90] sm:$0xff]
        %v2325 = vld [vmem:[%s379 + $0x98] sm:$0xff]
        %v2326 = vld [vmem:[%s379 + $0xa0] sm:$0xff]
        %v2327 = vld [vmem:[%s379 + $0xa8] sm:$0xff]
        %v2328 = vld [vmem:[%s379 + $0xb0] sm:$0xff]
        %v2329 = vld [vmem:[%s379 + $0xb8] sm:$0xff]
        %v2330 = vld [vmem:[%s379 + $0xc0] sm:$0xff]
        %v2331 = vld [vmem:[%s379 + $0xc8] sm:$0xff]
        %v2332 = vld [vmem:[%s379 + $0xd0] sm:$0xff]
        %v2333 = vld [vmem:[%s379 + $0xd8] sm:$0xff]
        %v2334 = vld [vmem:[%s379 + $0xe0] sm:$0xff]
        %v2335 = vld [vmem:[%s379 + $0xe8] sm:$0xff]
        %v2336 = vld [vmem:[%s379 + $0xf0] sm:$0xff]
        %v2337 = vld [vmem:[%s379 + $0xf8] sm:$0xff]
        %v2338 = vpack.c.bf16 %v2244, %v2242
        %v2339 = vpack.c.bf16 %v2245, %v2243
        %v2340 = vpack.c.bf16 %v2248, %v2246
        %v2341 = vpack.c.bf16 %v2249, %v2247
        %v2342 = vpack.c.bf16 %v2252, %v2250
        %v2343 = vpack.c.bf16 %v2253, %v2251
        %v2344 = vpack.c.bf16 %v2256, %v2254
        %v2345 = vpack.c.bf16 %v2257, %v2255
        %v2346 = vpack.c.bf16 %v2260, %v2258
        %v2347 = vpack.c.bf16 %v2261, %v2259
        %v2348 = vpack.c.bf16 %v2264, %v2262
        %v2349 = vpack.c.bf16 %v2265, %v2263
        %v2350 = vpack.c.bf16 %v2268, %v2266
        %v2351 = vpack.c.bf16 %v2269, %v2267
        %v2352 = vpack.c.bf16 %v2272, %v2270
        %v2353 = vpack.c.bf16 %v2273, %v2271
        %v2354 = vpack.c.bf16 %v2276, %v2274
        %v2355 = vpack.c.bf16 %v2277, %v2275
        %v2356 = vpack.c.bf16 %v2280, %v2278
        %v2357 = vpack.c.bf16 %v2281, %v2279
        %v2358 = vpack.c.bf16 %v2284, %v2282
        %v2359 = vpack.c.bf16 %v2285, %v2283
        %v2360 = vpack.c.bf16 %v2288, %v2286
        %v2361 = vpack.c.bf16 %v2289, %v2287
        %v2362 = vpack.c.bf16 %v2292, %v2290
        %v2363 = vpack.c.bf16 %v2293, %v2291
        %v2364 = vpack.c.bf16 %v2296, %v2294
        %v2365 = vpack.c.bf16 %v2297, %v2295
        %v2366 = vpack.c.bf16 %v2300, %v2298
        %v2367 = vpack.c.bf16 %v2301, %v2299
        %v2368 = vpack.c.bf16 %v2304, %v2302
        %v2369 = vpack.c.bf16 %v2305, %v2303
        %v2370 = vpack.c.bf16 %v1114, %v1110
        %v2371 = vpack.c.bf16 %v1124, %v1120
        %v2372 = vpack.c.bf16 %v1134, %v1130
        %v2373 = vpack.c.bf16 %v1144, %v1140
        %v2374 = vpack.c.bf16 %v1154, %v1150
        %v2375 = vpack.c.bf16 %v1164, %v1160
        %v2376 = vpack.c.bf16 %v1174, %v1170
        %v2377 = vpack.c.bf16 %v1184, %v1180
        %v2378 = vpack.c.bf16 %v1194, %v1190
        %v2379 = vpack.c.bf16 %v1204, %v1200
        %v2380 = vpack.c.bf16 %v1214, %v1210
        %v2381 = vpack.c.bf16 %v1224, %v1220
        %v2382 = vpack.c.bf16 %v1234, %v1230
        %v2383 = vpack.c.bf16 %v1244, %v1240
        %v2384 = vpack.c.bf16 %v1254, %v1250
        %v2385 = vpack.c.bf16 %v1264, %v1260
        %2386 = vxpose.xlu0.c.b16.start [1/8] %v2338, 128
        %2387 = vxpose.xlu0.c.b16.cont [2/8] %v2340, 128
        %2388 = vxpose.xlu0.c.b16.cont [3/8] %v2342, 128
        %2389 = vxpose.xlu0.c.b16.cont [4/8] %v2344, 128
        %2390 = vxpose.xlu0.c.b16.cont [5/8] %v2346, 128
        %2391 = vxpose.xlu0.c.b16.cont [6/8] %v2348, 128
        %2392 = vxpose.xlu0.c.b16.cont [7/8] %v2350, 128
        %2393 = vxpose.xlu0.c.b16.end [8/8] %v2352, 128
        %v2394 = vpop.trf.xlu0
        %v2395 = vpop.trf.xlu0
        %v2396 = vpop.trf.xlu0
        %v2397 = vpop.trf.xlu0
        %v2398 = vpop.trf.xlu0
        %v2399 = vpop.trf.xlu0
        %v2400 = vpop.trf.xlu0
        %v2401 = vpop.trf.xlu0
        %2402 = vxpose.xlu0.c.b16.start [1/8] %v2339, 128
        %2403 = vxpose.xlu0.c.b16.cont [2/8] %v2341, 128
        %2404 = vxpose.xlu0.c.b16.cont [3/8] %v2343, 128
        %2405 = vxpose.xlu0.c.b16.cont [4/8] %v2345, 128
        %2406 = vxpose.xlu0.c.b16.cont [5/8] %v2347, 128
        %2407 = vxpose.xlu0.c.b16.cont [6/8] %v2349, 128
        %2408 = vxpose.xlu0.c.b16.cont [7/8] %v2351, 128
        %2409 = vxpose.xlu0.c.b16.end [8/8] %v2353, 128
        %v2410 = vpop.trf.xlu0
        %v2411 = vpop.trf.xlu0
        %v2412 = vpop.trf.xlu0
        %v2413 = vpop.trf.xlu0
        %v2414 = vpop.trf.xlu0
        %v2415 = vpop.trf.xlu0
        %v2416 = vpop.trf.xlu0
        %v2417 = vpop.trf.xlu0
        %2418 = vxpose.xlu0.c.b16.start [1/8] %v2354, 128
        %2419 = vxpose.xlu0.c.b16.cont [2/8] %v2356, 128
        %2420 = vxpose.xlu0.c.b16.cont [3/8] %v2358, 128
        %2421 = vxpose.xlu0.c.b16.cont [4/8] %v2360, 128
        %2422 = vxpose.xlu0.c.b16.cont [5/8] %v2362, 128
        %2423 = vxpose.xlu0.c.b16.cont [6/8] %v2364, 128
        %2424 = vxpose.xlu0.c.b16.cont [7/8] %v2366, 128
        %2425 = vxpose.xlu0.c.b16.end [8/8] %v2368, 128
        %v2426 = vpop.trf.xlu0
        %v2427 = vpop.trf.xlu0
        %v2428 = vpop.trf.xlu0
        %v2429 = vpop.trf.xlu0
        %v2430 = vpop.trf.xlu0
        %v2431 = vpop.trf.xlu0
        %v2432 = vpop.trf.xlu0
        %v2433 = vpop.trf.xlu0
        %2434 = vxpose.xlu0.c.b16.start [1/8] %v2355, 128
        %2435 = vxpose.xlu0.c.b16.cont [2/8] %v2357, 128
        %2436 = vxpose.xlu0.c.b16.cont [3/8] %v2359, 128
        %2437 = vxpose.xlu0.c.b16.cont [4/8] %v2361, 128
        %2438 = vxpose.xlu0.c.b16.cont [5/8] %v2363, 128
        %2439 = vxpose.xlu0.c.b16.cont [6/8] %v2365, 128
        %2440 = vxpose.xlu0.c.b16.cont [7/8] %v2367, 128
        %2441 = vxpose.xlu0.c.b16.end [8/8] %v2369, 128
        %v2442 = vpop.trf.xlu0
        %v2443 = vpop.trf.xlu0
        %v2444 = vpop.trf.xlu0
        %v2445 = vpop.trf.xlu0
        %v2446 = vpop.trf.xlu0
        %v2447 = vpop.trf.xlu0
        %v2448 = vpop.trf.xlu0
        %v2449 = vpop.trf.xlu0
        %2450 = vmatprep.subr.bf16.mxu0 0
        %2451 = vmatpush1.bf16.msra.mxu0 %v2377
        %2452 = vmatprep.subr.bf16.mxu0 0
        %2453 = vmatpush1.bf16.msra.mxu0 %v2376
        %2454 = vmatprep.subr.bf16.mxu0 0
        %2455 = vmatpush1.bf16.msra.mxu0 %v2375
        %2456 = vmatprep.subr.bf16.mxu0 0
        %2457 = vmatpush1.bf16.msra.mxu0 %v2374
        %2458 = vmatprep.subr.bf16.mxu0 0
        %2459 = vmatpush1.bf16.msra.mxu0 %v2373
        %2460 = vmatprep.subr.bf16.mxu0 0
        %2461 = vmatpush1.bf16.msra.mxu0 %v2372
        %2462 = vmatprep.subr.bf16.mxu0 0
        %2463 = vmatpush1.bf16.msra.mxu0 %v2371
        %2464 = vmatprep.subr.bf16.mxu0 0
        %2465 = vmatpush1.bf16.msra.mxu0 %v2370
        %2466 = vmatprep.subr.bf16.mxu0 0
        %2467 = vmatpush2.bf16.msra.mxu0 %v2385
        %2468 = vmatprep.subr.bf16.mxu0 0
        %2469 = vmatpush2.bf16.msra.mxu0 %v2384
        %2470 = vmatprep.subr.bf16.mxu0 0
        %2471 = vmatpush2.bf16.msra.mxu0 %v2383
        %2472 = vmatprep.subr.bf16.mxu0 0
        %2473 = vmatpush2.bf16.msra.mxu0 %v2382
        %2474 = vmatprep.subr.bf16.mxu0 0
        %2475 = vmatpush2.bf16.msra.mxu0 %v2381
        %2476 = vmatprep.subr.bf16.mxu0 0
        %2477 = vmatpush2.bf16.msra.mxu0 %v2380
        %2478 = vmatprep.subr.bf16.mxu0 0
        %2479 = vmatpush2.bf16.msra.mxu0 %v2379
        %2480 = vmatprep.subr.bf16.mxu0 0
        %2481 = vmatpush2.bf16.msra.mxu0 %v2378
        %2482 = vmatprep.mubr.bf16.mxu0 %v2426
        %2483 = vmatmul.mubr.bf16.gmra.mxu0 %v2394
        %v2484 = vpop.f32.mrf.mxu0
        %v2485 = vadd.f32 0.0, %v2484
        %v2486 = vpop.f32.mrf.mxu0
        %v2487 = vpop.f32.mrf.mxu0
        %v2488 = vadd.f32 0.0, %v2487
        %v2489 = vpop.f32.mrf.mxu0
        %2490 = vmatprep.mubr.bf16.mxu0 %v2427
        %2491 = vmatmul.mubr.bf16.gmra.mxu0 %v2395
        %v2492 = vpop.f32.mrf.mxu0
        %v2493 = vadd.f32 0.0, %v2492
        %v2494 = vpop.f32.mrf.mxu0
        %v2495 = vpop.f32.mrf.mxu0
        %v2496 = vadd.f32 0.0, %v2495
        %v2497 = vpop.f32.mrf.mxu0
        %2498 = vmatprep.mubr.bf16.mxu0 %v2428
        %2499 = vmatmul.mubr.bf16.gmra.mxu0 %v2396
        %v2500 = vpop.f32.mrf.mxu0
        %v2501 = vadd.f32 0.0, %v2500
        %v2502 = vpop.f32.mrf.mxu0
        %v2503 = vpop.f32.mrf.mxu0
        %v2504 = vadd.f32 0.0, %v2503
        %v2505 = vpop.f32.mrf.mxu0
        %2506 = vmatprep.mubr.bf16.mxu0 %v2429
        %2507 = vmatmul.mubr.bf16.gmra.mxu0 %v2397
        %v2508 = vpop.f32.mrf.mxu0
        %v2509 = vadd.f32 0.0, %v2508
        %v2510 = vpop.f32.mrf.mxu0
        %v2511 = vpop.f32.mrf.mxu0
        %v2512 = vadd.f32 0.0, %v2511
        %v2513 = vpop.f32.mrf.mxu0
        %2514 = vmatprep.mubr.bf16.mxu0 %v2430
        %2515 = vmatmul.mubr.bf16.gmra.mxu0 %v2398
        %v2516 = vpop.f32.mrf.mxu0
        %v2517 = vadd.f32 0.0, %v2516
        %v2518 = vpop.f32.mrf.mxu0
        %v2519 = vpop.f32.mrf.mxu0
        %v2520 = vadd.f32 0.0, %v2519
        %v2521 = vpop.f32.mrf.mxu0
        %2522 = vmatprep.mubr.bf16.mxu0 %v2431
        %2523 = vmatmul.mubr.bf16.gmra.mxu0 %v2399
        %v2524 = vpop.f32.mrf.mxu0
        %v2525 = vadd.f32 0.0, %v2524
        %v2526 = vpop.f32.mrf.mxu0
        %v2527 = vpop.f32.mrf.mxu0
        %v2528 = vadd.f32 0.0, %v2527
        %v2529 = vpop.f32.mrf.mxu0
        %2530 = vmatprep.mubr.bf16.mxu0 %v2432
        %2531 = vmatmul.mubr.bf16.gmra.mxu0 %v2400
        %v2532 = vpop.f32.mrf.mxu0
        %v2533 = vadd.f32 0.0, %v2532
        %v2534 = vpop.f32.mrf.mxu0
        %v2535 = vpop.f32.mrf.mxu0
        %v2536 = vadd.f32 0.0, %v2535
        %v2537 = vpop.f32.mrf.mxu0
        %2538 = vmatprep.mubr.bf16.mxu0 %v2433
        %2539 = vmatmul.mubr.bf16.gmra.mxu0 %v2401
        %v2540 = vpop.f32.mrf.mxu0
        %v2541 = vadd.f32 0.0, %v2540
        %v2542 = vpop.f32.mrf.mxu0
        %v2543 = vpop.f32.mrf.mxu0
        %v2544 = vadd.f32 0.0, %v2543
        %v2545 = vpop.f32.mrf.mxu0
        %2546 = vmatprep.mubr.bf16.mxu0 %v2442
        %2547 = vmatmul.mubr.bf16.gmra.mxu0 %v2410
        %v2548 = vpop.f32.mrf.mxu0
        %v2549 = vadd.f32 0.0, %v2548
        %v2550 = vpop.f32.mrf.mxu0
        %v2551 = vpop.f32.mrf.mxu0
        %v2552 = vadd.f32 0.0, %v2551
        %v2553 = vpop.f32.mrf.mxu0
        %2554 = vmatprep.mubr.bf16.mxu0 %v2443
        %2555 = vmatmul.mubr.bf16.gmra.mxu0 %v2411
        %v2556 = vpop.f32.mrf.mxu0
        %v2557 = vadd.f32 0.0, %v2556
        %v2558 = vpop.f32.mrf.mxu0
        %v2559 = vpop.f32.mrf.mxu0
        %v2560 = vadd.f32 0.0, %v2559
        %v2561 = vpop.f32.mrf.mxu0
        %2562 = vmatprep.mubr.bf16.mxu0 %v2444
        %2563 = vmatmul.mubr.bf16.gmra.mxu0 %v2412
        %v2564 = vpop.f32.mrf.mxu0
        %v2565 = vadd.f32 0.0, %v2564
        %v2566 = vpop.f32.mrf.mxu0
        %v2567 = vpop.f32.mrf.mxu0
        %v2568 = vadd.f32 0.0, %v2567
        %v2569 = vpop.f32.mrf.mxu0
        %2570 = vmatprep.mubr.bf16.mxu0 %v2445
        %2571 = vmatmul.mubr.bf16.gmra.mxu0 %v2413
        %v2572 = vpop.f32.mrf.mxu0
        %v2573 = vadd.f32 0.0, %v2572
        %v2574 = vpop.f32.mrf.mxu0
        %v2575 = vpop.f32.mrf.mxu0
        %v2576 = vadd.f32 0.0, %v2575
        %v2577 = vpop.f32.mrf.mxu0
        %2578 = vmatprep.mubr.bf16.mxu0 %v2446
        %2579 = vmatmul.mubr.bf16.gmra.mxu0 %v2414
        %v2580 = vpop.f32.mrf.mxu0
        %v2581 = vadd.f32 0.0, %v2580
        %v2582 = vpop.f32.mrf.mxu0
        %v2583 = vpop.f32.mrf.mxu0
        %v2584 = vadd.f32 0.0, %v2583
        %v2585 = vpop.f32.mrf.mxu0
        %2586 = vmatprep.mubr.bf16.mxu0 %v2447
        %2587 = vmatmul.mubr.bf16.gmra.mxu0 %v2415
        %v2588 = vpop.f32.mrf.mxu0
        %v2589 = vadd.f32 0.0, %v2588
        %v2590 = vpop.f32.mrf.mxu0
        %v2591 = vpop.f32.mrf.mxu0
        %v2592 = vadd.f32 0.0, %v2591
        %v2593 = vpop.f32.mrf.mxu0
        %2594 = vmatprep.mubr.bf16.mxu0 %v2448
        %2595 = vmatmul.mubr.bf16.gmra.mxu0 %v2416
        %v2596 = vpop.f32.mrf.mxu0
        %v2597 = vadd.f32 0.0, %v2596
        %v2598 = vpop.f32.mrf.mxu0
        %v2599 = vpop.f32.mrf.mxu0
        %v2600 = vadd.f32 0.0, %v2599
        %v2601 = vpop.f32.mrf.mxu0
        %2602 = vmatprep.mubr.bf16.mxu0 %v2449
        %2603 = vmatmul.mubr.bf16.gmra.mxu0 %v2417
        %v2604 = vpop.f32.mrf.mxu0
        %v2605 = vadd.f32 0.0, %v2604
        %v2606 = vpop.f32.mrf.mxu0
        %v2607 = vpop.f32.mrf.mxu0
        %v2608 = vadd.f32 0.0, %v2607
        %v2609 = vpop.f32.mrf.mxu0
        %2610 = vdwg.mxu0
        %v2611 = vadd.f32 %v2306, %v2485
        %v2612 = vadd.f32 %v2307, %v2488
        %v2613 = vadd.f32 %v2308, %v2493
        %v2614 = vadd.f32 %v2309, %v2496
        %v2615 = vadd.f32 %v2310, %v2501
        %v2616 = vadd.f32 %v2311, %v2504
        %v2617 = vadd.f32 %v2312, %v2509
        %v2618 = vadd.f32 %v2313, %v2512
        %v2619 = vadd.f32 %v2314, %v2517
        %v2620 = vadd.f32 %v2315, %v2520
        %v2621 = vadd.f32 %v2316, %v2525
        %v2622 = vadd.f32 %v2317, %v2528
        %v2623 = vadd.f32 %v2318, %v2533
        %v2624 = vadd.f32 %v2319, %v2536
        %v2625 = vadd.f32 %v2320, %v2541
        %v2626 = vadd.f32 %v2321, %v2544
        %v2627 = vadd.f32 %v2322, %v2549
        %v2628 = vadd.f32 %v2323, %v2552
        %v2629 = vadd.f32 %v2324, %v2557
        %v2630 = vadd.f32 %v2325, %v2560
        %v2631 = vadd.f32 %v2326, %v2565
        %v2632 = vadd.f32 %v2327, %v2568
        %v2633 = vadd.f32 %v2328, %v2573
        %v2634 = vadd.f32 %v2329, %v2576
        %v2635 = vadd.f32 %v2330, %v2581
        %v2636 = vadd.f32 %v2331, %v2584
        %v2637 = vadd.f32 %v2332, %v2589
        %v2638 = vadd.f32 %v2333, %v2592
        %v2639 = vadd.f32 %v2334, %v2597
        %v2640 = vadd.f32 %v2335, %v2600
        %v2641 = vadd.f32 %v2336, %v2605
        %v2642 = vadd.f32 %v2337, %v2608
        %2643 = vst [vmem:[%s379] sm:$0xff] %v2611
        %2644 = vst [vmem:[%s379 + $0x8] sm:$0xff] %v2612
        %2645 = vst [vmem:[%s379 + $0x10] sm:$0xff] %v2613
        %2646 = vst [vmem:[%s379 + $0x18] sm:$0xff] %v2614
        %2647 = vst [vmem:[%s379 + $0x20] sm:$0xff] %v2615
        %2648 = vst [vmem:[%s379 + $0x28] sm:$0xff] %v2616
        %2649 = vst [vmem:[%s379 + $0x30] sm:$0xff] %v2617
        %2650 = vst [vmem:[%s379 + $0x38] sm:$0xff] %v2618
        %2651 = vst [vmem:[%s379 + $0x40] sm:$0xff] %v2619
        %2652 = vst [vmem:[%s379 + $0x48] sm:$0xff] %v2620
        %2653 = vst [vmem:[%s379 + $0x50] sm:$0xff] %v2621
        %2654 = vst [vmem:[%s379 + $0x58] sm:$0xff] %v2622
        %2655 = vst [vmem:[%s379 + $0x60] sm:$0xff] %v2623
        %2656 = vst [vmem:[%s379 + $0x68] sm:$0xff] %v2624
        %2657 = vst [vmem:[%s379 + $0x70] sm:$0xff] %v2625
        %2658 = vst [vmem:[%s379 + $0x78] sm:$0xff] %v2626
        %2659 = vst [vmem:[%s379 + $0x80] sm:$0xff] %v2627
        %2660 = vst [vmem:[%s379 + $0x88] sm:$0xff] %v2628
        %2661 = vst [vmem:[%s379 + $0x90] sm:$0xff] %v2629
        %2662 = vst [vmem:[%s379 + $0x98] sm:$0xff] %v2630
        %2663 = vst [vmem:[%s379 + $0xa0] sm:$0xff] %v2631
        %2664 = vst [vmem:[%s379 + $0xa8] sm:$0xff] %v2632
        %2665 = vst [vmem:[%s379 + $0xb0] sm:$0xff] %v2633
        %2666 = vst [vmem:[%s379 + $0xb8] sm:$0xff] %v2634
        %2667 = vst [vmem:[%s379 + $0xc0] sm:$0xff] %v2635
        %2668 = vst [vmem:[%s379 + $0xc8] sm:$0xff] %v2636
        %2669 = vst [vmem:[%s379 + $0xd0] sm:$0xff] %v2637
        %2670 = vst [vmem:[%s379 + $0xd8] sm:$0xff] %v2638
        %2671 = vst [vmem:[%s379 + $0xe0] sm:$0xff] %v2639
        %2672 = vst [vmem:[%s379 + $0xe8] sm:$0xff] %v2640
        %2673 = vst [vmem:[%s379 + $0xf0] sm:$0xff] %v2641
        %2674 = vst [vmem:[%s379 + $0xf8] sm:$0xff] %v2642
        %v2675 = vld [vmem:[%s386] sm:$0x3]
        %v2676 = vadd.f32 %v2242, %v2244
        %v2677 = vadd.f32 %v2676, %v2246
        %v2678 = vadd.f32 %v2677, %v2248
        %v2679 = vadd.f32 %v2678, %v2250
        %v2680 = vadd.f32 %v2679, %v2252
        %v2681 = vadd.f32 %v2680, %v2254
        %v2682 = vadd.f32 %v2681, %v2256
        %v2683 = vadd.f32 %v2682, %v2258
        %v2684 = vadd.f32 %v2683, %v2260
        %v2685 = vadd.f32 %v2684, %v2262
        %v2686 = vadd.f32 %v2685, %v2264
        %v2687 = vadd.f32 %v2686, %v2266
        %v2688 = vadd.f32 %v2687, %v2268
        %v2689 = vadd.f32 %v2688, %v2270
        %v2690 = vadd.f32 %v2689, %v2272
        %v2691 = vadd.f32 %v2690, %v2274
        %v2692 = vadd.f32 %v2691, %v2276
        %v2693 = vadd.f32 %v2692, %v2278
        %v2694 = vadd.f32 %v2693, %v2280
        %v2695 = vadd.f32 %v2694, %v2282
        %v2696 = vadd.f32 %v2695, %v2284
        %v2697 = vadd.f32 %v2696, %v2286
        %v2698 = vadd.f32 %v2697, %v2288
        %v2699 = vadd.f32 %v2698, %v2290
        %v2700 = vadd.f32 %v2699, %v2292
        %v2701 = vadd.f32 %v2700, %v2294
        %v2702 = vadd.f32 %v2701, %v2296
        %v2703 = vadd.f32 %v2702, %v2298
        %v2704 = vadd.f32 %v2703, %v2300
        %v2705 = vadd.f32 %v2704, %v2302
        %v2706 = vadd.f32 %v2705, %v2304
        %v2707 = vrot.slane %v2706, 4
        %v2708 = vadd.f32 %v2706, %v2707
        %v2709 = vrot.slane %v2708, 2
        %v2710 = vadd.f32 %v2708, %v2709
        %v2711 = vrot.slane %v2710, 1
        %v2712 = vadd.f32 %v2710, %v2711
        %v2713 = vadd.f32 %v2243, %v2245
        %v2714 = vadd.f32 %v2713, %v2247
        %v2715 = vadd.f32 %v2714, %v2249
        %v2716 = vadd.f32 %v2715, %v2251
        %v2717 = vadd.f32 %v2716, %v2253
        %v2718 = vadd.f32 %v2717, %v2255
        %v2719 = vadd.f32 %v2718, %v2257
        %v2720 = vadd.f32 %v2719, %v2259
        %v2721 = vadd.f32 %v2720, %v2261
        %v2722 = vadd.f32 %v2721, %v2263
        %v2723 = vadd.f32 %v2722, %v2265
        %v2724 = vadd.f32 %v2723, %v2267
        %v2725 = vadd.f32 %v2724, %v2269
        %v2726 = vadd.f32 %v2725, %v2271
        %v2727 = vadd.f32 %v2726, %v2273
        %v2728 = vadd.f32 %v2727, %v2275
        %v2729 = vadd.f32 %v2728, %v2277
        %v2730 = vadd.f32 %v2729, %v2279
        %v2731 = vadd.f32 %v2730, %v2281
        %v2732 = vadd.f32 %v2731, %v2283
        %v2733 = vadd.f32 %v2732, %v2285
        %v2734 = vadd.f32 %v2733, %v2287
        %v2735 = vadd.f32 %v2734, %v2289
        %v2736 = vadd.f32 %v2735, %v2291
        %v2737 = vadd.f32 %v2736, %v2293
        %v2738 = vadd.f32 %v2737, %v2295
        %v2739 = vadd.f32 %v2738, %v2297
        %v2740 = vadd.f32 %v2739, %v2299
        %v2741 = vadd.f32 %v2740, %v2301
        %v2742 = vadd.f32 %v2741, %v2303
        %v2743 = vadd.f32 %v2742, %v2305
        %v2744 = vrot.slane %v2743, 4
        %v2745 = vadd.f32 %v2743, %v2744
        %v2746 = vrot.slane %v2745, 2
        %v2747 = vadd.f32 %v2745, %v2746
        %v2748 = vrot.slane %v2747, 1
        %v2749 = vadd.f32 %v2747, %v2748
        %v2752 = vcombine.low %v2712, %v2749
        %v2754 = vunpack.c.l.s4 1966171168
        %v2755 = vunpack.c.0.s8 %v2754
        %v2756 = vlaneseq
        %v2757 = vshrl.u32 %v2756, 7
        %v2758 = vsub.s32 %v2755, %v2757
        %v2759 = vrot.slane %v2752, %v2758
        %v2761 = vunpack.c.l.s4 1966171168
        %v2762 = vunpack.c.0.s8 %v2761
        %v2763 = vlaneseq
        %v2764 = vshrl.u32 %v2763, 7
        %v2765 = vsub.s32 %v2762, %v2764
        %v2766 = vrot.slane %v2759, %v2765
        %v2768 = vadd.f32 %v2675, %v2766
        %v2769 = vlaneseq
        %vm2770 = vcmp.ge.s32.totalorder %v2769, 0
        %vm2771 = vcmp.lt.s32.totalorder %v2769, 256
        %vm2772 = vmand %vm2770, %vm2771
        %2773 = vst.msk [vmem:[%s386] sm:$0x3] %vm2772, %v2768
        %s2774 = sand.u32 %s198, 1
        %s2775 = scalar_lea.sflag [#allocation4], %s2774
        %s2776 = sand.u32 %s198, 1
        %s2777 = smul.addr %s2776, 256
        %s2778 = scalar_lea.vmem [#allocation10], %s2777
        %s2779 = sand.u32 %s228, 1
        %s2780 = scalar_lea.sflag [#allocation12], %s2779
        %s2781 = sand.u32 %s228, 1
        %s2782 = smul.addr %s2781, 2
        %s2783 = scalar_lea.vmem [#allocation11], %s2782
        // Predicated region
        $region65: #{tpu_custom_call.1} parent=43 // pred_check
          %p2784 = pneg %p208
        $region66: #{tpu_custom_call.1} parent=43 // pred_check_branch
          %2786 = sbr.rel (%p2784) target = $region68
        $region67: #{tpu_custom_call.1} parent=43 // pred_region
          %s2787 = smul.u32 %s35, 2
          %s2788 = sadd.s32 %s2787, %s36
          %s2790 = ssub.s32 4096, 4096
          %2791 = vsyncadd %s2775, %s2790
          %s2792 = smul.addr %s2788, 32
          %s2793 = smul.addr %s2792, 128
          %s2794 = scalar_lea.hbm %s6, %s2793
          %s2795 = sshll.u32 %s2778, 4
          %s2796 = int_to_ptr.vmem [resolvable:$true] %s2795
          %2801 = dma.vmem_to_hbm [thread:$0]  %s2796, 4096, %s2794, %s2775, 128, 128, 8
        $region68: #{tpu_custom_call.1} parent=43 // pred_fallthru
          _
        // Predicated region
        $region69: #{tpu_custom_call.1} parent=43 // pred_check
          %p2802 = pneg %p238
        $region70: #{tpu_custom_call.1} parent=43 // pred_check_branch
          %2804 = sbr.rel (%p2802) target = $region72
        $region71: #{tpu_custom_call.1} parent=43 // pred_region
          %s2805 = smul.u32 %s35, 2
          %s2806 = sadd.s32 %s2805, %s36
          %s2808 = ssub.s32 32, 32
          %2809 = vsyncadd %s2780, %s2808
          %s2810 = smul.addr %s2806, 2
          %s2811 = smul.addr %s2810, 16
          %s2812 = scalar_lea.hbm %s7, %s2811
          %s2814 = sshll.u32 %s2783, 4
          %s2815 = int_to_ptr.vmem [resolvable:$true] %s2814
          %2817 = dma.vmem_to_hbm [thread:$0]  %s2815, 32, %s2812, %s2780
        $region72: #{tpu_custom_call.1} parent=43 // pred_fallthru
          _
      $region44: #{tpu_custom_call.1} parent=5 // pred_fallthru
        _
      %p2818 = scmp.le.s32.totalorder 2, %s25
      // Predicated region
      $region73: #{tpu_custom_call.1} parent=5 // pred_check
        %p2819 = pneg %p2818
      $region74: #{tpu_custom_call.1} parent=5 // pred_check_branch
        %2821 = sbr.rel (%p2819) target = $region76
      $region75: #{tpu_custom_call.1} parent=5 // pred_region
        %s2822 = ssub.s32 %s25, 2
        // Predicated region
        $region77: #{tpu_custom_call.1} parent=75 // pred_check
          %p2823 = pneg %p214
        $region78: #{tpu_custom_call.1} parent=75 // pred_check_branch
          %2825 = sbr.rel (%p2823) target = $region80
        $region79: #{tpu_custom_call.1} parent=75 // pred_region
          %s2826 = sand.u32 %s199, 1
          %s2827 = scalar_lea.sflag [#allocation4], %s2826
          %s2828 = sand.u32 %s199, 1
          %s2829 = smul.addr %s2828, 256
          %s2830 = scalar_lea.vmem [#allocation10], %s2829
          %2831 = dma.done %s2827, 4096
        $region80: #{tpu_custom_call.1} parent=75 // pred_fallthru
          _
        // Predicated region
        $region81: #{tpu_custom_call.1} parent=75 // pred_check
          %p2832 = pneg %p244
        $region82: #{tpu_custom_call.1} parent=75 // pred_check_branch
          %2834 = sbr.rel (%p2832) target = $region84
        $region83: #{tpu_custom_call.1} parent=75 // pred_region
          %s2835 = sand.u32 %s229, 1
          %s2836 = scalar_lea.sflag [#allocation12], %s2835
          %s2837 = sand.u32 %s229, 1
          %s2838 = smul.addr %s2837, 2
          %s2839 = scalar_lea.vmem [#allocation11], %s2838
          %2840 = dma.done %s2836, 32
        $region84: #{tpu_custom_call.1} parent=75 // pred_fallthru
          _
      $region76: #{tpu_custom_call.1} parent=5 // pred_fallthru
        _
    $region6: #{tpu_custom_call.1} parent=1 // loop_footer
      %s29 = sadd.s32 1, %s25
    $region7: #{tpu_custom_call.1} parent=1 // loop_footer_branch
      %24 = sbr.rel target = $region3
    $region8: #{tpu_custom_call.1} parent=1 // loop_exit
      _
    %2841 = vsyncpa [#allocation3], 1
    %s2842 = scalar_lea.sflag [#allocation3], 1
    %2843 = vsyncpa %s2842, 1
    %2844 = vsyncpa [#allocation6], 1
    %2845 = vsyncpa [#allocation9], 1
    %2846 = vsyncpa [#allocation4], 1
    %s2847 = scalar_lea.sflag [#allocation4], 1
    %2848 = vsyncpa %s2847, 1
    %2849 = vsyncpa [#allocation12], 1
    %s2850 = scalar_lea.sflag [#allocation12], 1
    %2851 = vsyncpa %s2850, 1

</llo_original>
